<compile_context>
chip_gen: v5e
topology: v5e:2x2
jax: 0.10.0
libtpu: 0.0.40
codegen_flags: <defaults>
</compile_context>

<pallas_src>
import jax
import jax.numpy as jnp
from jax.experimental import pallas as pl
from jax.experimental.pallas import tpu as pltpu


# ----------------------- conv 3x3 + BN-stats kernel --------------------------
def _conv3x3_stats_kernel(xp_ref, w_ref, o_ref, s1_ref, s2_ref, acc_ref):
    # xp_ref : (1, H+2, W+2, Cin) bf16  zero-padded NHWC input for one image
    # w_ref  : (9, Cin, Cout)     bf16  per-tap weights, tap index = 3*ky + kx
    # o_ref  : (H*W, Cout)        bf16  conv output (one row per output pixel)
    # s1_ref : (1, 1, Cout)       f32   per-image sum over pixels
    # s2_ref : (1, 1, Cout)       f32   per-image sum-of-squares over pixels
    # acc_ref: (H*W, Cout)        f32   VMEM scratch accumulator
    H = xp_ref.shape[1] - 2
    W = xp_ref.shape[2] - 2
    Cin = xp_ref.shape[3]
    HW = H * W

    for ky in range(3):
        for kx in range(3):
            # im2col rows for this tap: a static halo slice of the padded image,
            # collapsed to (H*W, Cin).  K=Cin, N=Cout, M=H*W -> no wasted FLOPs.
            lhs = xp_ref[0, ky:ky + H, kx:kx + W, :].reshape(HW, Cin)
            d = jnp.dot(lhs, w_ref[3 * ky + kx],
                        preferred_element_type=jnp.float32)
            if ky == 0 and kx == 0:
                acc_ref[...] = d
            else:
                acc_ref[...] += d

    # (conv bias omitted: a per-channel constant cancels exactly under
    #  training-mode BatchNorm)
    acc = acc_ref[...]
    s1_ref[0] = jnp.sum(acc, axis=0, keepdims=True)          # (1, Cout)
    s2_ref[0] = jnp.sum(acc * acc, axis=0, keepdims=True)    # (1, Cout)
    o_ref[...] = acc.astype(o_ref.dtype)                     # bf16 writeback


# ------------------------- normalize + ReLU kernel ----------------------------
def _bn_relu_kernel(y_ref, s_ref, t_ref, o_ref):
    # y_ref: (TR, Cout) bf16 conv-output rows; s_ref/t_ref: (1, Cout) f32 scale/shift
    y = y_ref[...].astype(jnp.float32)
    o_ref[...] = jnp.maximum(y * s_ref[...] + t_ref[...], 0.0).astype(o_ref.dtype)


# --------------------------------- wrapper ------------------------------------
def refinement_block(x_nchw, w_oihw, b, gamma, beta, eps=1e-5):
    """Forward of RefinementBlock. x_nchw: (N, Cin, H, W). Returns (N, Cout, H, W)."""
    N, Cin, H, W = x_nchw.shape
    Cout = w_oihw.shape[0]
    HW = H * W
    rows = N * HW

    # Layout glue (one fused XLA pass): NCHW -> NHWC, zero-pad spatial, bf16.
    xp = jnp.transpose(x_nchw, (0, 2, 3, 1))
    xp = jnp.pad(xp, ((0, 0), (1, 1), (1, 1), (0, 0))).astype(jnp.bfloat16)

    # Per-tap weights (tap = 3*ky + kx): (9, Cin, Cout) — O(Cin*Cout), no banded
    # O(W^2) weight tensor, no per-call kron construction.
    w9 = jnp.transpose(w_oihw, (2, 3, 1, 0)).reshape(9, Cin, Cout).astype(jnp.bfloat16)

    del b  # per-channel conv bias cancels exactly under training-mode BatchNorm

    conv_out, s1, s2 = pl.pallas_call(
        _conv3x3_stats_kernel,
        out_shape=(jax.ShapeDtypeStruct((rows, Cout), jnp.bfloat16),
                   jax.ShapeDtypeStruct((N, 1, Cout), jnp.float32),
                   jax.ShapeDtypeStruct((N, 1, Cout), jnp.float32)),
        grid=(N,),
        in_specs=[
            pl.BlockSpec((1, H + 2, W + 2, Cin), lambda n: (n, 0, 0, 0)),
            pl.BlockSpec((9, Cin, Cout), lambda n: (0, 0, 0)),
        ],
        out_specs=(
            pl.BlockSpec((HW, Cout), lambda n: (n, 0)),
            pl.BlockSpec((1, 1, Cout), lambda n: (n, 0, 0)),
            pl.BlockSpec((1, 1, Cout), lambda n: (n, 0, 0)),
        ),
        scratch_shapes=[pltpu.VMEM((HW, Cout), jnp.float32)],
        compiler_params=pltpu.CompilerParams(
            dimension_semantics=("parallel",),
            vmem_limit_bytes=32 * 1024 * 1024),
    )(xp, w9)

    # Finish BN batch statistics (tiny O(Cout) math, f32, biased variance).
    count = float(rows)
    g32 = gamma.astype(jnp.float32)
    mean = jnp.sum(s1, axis=(0, 1)) / count                       # (Cout,)
    var = jnp.sum(s2, axis=(0, 1)) / count - mean * mean          # (Cout,)
    inv = jax.lax.rsqrt(var + eps)
    scale = (g32 * inv).reshape(1, Cout)
    shift = (beta.astype(jnp.float32) - mean * g32 * inv).reshape(1, Cout)

    # Normalize + ReLU over the flat (N*H*W, Cout) view with large row tiles.
    TR = 256 if (rows % 256 == 0 and rows >= 256) else rows
    y = pl.pallas_call(
        _bn_relu_kernel,
        out_shape=jax.ShapeDtypeStruct((rows, Cout), jnp.float32),
        grid=(rows // TR,),
        in_specs=[
            pl.BlockSpec((TR, Cout), lambda r: (r, 0)),
            pl.BlockSpec((1, Cout), lambda r: (0, 0)),
            pl.BlockSpec((1, Cout), lambda r: (0, 0)),
        ],
        out_specs=pl.BlockSpec((TR, Cout), lambda r: (r, 0)),
        compiler_params=pltpu.CompilerParams(
            dimension_semantics=("parallel",),
            vmem_limit_bytes=32 * 1024 * 1024),
    )(conv_out, scale, shift)

    # Back to NCHW (matches the PyTorch module's layout).
    return jnp.transpose(y.reshape(N, H, W, Cout), (0, 3, 1, 2))


# ---------------------------- pure-JAX reference ------------------------------
def _reference(x_nchw, w_oihw, b, gamma, beta, eps=1e-5):
    y = jax.lax.conv_general_dilated(
        x_nchw, w_oihw, window_strides=(1, 1), padding=((1, 1), (1, 1)),
        dimension_numbers=("NCHW", "OIHW", "NCHW"))
    y = y + b.reshape(1, -1, 1, 1)
    mean = jnp.mean(y, axis=(0, 2, 3), keepdims=True)
    var = jnp.mean((y - mean) ** 2, axis=(0, 2, 3), keepdims=True)
    y = (y - mean) * jax.lax.rsqrt(var + eps)
    y = y * gamma.reshape(1, -1, 1, 1) + beta.reshape(1, -1, 1, 1)
    return jnp.maximum(y, 0.0)


if __name__ == "__main__":
    key = jax.random.PRNGKey(0)
    N, Cin, Cout, H, W = 2, 4, 8, 16, 16

    k_x, k_w, k_b, k_g, k_be = jax.random.split(key, 5)
    x = jax.random.normal(k_x, (N, Cin, H, W), dtype=jnp.float32)
    w = jax.random.normal(k_w, (Cout, Cin, 3, 3), dtype=jnp.float32) * 0.1
    b = jax.random.normal(k_b, (Cout,), dtype=jnp.float32) * 0.1
    gamma = 1.0 + 0.1 * jax.random.normal(k_g, (Cout,), dtype=jnp.float32)
    beta = 0.1 * jax.random.normal(k_be, (Cout,), dtype=jnp.float32)

    out = refinement_block(x, w, b, gamma, beta)
    out = jax.block_until_ready(out)

    ref = _reference(x, w, b, gamma, beta)
    assert out.shape == (N, Cout, H, W)
    # bf16 MXU inputs and bf16 conv_out writeback -> looser tolerance than pure f32.
    assert jnp.allclose(out, ref, atol=5e-2, rtol=5e-2), "mismatch vs reference"
    print("KERNEL_OK")
</pallas_src>

<mosaic_0001>
module attributes {stable_mosaic.version = 11 : i64} {
  func.func @_conv3x3_stats_kernel(%arg0: i32, %arg1: memref<1x18x18x4xbf16, #tpu.memory_space<vmem>>, %arg2: memref<9x4x8xbf16, #tpu.memory_space<vmem>>, %arg3: memref<256x8xbf16, #tpu.memory_space<vmem>>, %arg4: memref<1x1x8xf32, #tpu.memory_space<vmem>>, %arg5: memref<1x1x8xf32, #tpu.memory_space<vmem>>, %arg6: memref<256x8xf32, #tpu.memory_space<vmem>>) attributes {dimension_semantics = [#tpu.dimension_semantics<parallel>], iteration_bounds = array<i64: 2>, scalar_prefetch = 0 : i64, scratch_operands = 1 : i64, tpu.core_type = #tpu.core_type<tc>, window_params = [{transform_indices = @transform_0, window_bounds = array<i64: 1, 18, 18, 4>}, {pipeline_mode = #tpu.pipeline_mode<synchronous>, transform_indices = @transform_1, window_bounds = array<i64: 9, 4, 8>}, {transform_indices = @transform_2, window_bounds = array<i64: 256, 8>}, {transform_indices = @transform_3, window_bounds = array<i64: 1, 1, 8>}, {transform_indices = @transform_4, window_bounds = array<i64: 1, 1, 8>}]} {
    %c0 = arith.constant 0 : index
    %c0_0 = arith.constant 0 : index
    %c0_1 = arith.constant 0 : index
    %c0_2 = arith.constant 0 : index
    %0 = vector.load %arg1[%c0, %c0_0, %c0_1, %c0_2] : memref<1x18x18x4xbf16, #tpu.memory_space<vmem>>, vector<1x16x16x4xbf16>
    %1 = vector.shape_cast %0 : vector<1x16x16x4xbf16> to vector<16x16x4xbf16>
    %2 = vector.shape_cast %1 : vector<16x16x4xbf16> to vector<256x4xbf16>
    %c0_3 = arith.constant 0 : index
    %c0_4 = arith.constant 0 : index
    %c0_5 = arith.constant 0 : index
    %3 = vector.load %arg2[%c0_3, %c0_4, %c0_5] : memref<9x4x8xbf16, #tpu.memory_space<vmem>>, vector<1x4x8xbf16>
    %4 = vector.shape_cast %3 : vector<1x4x8xbf16> to vector<4x8xbf16>
    %cst = arith.constant dense<0.000000e+00> : vector<256x8xf32>
    %5 = tpu.matmul %2, %4, %cst {dimension_numbers = #tpu.dot_dimension_numbers<[1], [0], [0], [1], [0, 0, 1, 1], [], []>} : vector<256x4xbf16>, vector<4x8xbf16>, vector<256x8xf32> -> vector<256x8xf32>
    %c0_6 = arith.constant 0 : index
    %c0_7 = arith.constant 0 : index
    %6 = vector.load %arg6[%c0_6, %c0_7] : memref<256x8xf32, #tpu.memory_space<vmem>>, vector<256x8xf32>
    tpu.vector_store %arg6[%c0_6, %c0_7], %5 {strides = array<i32>} : memref<256x8xf32, #tpu.memory_space<vmem>>, vector<256x8xf32>,
    %c0_8 = arith.constant 0 : index
    %c0_9 = arith.constant 0 : index
    %c1 = arith.constant 1 : index
    %c0_10 = arith.constant 0 : index
    %7 = vector.load %arg1[%c0_8, %c0_9, %c1, %c0_10] : memref<1x18x18x4xbf16, #tpu.memory_space<vmem>>, vector<1x16x16x4xbf16>
    %8 = vector.shape_cast %7 : vector<1x16x16x4xbf16> to vector<16x16x4xbf16>
    %9 = vector.shape_cast %8 : vector<16x16x4xbf16> to vector<256x4xbf16>
    %c1_11 = arith.constant 1 : index
    %c0_12 = arith.constant 0 : index
    %c0_13 = arith.constant 0 : index
    %10 = vector.load %arg2[%c1_11, %c0_12, %c0_13] : memref<9x4x8xbf16, #tpu.memory_space<vmem>>, vector<1x4x8xbf16>
    %11 = vector.shape_cast %10 : vector<1x4x8xbf16> to vector<4x8xbf16>
    %cst_14 = arith.constant dense<0.000000e+00> : vector<256x8xf32>
    %12 = tpu.matmul %9, %11, %cst_14 {dimension_numbers = #tpu.dot_dimension_numbers<[1], [0], [0], [1], [0, 0, 1, 1], [], []>} : vector<256x4xbf16>, vector<4x8xbf16>, vector<256x8xf32> -> vector<256x8xf32>
    %c0_15 = arith.constant 0 : index
    %c0_16 = arith.constant 0 : index
    %13 = vector.load %arg6[%c0_15, %c0_16] : memref<256x8xf32, #tpu.memory_space<vmem>>, vector<256x8xf32>
    %14 = arith.addf %13, %12 : vector<256x8xf32>
    %c0_17 = arith.constant 0 : index
    %c0_18 = arith.constant 0 : index
    %15 = vector.load %arg6[%c0_17, %c0_18] : memref<256x8xf32, #tpu.memory_space<vmem>>, vector<256x8xf32>
    tpu.vector_store %arg6[%c0_17, %c0_18], %14 {strides = array<i32>} : memref<256x8xf32, #tpu.memory_space<vmem>>, vector<256x8xf32>,
    %c0_19 = arith.constant 0 : index
    %c0_20 = arith.constant 0 : index
    %c2 = arith.constant 2 : index
    %c0_21 = arith.constant 0 : index
    %16 = vector.load %arg1[%c0_19, %c0_20, %c2, %c0_21] : memref<1x18x18x4xbf16, #tpu.memory_space<vmem>>, vector<1x16x16x4xbf16>
    %17 = vector.shape_cast %16 : vector<1x16x16x4xbf16> to vector<16x16x4xbf16>
    %18 = vector.shape_cast %17 : vector<16x16x4xbf16> to vector<256x4xbf16>
    %c2_22 = arith.constant 2 : index
    %c0_23 = arith.constant 0 : index
    %c0_24 = arith.constant 0 : index
    %19 = vector.load %arg2[%c2_22, %c0_23, %c0_24] : memref<9x4x8xbf16, #tpu.memory_space<vmem>>, vector<1x4x8xbf16>
    %20 = vector.shape_cast %19 : vector<1x4x8xbf16> to vector<4x8xbf16>
    %cst_25 = arith.constant dense<0.000000e+00> : vector<256x8xf32>
    %21 = tpu.matmul %18, %20, %cst_25 {dimension_numbers = #tpu.dot_dimension_numbers<[1], [0], [0], [1], [0, 0, 1, 1], [], []>} : vector<256x4xbf16>, vector<4x8xbf16>, vector<256x8xf32> -> vector<256x8xf32>
    %c0_26 = arith.constant 0 : index
    %c0_27 = arith.constant 0 : index
    %22 = vector.load %arg6[%c0_26, %c0_27] : memref<256x8xf32, #tpu.memory_space<vmem>>, vector<256x8xf32>
    %23 = arith.addf %22, %21 : vector<256x8xf32>
    %c0_28 = arith.constant 0 : index
    %c0_29 = arith.constant 0 : index
    %24 = vector.load %arg6[%c0_28, %c0_29] : memref<256x8xf32, #tpu.memory_space<vmem>>, vector<256x8xf32>
    tpu.vector_store %arg6[%c0_28, %c0_29], %23 {strides = array<i32>} : memref<256x8xf32, #tpu.memory_space<vmem>>, vector<256x8xf32>,
    %c0_30 = arith.constant 0 : index
    %c1_31 = arith.constant 1 : index
    %c0_32 = arith.constant 0 : index
    %c0_33 = arith.constant 0 : index
    %25 = vector.load %arg1[%c0_30, %c1_31, %c0_32, %c0_33] : memref<1x18x18x4xbf16, #tpu.memory_space<vmem>>, vector<1x16x16x4xbf16>
    %26 = vector.shape_cast %25 : vector<1x16x16x4xbf16> to vector<16x16x4xbf16>
    %27 = vector.shape_cast %26 : vector<16x16x4xbf16> to vector<256x4xbf16>
    %c3 = arith.constant 3 : index
    %c0_34 = arith.constant 0 : index
    %c0_35 = arith.constant 0 : index
    %28 = vector.load %arg2[%c3, %c0_34, %c0_35] : memref<9x4x8xbf16, #tpu.memory_space<vmem>>, vector<1x4x8xbf16>
    %29 = vector.shape_cast %28 : vector<1x4x8xbf16> to vector<4x8xbf16>
    %cst_36 = arith.constant dense<0.000000e+00> : vector<256x8xf32>
    %30 = tpu.matmul %27, %29, %cst_36 {dimension_numbers = #tpu.dot_dimension_numbers<[1], [0], [0], [1], [0, 0, 1, 1], [], []>} : vector<256x4xbf16>, vector<4x8xbf16>, vector<256x8xf32> -> vector<256x8xf32>
    %c0_37 = arith.constant 0 : index
    %c0_38 = arith.constant 0 : index
    %31 = vector.load %arg6[%c0_37, %c0_38] : memref<256x8xf32, #tpu.memory_space<vmem>>, vector<256x8xf32>
    %32 = arith.addf %31, %30 : vector<256x8xf32>
    %c0_39 = arith.constant 0 : index
    %c0_40 = arith.constant 0 : index
    %33 = vector.load %arg6[%c0_39, %c0_40] : memref<256x8xf32, #tpu.memory_space<vmem>>, vector<256x8xf32>
    tpu.vector_store %arg6[%c0_39, %c0_40], %32 {strides = array<i32>} : memref<256x8xf32, #tpu.memory_space<vmem>>, vector<256x8xf32>,
    %c0_41 = arith.constant 0 : index
    %c1_42 = arith.constant 1 : index
    %c1_43 = arith.constant 1 : index
    %c0_44 = arith.constant 0 : index
    %34 = vector.load %arg1[%c0_41, %c1_42, %c1_43, %c0_44] : memref<1x18x18x4xbf16, #tpu.memory_space<vmem>>, vector<1x16x16x4xbf16>
    %35 = vector.shape_cast %34 : vector<1x16x16x4xbf16> to vector<16x16x4xbf16>
    %36 = vector.shape_cast %35 : vector<16x16x4xbf16> to vector<256x4xbf16>
    %c4 = arith.constant 4 : index
    %c0_45 = arith.constant 0 : index
    %c0_46 = arith.constant 0 : index
    %37 = vector.load %arg2[%c4, %c0_45, %c0_46] : memref<9x4x8xbf16, #tpu.memory_space<vmem>>, vector<1x4x8xbf16>
    %38 = vector.shape_cast %37 : vector<1x4x8xbf16> to vector<4x8xbf16>
    %cst_47 = arith.constant dense<0.000000e+00> : vector<256x8xf32>
    %39 = tpu.matmul %36, %38, %cst_47 {dimension_numbers = #tpu.dot_dimension_numbers<[1], [0], [0], [1], [0, 0, 1, 1], [], []>} : vector<256x4xbf16>, vector<4x8xbf16>, vector<256x8xf32> -> vector<256x8xf32>
    %c0_48 = arith.constant 0 : index
    %c0_49 = arith.constant 0 : index
    %40 = vector.load %arg6[%c0_48, %c0_49] : memref<256x8xf32, #tpu.memory_space<vmem>>, vector<256x8xf32>
    %41 = arith.addf %40, %39 : vector<256x8xf32>
    %c0_50 = arith.constant 0 : index
    %c0_51 = arith.constant 0 : index
    %42 = vector.load %arg6[%c0_50, %c0_51] : memref<256x8xf32, #tpu.memory_space<vmem>>, vector<256x8xf32>
    tpu.vector_store %arg6[%c0_50, %c0_51], %41 {strides = array<i32>} : memref<256x8xf32, #tpu.memory_space<vmem>>, vector<256x8xf32>,
    %c0_52 = arith.constant 0 : index
    %c1_53 = arith.constant 1 : index
    %c2_54 = arith.constant 2 : index
    %c0_55 = arith.constant 0 : index
    %43 = vector.load %arg1[%c0_52, %c1_53, %c2_54, %c0_55] : memref<1x18x18x4xbf16, #tpu.memory_space<vmem>>, vector<1x16x16x4xbf16>
    %44 = vector.shape_cast %43 : vector<1x16x16x4xbf16> to vector<16x16x4xbf16>
    %45 = vector.shape_cast %44 : vector<16x16x4xbf16> to vector<256x4xbf16>
    %c5 = arith.constant 5 : index
    %c0_56 = arith.constant 0 : index
    %c0_57 = arith.constant 0 : index
    %46 = vector.load %arg2[%c5, %c0_56, %c0_57] : memref<9x4x8xbf16, #tpu.memory_space<vmem>>, vector<1x4x8xbf16>
    %47 = vector.shape_cast %46 : vector<1x4x8xbf16> to vector<4x8xbf16>
    %cst_58 = arith.constant dense<0.000000e+00> : vector<256x8xf32>
    %48 = tpu.matmul %45, %47, %cst_58 {dimension_numbers = #tpu.dot_dimension_numbers<[1], [0], [0], [1], [0, 0, 1, 1], [], []>} : vector<256x4xbf16>, vector<4x8xbf16>, vector<256x8xf32> -> vector<256x8xf32>
    %c0_59 = arith.constant 0 : index
    %c0_60 = arith.constant 0 : index
    %49 = vector.load %arg6[%c0_59, %c0_60] : memref<256x8xf32, #tpu.memory_space<vmem>>, vector<256x8xf32>
    %50 = arith.addf %49, %48 : vector<256x8xf32>
    %c0_61 = arith.constant 0 : index
    %c0_62 = arith.constant 0 : index
    %51 = vector.load %arg6[%c0_61, %c0_62] : memref<256x8xf32, #tpu.memory_space<vmem>>, vector<256x8xf32>
    tpu.vector_store %arg6[%c0_61, %c0_62], %50 {strides = array<i32>} : memref<256x8xf32, #tpu.memory_space<vmem>>, vector<256x8xf32>,
    %c0_63 = arith.constant 0 : index
    %c2_64 = arith.constant 2 : index
    %c0_65 = arith.constant 0 : index
    %c0_66 = arith.constant 0 : index
    %52 = vector.load %arg1[%c0_63, %c2_64, %c0_65, %c0_66] : memref<1x18x18x4xbf16, #tpu.memory_space<vmem>>, vector<1x16x16x4xbf16>
    %53 = vector.shape_cast %52 : vector<1x16x16x4xbf16> to vector<16x16x4xbf16>
    %54 = vector.shape_cast %53 : vector<16x16x4xbf16> to vector<256x4xbf16>
    %c6 = arith.constant 6 : index
    %c0_67 = arith.constant 0 : index
    %c0_68 = arith.constant 0 : index
    %55 = vector.load %arg2[%c6, %c0_67, %c0_68] : memref<9x4x8xbf16, #tpu.memory_space<vmem>>, vector<1x4x8xbf16>
    %56 = vector.shape_cast %55 : vector<1x4x8xbf16> to vector<4x8xbf16>
    %cst_69 = arith.constant dense<0.000000e+00> : vector<256x8xf32>
    %57 = tpu.matmul %54, %56, %cst_69 {dimension_numbers = #tpu.dot_dimension_numbers<[1], [0], [0], [1], [0, 0, 1, 1], [], []>} : vector<256x4xbf16>, vector<4x8xbf16>, vector<256x8xf32> -> vector<256x8xf32>
    %c0_70 = arith.constant 0 : index
    %c0_71 = arith.constant 0 : index
    %58 = vector.load %arg6[%c0_70, %c0_71] : memref<256x8xf32, #tpu.memory_space<vmem>>, vector<256x8xf32>
    %59 = arith.addf %58, %57 : vector<256x8xf32>
    %c0_72 = arith.constant 0 : index
    %c0_73 = arith.constant 0 : index
    %60 = vector.load %arg6[%c0_72, %c0_73] : memref<256x8xf32, #tpu.memory_space<vmem>>, vector<256x8xf32>
    tpu.vector_store %arg6[%c0_72, %c0_73], %59 {strides = array<i32>} : memref<256x8xf32, #tpu.memory_space<vmem>>, vector<256x8xf32>,
    %c0_74 = arith.constant 0 : index
    %c2_75 = arith.constant 2 : index
    %c1_76 = arith.constant 1 : index
    %c0_77 = arith.constant 0 : index
    %61 = vector.load %arg1[%c0_74, %c2_75, %c1_76, %c0_77] : memref<1x18x18x4xbf16, #tpu.memory_space<vmem>>, vector<1x16x16x4xbf16>
    %62 = vector.shape_cast %61 : vector<1x16x16x4xbf16> to vector<16x16x4xbf16>
    %63 = vector.shape_cast %62 : vector<16x16x4xbf16> to vector<256x4xbf16>
    %c7 = arith.constant 7 : index
    %c0_78 = arith.constant 0 : index
    %c0_79 = arith.constant 0 : index
    %64 = vector.load %arg2[%c7, %c0_78, %c0_79] : memref<9x4x8xbf16, #tpu.memory_space<vmem>>, vector<1x4x8xbf16>
    %65 = vector.shape_cast %64 : vector<1x4x8xbf16> to vector<4x8xbf16>
    %cst_80 = arith.constant dense<0.000000e+00> : vector<256x8xf32>
    %66 = tpu.matmul %63, %65, %cst_80 {dimension_numbers = #tpu.dot_dimension_numbers<[1], [0], [0], [1], [0, 0, 1, 1], [], []>} : vector<256x4xbf16>, vector<4x8xbf16>, vector<256x8xf32> -> vector<256x8xf32>
    %c0_81 = arith.constant 0 : index
    %c0_82 = arith.constant 0 : index
    %67 = vector.load %arg6[%c0_81, %c0_82] : memref<256x8xf32, #tpu.memory_space<vmem>>, vector<256x8xf32>
    %68 = arith.addf %67, %66 : vector<256x8xf32>
    %c0_83 = arith.constant 0 : index
    %c0_84 = arith.constant 0 : index
    %69 = vector.load %arg6[%c0_83, %c0_84] : memref<256x8xf32, #tpu.memory_space<vmem>>, vector<256x8xf32>
    tpu.vector_store %arg6[%c0_83, %c0_84], %68 {strides = array<i32>} : memref<256x8xf32, #tpu.memory_space<vmem>>, vector<256x8xf32>,
    %c0_85 = arith.constant 0 : index
    %c2_86 = arith.constant 2 : index
    %c2_87 = arith.constant 2 : index
    %c0_88 = arith.constant 0 : index
    %70 = vector.load %arg1[%c0_85, %c2_86, %c2_87, %c0_88] : memref<1x18x18x4xbf16, #tpu.memory_space<vmem>>, vector<1x16x16x4xbf16>
    %71 = vector.shape_cast %70 : vector<1x16x16x4xbf16> to vector<16x16x4xbf16>
    %72 = vector.shape_cast %71 : vector<16x16x4xbf16> to vector<256x4xbf16>
    %c8 = arith.constant 8 : index
    %c0_89 = arith.constant 0 : index
    %c0_90 = arith.constant 0 : index
    %73 = vector.load %arg2[%c8, %c0_89, %c0_90] : memref<9x4x8xbf16, #tpu.memory_space<vmem>>, vector<1x4x8xbf16>
    %74 = vector.shape_cast %73 : vector<1x4x8xbf16> to vector<4x8xbf16>
    %cst_91 = arith.constant dense<0.000000e+00> : vector<256x8xf32>
    %75 = tpu.matmul %72, %74, %cst_91 {dimension_numbers = #tpu.dot_dimension_numbers<[1], [0], [0], [1], [0, 0, 1, 1], [], []>} : vector<256x4xbf16>, vector<4x8xbf16>, vector<256x8xf32> -> vector<256x8xf32>
    %c0_92 = arith.constant 0 : index
    %c0_93 = arith.constant 0 : index
    %76 = vector.load %arg6[%c0_92, %c0_93] : memref<256x8xf32, #tpu.memory_space<vmem>>, vector<256x8xf32>
    %77 = arith.addf %76, %75 : vector<256x8xf32>
    %c0_94 = arith.constant 0 : index
    %c0_95 = arith.constant 0 : index
    %78 = vector.load %arg6[%c0_94, %c0_95] : memref<256x8xf32, #tpu.memory_space<vmem>>, vector<256x8xf32>
    tpu.vector_store %arg6[%c0_94, %c0_95], %77 {strides = array<i32>} : memref<256x8xf32, #tpu.memory_space<vmem>>, vector<256x8xf32>,
    %c0_96 = arith.constant 0 : index
    %c0_97 = arith.constant 0 : index
    %79 = vector.load %arg6[%c0_96, %c0_97] : memref<256x8xf32, #tpu.memory_space<vmem>>, vector<256x8xf32>
    %cst_98 = arith.constant dense<0.000000e+00> : vector<8xf32>
    %80 = vector.multi_reduction <add>, %79, %cst_98 [0] : vector<256x8xf32> to vector<8xf32>
    %81 = vector.shape_cast %80 : vector<8xf32> to vector<1x8xf32>
    %c0_99 = arith.constant 0 : index
    %c0_100 = arith.constant 0 : index
    %c0_101 = arith.constant 0 : index
    %82 = vector.load %arg4[%c0_99, %c0_100, %c0_101] : memref<1x1x8xf32, #tpu.memory_space<vmem>>, vector<1x1x8xf32>
    %83 = vector.shape_cast %82 : vector<1x1x8xf32> to vector<1x8xf32>
    %84 = vector.shape_cast %81 : vector<1x8xf32> to vector<1x1x8xf32>
    tpu.vector_store %arg4[%c0_99, %c0_100, %c0_101], %84 {strides = array<i32>} : memref<1x1x8xf32, #tpu.memory_space<vmem>>, vector<1x1x8xf32>,
    %85 = arith.mulf %79, %79 : vector<256x8xf32>
    %cst_102 = arith.constant dense<0.000000e+00> : vector<8xf32>
    %86 = vector.multi_reduction <add>, %85, %cst_102 [0] : vector<256x8xf32> to vector<8xf32>
    %87 = vector.shape_cast %86 : vector<8xf32> to vector<1x8xf32>
    %c0_103 = arith.constant 0 : index
    %c0_104 = arith.constant 0 : index
    %c0_105 = arith.constant 0 : index
    %88 = vector.load %arg5[%c0_103, %c0_104, %c0_105] : memref<1x1x8xf32, #tpu.memory_space<vmem>>, vector<1x1x8xf32>
    %89 = vector.shape_cast %88 : vector<1x1x8xf32> to vector<1x8xf32>
    %90 = vector.shape_cast %87 : vector<1x8xf32> to vector<1x1x8xf32>
    tpu.vector_store %arg5[%c0_103, %c0_104, %c0_105], %90 {strides = array<i32>} : memref<1x1x8xf32, #tpu.memory_space<vmem>>, vector<1x1x8xf32>,
    %91 = arith.truncf %79 : vector<256x8xf32> to vector<256x8xbf16>
    %c0_106 = arith.constant 0 : index
    %c0_107 = arith.constant 0 : index
    %92 = vector.load %arg3[%c0_106, %c0_107] : memref<256x8xbf16, #tpu.memory_space<vmem>>, vector<256x8xbf16>
    tpu.vector_store %arg3[%c0_106, %c0_107], %91 {strides = array<i32>} : memref<256x8xbf16, #tpu.memory_space<vmem>>, vector<256x8xbf16>,
    return
  }
  func.func @transform_0(%arg0: i32) -> (i32, i32, i32, i32) {
    %c0_i32 = arith.constant 0 : i32
    %c0_i32_0 = arith.constant 0 : i32
    %c0_i32_1 = arith.constant 0 : i32
    %c0_i32_2 = arith.constant 0 : i32
    return %arg0, %c0_i32, %c0_i32_0, %c0_i32_1 : i32, i32, i32, i32
  }
  func.func @transform_1(%arg0: i32) -> (i32, i32, i32) {
    %c0_i32 = arith.constant 0 : i32
    %c0_i32_0 = arith.constant 0 : i32
    %c0_i32_1 = arith.constant 0 : i32
    %c0_i32_2 = arith.constant 0 : i32
    return %c0_i32, %c0_i32_0, %c0_i32_1 : i32, i32, i32
  }
  func.func @transform_2(%arg0: i32) -> (i32, i32) {
    %c0_i32 = arith.constant 0 : i32
    %c0_i32_0 = arith.constant 0 : i32
    return %arg0, %c0_i32 : i32, i32
  }
  func.func @transform_3(%arg0: i32) -> (i32, i32, i32) {
    %c0_i32 = arith.constant 0 : i32
    %c0_i32_0 = arith.constant 0 : i32
    %c0_i32_1 = arith.constant 0 : i32
    return %arg0, %c0_i32, %c0_i32_0 : i32, i32, i32
  }
  func.func @transform_4(%arg0: i32) -> (i32, i32, i32) {
    %c0_i32 = arith.constant 0 : i32
    %c0_i32_0 = arith.constant 0 : i32
    %c0_i32_1 = arith.constant 0 : i32
    return %arg0, %c0_i32, %c0_i32_0 : i32, i32, i32
  }
}

</mosaic_0001>

<llo_original>
// kernel: tpu_custom_call.1
$region0: #{tpu_custom_call.1}
  #allocation0 [shape = 'u32[]', space=smem, size = 0x4, offset = 0x4, fixed_abs, tag = 'smem constant byte address 0x4 - core index']
  #allocation1 [shape = 'u32[72,128]{1,0:T(1,128)}', space=vmem, size = 0x9000, scoped, tag = 'internal scratch']
  #allocation2 [shape = 'f32[256,8]{1,0:T(8,128)}', space=vmem, size = 0x20000, scoped, tag = 'scratch operand']
  %s0 = inlined_call_operand.vmem [shape: bf16[2,18,18,4], index: 0, kind: input, shape index: {}]
  %s1 = inlined_call_operand.vmem [shape: bf16[9,4,8], index: 1, kind: input, shape index: {}]
  %s2 = inlined_call_operand.vmem [shape: bf16[512,8], index: 2, kind: output, shape index: {0}]
  %s3 = inlined_call_operand.hbm [shape: f32[2,1,8], index: 3, kind: output, shape index: {1}]
  %s4 = inlined_call_operand.hbm [shape: f32[2,1,8], index: 4, kind: output, shape index: {2}]
  %5 = xla_tuple %s2, %s3, %s4
  %s6 = sld [smem:[#allocation0]]
  $region57: #{tpu_custom_call.1} parent=0
    _
  %s8 = ssub.s32 1, %s6
  %s9 = scalar_select 0, %s8, %s6
  $region1: #{tpu_custom_call.1} parent=0
    #allocation3 [shape = 'u8[1024]{0}', space=vmem, size = 0x400, scoped, tag = 'output window, operand 1']
    #allocation4 [shape = 's32[2]{0}', space=sflag, size = 0x8, scoped, tag = 'scoped memory for tpu_custom_call.1']
    #allocation5 [shape = 'u8[1024]{0}', space=vmem, size = 0x400, scoped, tag = 'output window, operand 2']
    #allocation6 [shape = 's32[2]{0}', space=sflag, size = 0x8, scoped, tag = 'scoped memory for tpu_custom_call.1']
    %10 = vsyncpa [#allocation4], 0
    %s11 = scalar_lea.sflag [#allocation4], 1
    %12 = vsyncpa %s11, 0
    %13 = vsyncpa [#allocation6], 0
    %s14 = scalar_lea.sflag [#allocation6], 1
    %15 = vsyncpa %s14, 0
    loop: start=0, step=1, limit=4
    $region2: #{tpu_custom_call.1} parent=1 // loop_pre_header
      _
    $region3: #{tpu_custom_call.1} parent=1 // loop_header
      %s17 = sphi 0, %s21
      %p18 = scmp.ge.s32.totalorder %s17, 4
      %s27 = sphi 0, %s29
      %s30 = sphi 0, %s27
      %s31 = sphi 0, %s30
      %s47 = sphi 0, %s31
      %s51 = sphi 0, %s51
      %s53 = sphi 0, %s51
      %s54 = sphi 0, %s53
      %s68 = sphi 0, %s54
      %s74 = sphi 0, %s76
      %s77 = sphi 0, %s74
      %s78 = sphi 0, %s77
      %s94 = sphi 0, %s78
      %s100 = sphi 0, %s102
      %s103 = sphi 0, %s100
      %s104 = sphi 0, %s103
      %s120 = sphi 0, %s104
      %s126 = sphi 0, %s128
      %s129 = sphi 0, %s126
      %s130 = sphi 0, %s129
      %s146 = sphi 0, %s130
    $region4: #{tpu_custom_call.1} parent=1 // loop_header_branch
      %20 = sbr.rel (%p18) target = $region8
    $region5: #{tpu_custom_call.1} parent=1 // loop_body
      %s22 = ssub.s32 %s17, 1
      %s23 = ssub.s32 %s17, 2
      %s24 = sadd.s32 %s17, 1
      %s25 = ssub.s32 %s17, %s24
      %p26 = scmp.eq.s32.totalorder %s25, 0
      %s28 = sadd.s32 %s27, 1
      %s29 = scalar_select %p26, %s27, %s28
      %p32 = pneg %p26
      %p33 = scmp.eq.s32.totalorder %s17, 1
      %p34 = por %p32, %p33
      %p35 = scmp.ne.s32.totalorder %s27, %s30
      %p36 = scmp.eq.s32.totalorder %s17, 0
      %p37 = por %p35, %p36
      %p38 = scmp.ne.s32.totalorder %s27, %s30
      %p39 = scmp.eq.s32.totalorder %s22, 1
      %p40 = por %p38, %p39
      %p41 = scmp.ne.s32.totalorder %s30, %s31
      %p42 = scmp.eq.s32.totalorder %s22, 0
      %p43 = por %p41, %p42
      %p44 = scmp.ne.s32.totalorder %s30, %s31
      %p45 = scmp.eq.s32.totalorder %s23, 1
      %p46 = por %p44, %p45
      %p48 = scmp.ne.s32.totalorder %s31, %s47
      %p49 = scmp.eq.s32.totalorder %s23, 0
      %p50 = por %p48, %p49
      %s52 = sadd.s32 %s51, 1
      %p55 = scmp.eq.s32.totalorder %s17, 1
      %p56 = scmp.ne.s32.totalorder %s51, %s53
      %p57 = scmp.eq.s32.totalorder %s17, 0
      %p58 = por %p56, %p57
      %p59 = scmp.ne.s32.totalorder %s51, %s53
      %p60 = scmp.eq.s32.totalorder %s22, 1
      %p61 = por %p59, %p60
      %p62 = scmp.ne.s32.totalorder %s53, %s54
      %p63 = scmp.eq.s32.totalorder %s22, 0
      %p64 = por %p62, %p63
      %p65 = scmp.ne.s32.totalorder %s53, %s54
      %p66 = scmp.eq.s32.totalorder %s23, 1
      %p67 = por %p65, %p66
      %p69 = scmp.ne.s32.totalorder %s54, %s68
      %p70 = scmp.eq.s32.totalorder %s23, 0
      %p71 = por %p69, %p70
      %s72 = ssub.s32 %s17, %s24
      %p73 = scmp.eq.s32.totalorder %s72, 0
      %s75 = sadd.s32 %s74, 1
      %s76 = scalar_select %p73, %s74, %s75
      %p79 = pneg %p73
      %p80 = scmp.eq.s32.totalorder %s17, 1
      %p81 = por %p79, %p80
      %p82 = scmp.ne.s32.totalorder %s74, %s77
      %p83 = scmp.eq.s32.totalorder %s17, 0
      %p84 = por %p82, %p83
      %p85 = scmp.ne.s32.totalorder %s74, %s77
      %p86 = scmp.eq.s32.totalorder %s22, 1
      %p87 = por %p85, %p86
      %p88 = scmp.ne.s32.totalorder %s77, %s78
      %p89 = scmp.eq.s32.totalorder %s22, 0
      %p90 = por %p88, %p89
      %p91 = scmp.ne.s32.totalorder %s77, %s78
      %p92 = scmp.eq.s32.totalorder %s23, 1
      %p93 = por %p91, %p92
      %p95 = scmp.ne.s32.totalorder %s78, %s94
      %p96 = scmp.eq.s32.totalorder %s23, 0
      %p97 = por %p95, %p96
      %s98 = ssub.s32 %s17, %s24
      %p99 = scmp.eq.s32.totalorder %s98, 0
      %s101 = sadd.s32 %s100, 1
      %s102 = scalar_select %p99, %s100, %s101
      %p105 = pneg %p99
      %p106 = scmp.eq.s32.totalorder %s17, 1
      %p107 = por %p105, %p106
      %p108 = scmp.ne.s32.totalorder %s100, %s103
      %p109 = scmp.eq.s32.totalorder %s17, 0
      %p110 = por %p108, %p109
      %p111 = scmp.ne.s32.totalorder %s100, %s103
      %p112 = scmp.eq.s32.totalorder %s22, 1
      %p113 = por %p111, %p112
      %p114 = scmp.ne.s32.totalorder %s103, %s104
      %p115 = scmp.eq.s32.totalorder %s22, 0
      %p116 = por %p114, %p115
      %p117 = scmp.ne.s32.totalorder %s103, %s104
      %p118 = scmp.eq.s32.totalorder %s23, 1
      %p119 = por %p117, %p118
      %p121 = scmp.ne.s32.totalorder %s104, %s120
      %p122 = scmp.eq.s32.totalorder %s23, 0
      %p123 = por %p121, %p122
      %s124 = ssub.s32 %s17, %s24
      %p125 = scmp.eq.s32.totalorder %s124, 0
      %s127 = sadd.s32 %s126, 1
      %s128 = scalar_select %p125, %s126, %s127
      %p131 = pneg %p125
      %p132 = scmp.eq.s32.totalorder %s17, 1
      %p133 = por %p131, %p132
      %p134 = scmp.ne.s32.totalorder %s126, %s129
      %p135 = scmp.eq.s32.totalorder %s17, 0
      %p136 = por %p134, %p135
      %p137 = scmp.ne.s32.totalorder %s126, %s129
      %p138 = scmp.eq.s32.totalorder %s22, 1
      %p139 = por %p137, %p138
      %p140 = scmp.ne.s32.totalorder %s129, %s130
      %p141 = scmp.eq.s32.totalorder %s22, 0
      %p142 = por %p140, %p141
      %p143 = scmp.ne.s32.totalorder %s129, %s130
      %p144 = scmp.eq.s32.totalorder %s23, 1
      %p145 = por %p143, %p144
      %p147 = scmp.ne.s32.totalorder %s130, %s146
      %p148 = scmp.eq.s32.totalorder %s23, 0
      %p149 = por %p147, %p148
      %p150 = scmp.le.s32.totalorder 1, %s17
      %p151 = scmp.lt.s32.totalorder %s17, 3
      %p152 = pnand %p150, %p151
      %p153 = pneg %p152
      // Predicated region
      $region9: #{tpu_custom_call.1} parent=5 // pred_check
        _
      $region10: #{tpu_custom_call.1} parent=5 // pred_check_branch
        %155 = sbr.rel (%p152) target = $region12
      $region11: #{tpu_custom_call.1} parent=5 // pred_region
        %s156 = ssub.s32 %s17, 1
        // Predicated region
        $region13: #{tpu_custom_call.1} parent=11 // pred_check
          %p157 = pneg %p64
        $region14: #{tpu_custom_call.1} parent=11 // pred_check_branch
          %159 = sbr.rel (%p157) target = $region16
        $region15: #{tpu_custom_call.1} parent=11 // pred_region
          _
        $region16: #{tpu_custom_call.1} parent=11 // pred_fallthru
          _
      $region12: #{tpu_custom_call.1} parent=5 // pred_fallthru
        _
      %p160 = scmp.lt.s32.totalorder %s17, 2
      // Predicated region
      $region17: #{tpu_custom_call.1} parent=5 // pred_check
        %p161 = pneg %p160
      $region18: #{tpu_custom_call.1} parent=5 // pred_check_branch
        %163 = sbr.rel (%p161) target = $region20
      $region19: #{tpu_custom_call.1} parent=5 // pred_region
        // Predicated region
        $region21: #{tpu_custom_call.1} parent=19 // pred_check
          %p164 = pneg %p37
        $region22: #{tpu_custom_call.1} parent=19 // pred_check_branch
          %166 = sbr.rel (%p164) target = $region24
        $region23: #{tpu_custom_call.1} parent=19 // pred_region
          %p167 = scmp.lt.s32.totalorder %s17, 1
          %s168 = scalar_select %p167, %s17, 1
          %s169 = smul.addr %s168, 54
          %s170 = smul.addr %s169, 4
          %s171 = scalar_lea.vmem %s0, %s170
        $region24: #{tpu_custom_call.1} parent=19 // pred_fallthru
          _
      $region20: #{tpu_custom_call.1} parent=5 // pred_fallthru
        _
      %p172 = scmp.le.s32.totalorder 1, %s17
      %p173 = scmp.lt.s32.totalorder %s17, 3
      %p174 = pnand %p172, %p173
      %p175 = pneg %p174
      // Predicated region
      $region25: #{tpu_custom_call.1} parent=5 // pred_check
        _
      $region26: #{tpu_custom_call.1} parent=5 // pred_check_branch
        %177 = sbr.rel (%p174) target = $region28
      $region27: #{tpu_custom_call.1} parent=5 // pred_region
        %s178 = ssub.s32 %s17, 1
        %p179 = scmp.lt.s32.totalorder %s22, 1
        %s180 = scalar_select %p179, %s22, 1
        %s181 = smul.addr %s180, 54
        %s182 = smul.addr %s181, 4
        %s183 = scalar_lea.vmem %s0, %s182
        %p184 = pneg %p43
        %p185 = pneg %p40
        %p186 = pneg %p64
        %p187 = pneg %p61
        %p188 = pneg %p90
        %p189 = pneg %p87
        %s190 = smul.u32 32, %s22
        %p191 = scmp.lt.s32.totalorder %s190, 63
        %s192 = scalar_select %p191, %s190, 63
        %s193 = smul.addr %s192, 4
        %s194 = scalar_lea.vmem %s2, %s193
        %p195 = pneg %p116
        %p196 = pneg %p113
        %s197 = sand.u32 %s103, 1
        %s198 = scalar_lea.sflag [#allocation4], %s197
        %s199 = sand.u32 %s103, 1
        %s200 = scalar_lea.vmem [#allocation3], %s199
        %p201 = pneg %p142
        %p202 = pneg %p139
        %s203 = sand.u32 %s129, 1
        %s204 = scalar_lea.sflag [#allocation6], %s203
        %s205 = sand.u32 %s129, 1
        %s206 = scalar_lea.vmem [#allocation5], %s205
        %p207 = scmp.lt.s32.totalorder %s22, 1
        %s208 = scalar_select %p207, %s22, 1
        %s209 = smul.addr %s208, 54
        %s210 = smul.addr %s209, 4
        %s211 = scalar_lea.vmem %s0, %s210
        %s212 = smul.u32 32, %s22
        %p213 = scmp.lt.s32.totalorder %s212, 63
        %s214 = scalar_select %p213, %s212, 63
        %s215 = smul.addr %s214, 4
        %s216 = scalar_lea.vmem %s2, %s215
        %s217 = smul.u32 32, %s22
        %v219 = vld [vmem:[%s211] sm:$0xf]
        %v220 = vld [vmem:[%s211 + $0x4] sm:$0xf]
        %v221 = vld [vmem:[%s211 + $0xc] sm:$0xf]
        %v222 = vld [vmem:[%s211 + $0x10] sm:$0xf]
        %v223 = vld [vmem:[%s211 + $0x18] sm:$0xf]
        %v224 = vld [vmem:[%s211 + $0x1c] sm:$0xf]
        %v225 = vld [vmem:[%s211 + $0x24] sm:$0xf]
        %v226 = vld [vmem:[%s211 + $0x28] sm:$0xf]
        %v227 = vld [vmem:[%s211 + $0x30] sm:$0xf]
        %v228 = vld [vmem:[%s211 + $0x34] sm:$0xf]
        %v229 = vld [vmem:[%s211 + $0x3c] sm:$0xf]
        %v230 = vld [vmem:[%s211 + $0x40] sm:$0xf]
        %v231 = vld [vmem:[%s211 + $0x48] sm:$0xf]
        %v232 = vld [vmem:[%s211 + $0x4c] sm:$0xf]
        %v233 = vld [vmem:[%s211 + $0x54] sm:$0xf]
        %v234 = vld [vmem:[%s211 + $0x58] sm:$0xf]
        %v235 = vld [vmem:[%s211 + $0x60] sm:$0xf]
        %v236 = vld [vmem:[%s211 + $0x64] sm:$0xf]
        %v237 = vld [vmem:[%s211 + $0x6c] sm:$0xf]
        %v238 = vld [vmem:[%s211 + $0x70] sm:$0xf]
        %v239 = vld [vmem:[%s211 + $0x78] sm:$0xf]
        %v240 = vld [vmem:[%s211 + $0x7c] sm:$0xf]
        %v241 = vld [vmem:[%s211 + $0x84] sm:$0xf]
        %v242 = vld [vmem:[%s211 + $0x88] sm:$0xf]
        %v243 = vld [vmem:[%s211 + $0x90] sm:$0xf]
        %v244 = vld [vmem:[%s211 + $0x94] sm:$0xf]
        %v245 = vld [vmem:[%s211 + $0x9c] sm:$0xf]
        %v246 = vld [vmem:[%s211 + $0xa0] sm:$0xf]
        %v247 = vld [vmem:[%s211 + $0xa8] sm:$0xf]
        %v248 = vld [vmem:[%s211 + $0xac] sm:$0xf]
        %v249 = vld [vmem:[%s211 + $0xb4] sm:$0xf]
        %v250 = vld [vmem:[%s211 + $0xb8] sm:$0xf]
        %v251 = vld [vmem:[%s1] sm:$0x3]
        %v284 = vunpack.c.l.b16 %v219
        %v285 = vunpack.c.l.b16 %v220
        %v286 = vunpack.c.l.b16 %v221
        %v287 = vunpack.c.l.b16 %v222
        %v288 = vunpack.c.l.b16 %v223
        %v289 = vunpack.c.l.b16 %v224
        %v290 = vunpack.c.l.b16 %v225
        %v291 = vunpack.c.l.b16 %v226
        %v292 = vunpack.c.l.b16 %v227
        %v293 = vunpack.c.l.b16 %v228
        %v294 = vunpack.c.l.b16 %v229
        %v295 = vunpack.c.l.b16 %v230
        %v296 = vunpack.c.l.b16 %v231
        %v297 = vunpack.c.l.b16 %v232
        %v298 = vunpack.c.l.b16 %v233
        %v299 = vunpack.c.l.b16 %v234
        %v300 = vunpack.c.l.b16 %v235
        %v301 = vunpack.c.l.b16 %v236
        %v302 = vunpack.c.l.b16 %v237
        %v303 = vunpack.c.l.b16 %v238
        %v304 = vunpack.c.l.b16 %v239
        %v305 = vunpack.c.l.b16 %v240
        %v306 = vunpack.c.l.b16 %v241
        %v307 = vunpack.c.l.b16 %v242
        %v308 = vunpack.c.l.b16 %v243
        %v309 = vunpack.c.l.b16 %v244
        %v310 = vunpack.c.l.b16 %v245
        %v311 = vunpack.c.l.b16 %v246
        %v312 = vunpack.c.l.b16 %v247
        %v313 = vunpack.c.l.b16 %v248
        %v314 = vunpack.c.l.b16 %v249
        %v315 = vunpack.c.l.b16 %v250
        %v316 = vpack.c.b16 %v285, %v284
        %v317 = vpack.c.b16 %v287, %v286
        %v318 = vpack.c.b16 %v289, %v288
        %v319 = vpack.c.b16 %v291, %v290
        %v320 = vpack.c.b16 %v293, %v292
        %v321 = vpack.c.b16 %v295, %v294
        %v322 = vpack.c.b16 %v297, %v296
        %v323 = vpack.c.b16 %v299, %v298
        %v324 = vpack.c.b16 %v301, %v300
        %v325 = vpack.c.b16 %v303, %v302
        %v326 = vpack.c.b16 %v305, %v304
        %v327 = vpack.c.b16 %v307, %v306
        %v328 = vpack.c.b16 %v309, %v308
        %v329 = vpack.c.b16 %v311, %v310
        %v330 = vpack.c.b16 %v313, %v312
        %v331 = vpack.c.b16 %v315, %v314
        %vm332 = vcmask 31744
        %v334 = vsel %vm332, %v316, 0
        %v337 = vsel %vm332, %v317, 0
        %v340 = vsel %vm332, %v318, 0
        %v343 = vsel %vm332, %v319, 0
        %v346 = vsel %vm332, %v320, 0
        %v349 = vsel %vm332, %v321, 0
        %v352 = vsel %vm332, %v322, 0
        %v355 = vsel %vm332, %v323, 0
        %v358 = vsel %vm332, %v324, 0
        %v361 = vsel %vm332, %v325, 0
        %v364 = vsel %vm332, %v326, 0
        %v367 = vsel %vm332, %v327, 0
        %v370 = vsel %vm332, %v328, 0
        %v373 = vsel %vm332, %v329, 0
        %v376 = vsel %vm332, %v330, 0
        %v379 = vsel %vm332, %v331, 0
        %vm381 = vcmask 1041408
        %v383 = vsel %vm381, %v251, 0
        %385 = vmatpush.bf16.msra.mxu0 0
        %386 = vmatpush.bf16.msra.mxu0 0
        %387 = vmatpush.bf16.msra.mxu0 0
        %388 = vmatpush.bf16.msra.mxu0 0
        %389 = vmatpush.bf16.msra.mxu0 0
        %390 = vmatpush.bf16.msra.mxu0 0
        %391 = vmatpush.bf16.msra.mxu0 0
        %392 = vmatpush.bf16.msra.mxu0 %v383
        %393 = vmatmul.bf16.gmra.mxu0 %v334
        %v394 = vpop.f32.mrf.mxu0
        %v395 = vadd.f32 0.0, %v394
        %v396 = vpop.f32.mrf.mxu0
        %v397 = vadd.f32 0.0, %v396
        %398 = vmatmul.bf16.gmra.mxu0 %v337
        %v399 = vpop.f32.mrf.mxu0
        %v400 = vadd.f32 0.0, %v399
        %v401 = vpop.f32.mrf.mxu0
        %v402 = vadd.f32 0.0, %v401
        %403 = vmatmul.bf16.gmra.mxu0 %v340
        %v404 = vpop.f32.mrf.mxu0
        %v405 = vadd.f32 0.0, %v404
        %v406 = vpop.f32.mrf.mxu0
        %v407 = vadd.f32 0.0, %v406
        %408 = vmatmul.bf16.gmra.mxu0 %v343
        %v409 = vpop.f32.mrf.mxu0
        %v410 = vadd.f32 0.0, %v409
        %v411 = vpop.f32.mrf.mxu0
        %v412 = vadd.f32 0.0, %v411
        %413 = vmatmul.bf16.gmra.mxu0 %v346
        %v414 = vpop.f32.mrf.mxu0
        %v415 = vadd.f32 0.0, %v414
        %v416 = vpop.f32.mrf.mxu0
        %v417 = vadd.f32 0.0, %v416
        %418 = vmatmul.bf16.gmra.mxu0 %v349
        %v419 = vpop.f32.mrf.mxu0
        %v420 = vadd.f32 0.0, %v419
        %v421 = vpop.f32.mrf.mxu0
        %v422 = vadd.f32 0.0, %v421
        %423 = vmatmul.bf16.gmra.mxu0 %v352
        %v424 = vpop.f32.mrf.mxu0
        %v425 = vadd.f32 0.0, %v424
        %v426 = vpop.f32.mrf.mxu0
        %v427 = vadd.f32 0.0, %v426
        %428 = vmatmul.bf16.gmra.mxu0 %v355
        %v429 = vpop.f32.mrf.mxu0
        %v430 = vadd.f32 0.0, %v429
        %v431 = vpop.f32.mrf.mxu0
        %v432 = vadd.f32 0.0, %v431
        %433 = vmatmul.bf16.gmra.mxu0 %v358
        %v434 = vpop.f32.mrf.mxu0
        %v435 = vadd.f32 0.0, %v434
        %v436 = vpop.f32.mrf.mxu0
        %v437 = vadd.f32 0.0, %v436
        %438 = vmatmul.bf16.gmra.mxu0 %v361
        %v439 = vpop.f32.mrf.mxu0
        %v440 = vadd.f32 0.0, %v439
        %v441 = vpop.f32.mrf.mxu0
        %v442 = vadd.f32 0.0, %v441
        %443 = vmatmul.bf16.gmra.mxu0 %v364
        %v444 = vpop.f32.mrf.mxu0
        %v445 = vadd.f32 0.0, %v444
        %v446 = vpop.f32.mrf.mxu0
        %v447 = vadd.f32 0.0, %v446
        %448 = vmatmul.bf16.gmra.mxu0 %v367
        %v449 = vpop.f32.mrf.mxu0
        %v450 = vadd.f32 0.0, %v449
        %v451 = vpop.f32.mrf.mxu0
        %v452 = vadd.f32 0.0, %v451
        %453 = vmatmul.bf16.gmra.mxu0 %v370
        %v454 = vpop.f32.mrf.mxu0
        %v455 = vadd.f32 0.0, %v454
        %v456 = vpop.f32.mrf.mxu0
        %v457 = vadd.f32 0.0, %v456
        %458 = vmatmul.bf16.gmra.mxu0 %v373
        %v459 = vpop.f32.mrf.mxu0
        %v460 = vadd.f32 0.0, %v459
        %v461 = vpop.f32.mrf.mxu0
        %v462 = vadd.f32 0.0, %v461
        %463 = vmatmul.bf16.gmra.mxu0 %v376
        %v464 = vpop.f32.mrf.mxu0
        %v465 = vadd.f32 0.0, %v464
        %v466 = vpop.f32.mrf.mxu0
        %v467 = vadd.f32 0.0, %v466
        %468 = vmatmul.bf16.gmra.mxu0 %v379
        %v469 = vpop.f32.mrf.mxu0
        %v470 = vadd.f32 0.0, %v469
        %v471 = vpop.f32.mrf.mxu0
        %v472 = vadd.f32 0.0, %v471
        %473 = vdwg.mxu0
        %vm474 = vcmask 64512
        %475 = vst.msk [vmem:[#allocation2] sm:$0xff] %vm474, %v395
        %476 = vst.msk [vmem:[#allocation2 + $0x8] sm:$0xff] %vm474, %v397
        %477 = vst.msk [vmem:[#allocation2 + $0x10] sm:$0xff] %vm474, %v400
        %478 = vst.msk [vmem:[#allocation2 + $0x18] sm:$0xff] %vm474, %v402
        %479 = vst.msk [vmem:[#allocation2 + $0x20] sm:$0xff] %vm474, %v405
        %480 = vst.msk [vmem:[#allocation2 + $0x28] sm:$0xff] %vm474, %v407
        %481 = vst.msk [vmem:[#allocation2 + $0x30] sm:$0xff] %vm474, %v410
        %482 = vst.msk [vmem:[#allocation2 + $0x38] sm:$0xff] %vm474, %v412
        %483 = vst.msk [vmem:[#allocation2 + $0x40] sm:$0xff] %vm474, %v415
        %484 = vst.msk [vmem:[#allocation2 + $0x48] sm:$0xff] %vm474, %v417
        %485 = vst.msk [vmem:[#allocation2 + $0x50] sm:$0xff] %vm474, %v420
        %486 = vst.msk [vmem:[#allocation2 + $0x58] sm:$0xff] %vm474, %v422
        %487 = vst.msk [vmem:[#allocation2 + $0x60] sm:$0xff] %vm474, %v425
        %488 = vst.msk [vmem:[#allocation2 + $0x68] sm:$0xff] %vm474, %v427
        %489 = vst.msk [vmem:[#allocation2 + $0x70] sm:$0xff] %vm474, %v430
        %490 = vst.msk [vmem:[#allocation2 + $0x78] sm:$0xff] %vm474, %v432
        %491 = vst.msk [vmem:[#allocation2 + $0x80] sm:$0xff] %vm474, %v435
        %492 = vst.msk [vmem:[#allocation2 + $0x88] sm:$0xff] %vm474, %v437
        %493 = vst.msk [vmem:[#allocation2 + $0x90] sm:$0xff] %vm474, %v440
        %494 = vst.msk [vmem:[#allocation2 + $0x98] sm:$0xff] %vm474, %v442
        %495 = vst.msk [vmem:[#allocation2 + $0xa0] sm:$0xff] %vm474, %v445
        %496 = vst.msk [vmem:[#allocation2 + $0xa8] sm:$0xff] %vm474, %v447
        %497 = vst.msk [vmem:[#allocation2 + $0xb0] sm:$0xff] %vm474, %v450
        %498 = vst.msk [vmem:[#allocation2 + $0xb8] sm:$0xff] %vm474, %v452
        %499 = vst.msk [vmem:[#allocation2 + $0xc0] sm:$0xff] %vm474, %v455
        %500 = vst.msk [vmem:[#allocation2 + $0xc8] sm:$0xff] %vm474, %v457
        %501 = vst.msk [vmem:[#allocation2 + $0xd0] sm:$0xff] %vm474, %v460
        %502 = vst.msk [vmem:[#allocation2 + $0xd8] sm:$0xff] %vm474, %v462
        %503 = vst.msk [vmem:[#allocation2 + $0xe0] sm:$0xff] %vm474, %v465
        %504 = vst.msk [vmem:[#allocation2 + $0xe8] sm:$0xff] %vm474, %v467
        %505 = vst.msk [vmem:[#allocation2 + $0xf0] sm:$0xff] %vm474, %v470
        %506 = vst.msk [vmem:[#allocation2 + $0xf8] sm:$0xff] %vm474, %v472
        %v507 = vld [vmem:[%s211] sm:$0xf]
        %v508 = vld [vmem:[%s211 + $0x4] sm:$0xf]
        %v509 = vld [vmem:[%s211 + $0x8] sm:$0x1]
        %v510 = vld [vmem:[%s211 + $0xc] sm:$0xf]
        %v511 = vld [vmem:[%s211 + $0x10] sm:$0xf]
        %v512 = vld [vmem:[%s211 + $0x14] sm:$0x1]
        %v513 = vld [vmem:[%s211 + $0x18] sm:$0xf]
        %v514 = vld [vmem:[%s211 + $0x1c] sm:$0xf]
        %v515 = vld [vmem:[%s211 + $0x20] sm:$0x1]
        %v516 = vld [vmem:[%s211 + $0x24] sm:$0xf]
        %v517 = vld [vmem:[%s211 + $0x28] sm:$0xf]
        %v518 = vld [vmem:[%s211 + $0x2c] sm:$0x1]
        %v519 = vld [vmem:[%s211 + $0x30] sm:$0xf]
        %v520 = vld [vmem:[%s211 + $0x34] sm:$0xf]
        %v521 = vld [vmem:[%s211 + $0x38] sm:$0x1]
        %v522 = vld [vmem:[%s211 + $0x3c] sm:$0xf]
        %v523 = vld [vmem:[%s211 + $0x40] sm:$0xf]
        %v524 = vld [vmem:[%s211 + $0x44] sm:$0x1]
        %v525 = vld [vmem:[%s211 + $0x48] sm:$0xf]
        %v526 = vld [vmem:[%s211 + $0x4c] sm:$0xf]
        %v527 = vld [vmem:[%s211 + $0x50] sm:$0x1]
        %v528 = vld [vmem:[%s211 + $0x54] sm:$0xf]
        %v529 = vld [vmem:[%s211 + $0x58] sm:$0xf]
        %v530 = vld [vmem:[%s211 + $0x5c] sm:$0x1]
        %v531 = vld [vmem:[%s211 + $0x60] sm:$0xf]
        %v532 = vld [vmem:[%s211 + $0x64] sm:$0xf]
        %v533 = vld [vmem:[%s211 + $0x68] sm:$0x1]
        %v534 = vld [vmem:[%s211 + $0x6c] sm:$0xf]
        %v535 = vld [vmem:[%s211 + $0x70] sm:$0xf]
        %v536 = vld [vmem:[%s211 + $0x74] sm:$0x1]
        %v537 = vld [vmem:[%s211 + $0x78] sm:$0xf]
        %v538 = vld [vmem:[%s211 + $0x7c] sm:$0xf]
        %v539 = vld [vmem:[%s211 + $0x80] sm:$0x1]
        %v540 = vld [vmem:[%s211 + $0x84] sm:$0xf]
        %v541 = vld [vmem:[%s211 + $0x88] sm:$0xf]
        %v542 = vld [vmem:[%s211 + $0x8c] sm:$0x1]
        %v543 = vld [vmem:[%s211 + $0x90] sm:$0xf]
        %v544 = vld [vmem:[%s211 + $0x94] sm:$0xf]
        %v545 = vld [vmem:[%s211 + $0x98] sm:$0x1]
        %v546 = vld [vmem:[%s211 + $0x9c] sm:$0xf]
        %v547 = vld [vmem:[%s211 + $0xa0] sm:$0xf]
        %v548 = vld [vmem:[%s211 + $0xa4] sm:$0x1]
        %v549 = vld [vmem:[%s211 + $0xa8] sm:$0xf]
        %v550 = vld [vmem:[%s211 + $0xac] sm:$0xf]
        %v551 = vld [vmem:[%s211 + $0xb0] sm:$0x1]
        %v552 = vld [vmem:[%s211 + $0xb4] sm:$0xf]
        %v553 = vld [vmem:[%s211 + $0xb8] sm:$0xf]
        %v554 = vld [vmem:[%s211 + $0xbc] sm:$0x1]
        %vm555 = vsmask.f32 3328
        %vm556 = vsmask.f32 7440
        %vm557 = vmor %vm555, %vm556
        %v559 = vshrl.u32 %v507, 16
        %v561 = vrot.slane %v559, 4
        %v562 = vshll.u32 %v507, 16
        %v564 = vrot.slane %v562, 5
        %v565 = vor.u32 %v561, %v564
        %v566 = vrot.slane %v565, 4
        %v568 = vshll.u32 %v508, 16
        %v570 = vrot.slane %v568, 5
        %v571 = vsel %vm557, %v566, %v570
        %v572 = vshrl.u32 %v508, 16
        %v574 = vrot.slane %v572, 4
        %v575 = vor.u32 %v574, %v570
        %v576 = vrot.slane %v575, 4
        %v578 = vshll.u32 %v509, 16
        %v580 = vrot.slane %v578, 5
        %v581 = vsel %vm557, %v576, %v580
        %v583 = vshrl.u32 %v510, 16
        %v585 = vrot.slane %v583, 4
        %v586 = vshll.u32 %v510, 16
        %v588 = vrot.slane %v586, 5
        %v589 = vor.u32 %v585, %v588
        %v590 = vrot.slane %v589, 4
        %v592 = vshll.u32 %v511, 16
        %v594 = vrot.slane %v592, 5
        %v595 = vsel %vm557, %v590, %v594
        %v596 = vshrl.u32 %v511, 16
        %v598 = vrot.slane %v596, 4
        %v599 = vor.u32 %v598, %v594
        %v600 = vrot.slane %v599, 4
        %v602 = vshll.u32 %v512, 16
        %v604 = vrot.slane %v602, 5
        %v605 = vsel %vm557, %v600, %v604
        %v607 = vshrl.u32 %v513, 16
        %v609 = vrot.slane %v607, 4
        %v610 = vshll.u32 %v513, 16
        %v612 = vrot.slane %v610, 5
        %v613 = vor.u32 %v609, %v612
        %v614 = vrot.slane %v613, 4
        %v616 = vshll.u32 %v514, 16
        %v618 = vrot.slane %v616, 5
        %v619 = vsel %vm557, %v614, %v618
        %v620 = vshrl.u32 %v514, 16
        %v622 = vrot.slane %v620, 4
        %v623 = vor.u32 %v622, %v618
        %v624 = vrot.slane %v623, 4
        %v626 = vshll.u32 %v515, 16
        %v628 = vrot.slane %v626, 5
        %v629 = vsel %vm557, %v624, %v628
        %v631 = vshrl.u32 %v516, 16
        %v633 = vrot.slane %v631, 4
        %v634 = vshll.u32 %v516, 16
        %v636 = vrot.slane %v634, 5
        %v637 = vor.u32 %v633, %v636
        %v638 = vrot.slane %v637, 4
        %v640 = vshll.u32 %v517, 16
        %v642 = vrot.slane %v640, 5
        %v643 = vsel %vm557, %v638, %v642
        %v644 = vshrl.u32 %v517, 16
        %v646 = vrot.slane %v644, 4
        %v647 = vor.u32 %v646, %v642
        %v648 = vrot.slane %v647, 4
        %v650 = vshll.u32 %v518, 16
        %v652 = vrot.slane %v650, 5
        %v653 = vsel %vm557, %v648, %v652
        %v655 = vshrl.u32 %v519, 16
        %v657 = vrot.slane %v655, 4
        %v658 = vshll.u32 %v519, 16
        %v660 = vrot.slane %v658, 5
        %v661 = vor.u32 %v657, %v660
        %v662 = vrot.slane %v661, 4
        %v664 = vshll.u32 %v520, 16
        %v666 = vrot.slane %v664, 5
        %v667 = vsel %vm557, %v662, %v666
        %v668 = vshrl.u32 %v520, 16
        %v670 = vrot.slane %v668, 4
        %v671 = vor.u32 %v670, %v666
        %v672 = vrot.slane %v671, 4
        %v674 = vshll.u32 %v521, 16
        %v676 = vrot.slane %v674, 5
        %v677 = vsel %vm557, %v672, %v676
        %v679 = vshrl.u32 %v522, 16
        %v681 = vrot.slane %v679, 4
        %v682 = vshll.u32 %v522, 16
        %v684 = vrot.slane %v682, 5
        %v685 = vor.u32 %v681, %v684
        %v686 = vrot.slane %v685, 4
        %v688 = vshll.u32 %v523, 16
        %v690 = vrot.slane %v688, 5
        %v691 = vsel %vm557, %v686, %v690
        %v692 = vshrl.u32 %v523, 16
        %v694 = vrot.slane %v692, 4
        %v695 = vor.u32 %v694, %v690
        %v696 = vrot.slane %v695, 4
        %v698 = vshll.u32 %v524, 16
        %v700 = vrot.slane %v698, 5
        %v701 = vsel %vm557, %v696, %v700
        %v703 = vshrl.u32 %v525, 16
        %v705 = vrot.slane %v703, 4
        %v706 = vshll.u32 %v525, 16
        %v708 = vrot.slane %v706, 5
        %v709 = vor.u32 %v705, %v708
        %v710 = vrot.slane %v709, 4
        %v712 = vshll.u32 %v526, 16
        %v714 = vrot.slane %v712, 5
        %v715 = vsel %vm557, %v710, %v714
        %v716 = vshrl.u32 %v526, 16
        %v718 = vrot.slane %v716, 4
        %v719 = vor.u32 %v718, %v714
        %v720 = vrot.slane %v719, 4
        %v722 = vshll.u32 %v527, 16
        %v724 = vrot.slane %v722, 5
        %v725 = vsel %vm557, %v720, %v724
        %v727 = vshrl.u32 %v528, 16
        %v729 = vrot.slane %v727, 4
        %v730 = vshll.u32 %v528, 16
        %v732 = vrot.slane %v730, 5
        %v733 = vor.u32 %v729, %v732
        %v734 = vrot.slane %v733, 4
        %v736 = vshll.u32 %v529, 16
        %v738 = vrot.slane %v736, 5
        %v739 = vsel %vm557, %v734, %v738
        %v740 = vshrl.u32 %v529, 16
        %v742 = vrot.slane %v740, 4
        %v743 = vor.u32 %v742, %v738
        %v744 = vrot.slane %v743, 4
        %v746 = vshll.u32 %v530, 16
        %v748 = vrot.slane %v746, 5
        %v749 = vsel %vm557, %v744, %v748
        %v751 = vshrl.u32 %v531, 16
        %v753 = vrot.slane %v751, 4
        %v754 = vshll.u32 %v531, 16
        %v756 = vrot.slane %v754, 5
        %v757 = vor.u32 %v753, %v756
        %v758 = vrot.slane %v757, 4
        %v760 = vshll.u32 %v532, 16
        %v762 = vrot.slane %v760, 5
        %v763 = vsel %vm557, %v758, %v762
        %v764 = vshrl.u32 %v532, 16
        %v766 = vrot.slane %v764, 4
        %v767 = vor.u32 %v766, %v762
        %v768 = vrot.slane %v767, 4
        %v770 = vshll.u32 %v533, 16
        %v772 = vrot.slane %v770, 5
        %v773 = vsel %vm557, %v768, %v772
        %v775 = vshrl.u32 %v534, 16
        %v777 = vrot.slane %v775, 4
        %v778 = vshll.u32 %v534, 16
        %v780 = vrot.slane %v778, 5
        %v781 = vor.u32 %v777, %v780
        %v782 = vrot.slane %v781, 4
        %v784 = vshll.u32 %v535, 16
        %v786 = vrot.slane %v784, 5
        %v787 = vsel %vm557, %v782, %v786
        %v788 = vshrl.u32 %v535, 16
        %v790 = vrot.slane %v788, 4
        %v791 = vor.u32 %v790, %v786
        %v792 = vrot.slane %v791, 4
        %v794 = vshll.u32 %v536, 16
        %v796 = vrot.slane %v794, 5
        %v797 = vsel %vm557, %v792, %v796
        %v799 = vshrl.u32 %v537, 16
        %v801 = vrot.slane %v799, 4
        %v802 = vshll.u32 %v537, 16
        %v804 = vrot.slane %v802, 5
        %v805 = vor.u32 %v801, %v804
        %v806 = vrot.slane %v805, 4
        %v808 = vshll.u32 %v538, 16
        %v810 = vrot.slane %v808, 5
        %v811 = vsel %vm557, %v806, %v810
        %v812 = vshrl.u32 %v538, 16
        %v814 = vrot.slane %v812, 4
        %v815 = vor.u32 %v814, %v810
        %v816 = vrot.slane %v815, 4
        %v818 = vshll.u32 %v539, 16
        %v820 = vrot.slane %v818, 5
        %v821 = vsel %vm557, %v816, %v820
        %v823 = vshrl.u32 %v540, 16
        %v825 = vrot.slane %v823, 4
        %v826 = vshll.u32 %v540, 16
        %v828 = vrot.slane %v826, 5
        %v829 = vor.u32 %v825, %v828
        %v830 = vrot.slane %v829, 4
        %v832 = vshll.u32 %v541, 16
        %v834 = vrot.slane %v832, 5
        %v835 = vsel %vm557, %v830, %v834
        %v836 = vshrl.u32 %v541, 16
        %v838 = vrot.slane %v836, 4
        %v839 = vor.u32 %v838, %v834
        %v840 = vrot.slane %v839, 4
        %v842 = vshll.u32 %v542, 16
        %v844 = vrot.slane %v842, 5
        %v845 = vsel %vm557, %v840, %v844
        %v847 = vshrl.u32 %v543, 16
        %v849 = vrot.slane %v847, 4
        %v850 = vshll.u32 %v543, 16
        %v852 = vrot.slane %v850, 5
        %v853 = vor.u32 %v849, %v852
        %v854 = vrot.slane %v853, 4
        %v856 = vshll.u32 %v544, 16
        %v858 = vrot.slane %v856, 5
        %v859 = vsel %vm557, %v854, %v858
        %v860 = vshrl.u32 %v544, 16
        %v862 = vrot.slane %v860, 4
        %v863 = vor.u32 %v862, %v858
        %v864 = vrot.slane %v863, 4
        %v866 = vshll.u32 %v545, 16
        %v868 = vrot.slane %v866, 5
        %v869 = vsel %vm557, %v864, %v868
        %v871 = vshrl.u32 %v546, 16
        %v873 = vrot.slane %v871, 4
        %v874 = vshll.u32 %v546, 16
        %v876 = vrot.slane %v874, 5
        %v877 = vor.u32 %v873, %v876
        %v878 = vrot.slane %v877, 4
        %v880 = vshll.u32 %v547, 16
        %v882 = vrot.slane %v880, 5
        %v883 = vsel %vm557, %v878, %v882
        %v884 = vshrl.u32 %v547, 16
        %v886 = vrot.slane %v884, 4
        %v887 = vor.u32 %v886, %v882
        %v888 = vrot.slane %v887, 4
        %v890 = vshll.u32 %v548, 16
        %v892 = vrot.slane %v890, 5
        %v893 = vsel %vm557, %v888, %v892
        %v895 = vshrl.u32 %v549, 16
        %v897 = vrot.slane %v895, 4
        %v898 = vshll.u32 %v549, 16
        %v900 = vrot.slane %v898, 5
        %v901 = vor.u32 %v897, %v900
        %v902 = vrot.slane %v901, 4
        %v904 = vshll.u32 %v550, 16
        %v906 = vrot.slane %v904, 5
        %v907 = vsel %vm557, %v902, %v906
        %v908 = vshrl.u32 %v550, 16
        %v910 = vrot.slane %v908, 4
        %v911 = vor.u32 %v910, %v906
        %v912 = vrot.slane %v911, 4
        %v914 = vshll.u32 %v551, 16
        %v916 = vrot.slane %v914, 5
        %v917 = vsel %vm557, %v912, %v916
        %v919 = vshrl.u32 %v552, 16
        %v921 = vrot.slane %v919, 4
        %v922 = vshll.u32 %v552, 16
        %v924 = vrot.slane %v922, 5
        %v925 = vor.u32 %v921, %v924
        %v926 = vrot.slane %v925, 4
        %v928 = vshll.u32 %v553, 16
        %v930 = vrot.slane %v928, 5
        %v931 = vsel %vm557, %v926, %v930
        %v932 = vshrl.u32 %v553, 16
        %v934 = vrot.slane %v932, 4
        %v935 = vor.u32 %v934, %v930
        %v936 = vrot.slane %v935, 4
        %v938 = vshll.u32 %v554, 16
        %v940 = vrot.slane %v938, 5
        %v941 = vsel %vm557, %v936, %v940
        %s942 = scalar_lea.vmem %s1, 2
        %v943 = vld [vmem:[%s942] sm:$0x3]
        %v944 = vunpack.c.l.b16 %v571
        %v945 = vunpack.c.l.b16 %v581
        %v946 = vunpack.c.l.b16 %v595
        %v947 = vunpack.c.l.b16 %v605
        %v948 = vunpack.c.l.b16 %v619
        %v949 = vunpack.c.l.b16 %v629
        %v950 = vunpack.c.l.b16 %v643
        %v951 = vunpack.c.l.b16 %v653
        %v952 = vunpack.c.l.b16 %v667
        %v953 = vunpack.c.l.b16 %v677
        %v954 = vunpack.c.l.b16 %v691
        %v955 = vunpack.c.l.b16 %v701
        %v956 = vunpack.c.l.b16 %v715
        %v957 = vunpack.c.l.b16 %v725
        %v958 = vunpack.c.l.b16 %v739
        %v959 = vunpack.c.l.b16 %v749
        %v960 = vunpack.c.l.b16 %v763
        %v961 = vunpack.c.l.b16 %v773
        %v962 = vunpack.c.l.b16 %v787
        %v963 = vunpack.c.l.b16 %v797
        %v964 = vunpack.c.l.b16 %v811
        %v965 = vunpack.c.l.b16 %v821
        %v966 = vunpack.c.l.b16 %v835
        %v967 = vunpack.c.l.b16 %v845
        %v968 = vunpack.c.l.b16 %v859
        %v969 = vunpack.c.l.b16 %v869
        %v970 = vunpack.c.l.b16 %v883
        %v971 = vunpack.c.l.b16 %v893
        %v972 = vunpack.c.l.b16 %v907
        %v973 = vunpack.c.l.b16 %v917
        %v974 = vunpack.c.l.b16 %v931
        %v975 = vunpack.c.l.b16 %v941
        %v976 = vpack.c.b16 %v945, %v944
        %v977 = vpack.c.b16 %v947, %v946
        %v978 = vpack.c.b16 %v949, %v948
        %v979 = vpack.c.b16 %v951, %v950
        %v980 = vpack.c.b16 %v953, %v952
        %v981 = vpack.c.b16 %v955, %v954
        %v982 = vpack.c.b16 %v957, %v956
        %v983 = vpack.c.b16 %v959, %v958
        %v984 = vpack.c.b16 %v961, %v960
        %v985 = vpack.c.b16 %v963, %v962
        %v986 = vpack.c.b16 %v965, %v964
        %v987 = vpack.c.b16 %v967, %v966
        %v988 = vpack.c.b16 %v969, %v968
        %v989 = vpack.c.b16 %v971, %v970
        %v990 = vpack.c.b16 %v973, %v972
        %v991 = vpack.c.b16 %v975, %v974
        %v993 = vsel %vm332, %v976, 0
        %v996 = vsel %vm332, %v977, 0
        %v999 = vsel %vm332, %v978, 0
        %v1002 = vsel %vm332, %v979, 0
        %v1005 = vsel %vm332, %v980, 0
        %v1008 = vsel %vm332, %v981, 0
        %v1011 = vsel %vm332, %v982, 0
        %v1014 = vsel %vm332, %v983, 0
        %v1017 = vsel %vm332, %v984, 0
        %v1020 = vsel %vm332, %v985, 0
        %v1023 = vsel %vm332, %v986, 0
        %v1026 = vsel %vm332, %v987, 0
        %v1029 = vsel %vm332, %v988, 0
        %v1032 = vsel %vm332, %v989, 0
        %v1035 = vsel %vm332, %v990, 0
        %v1038 = vsel %vm332, %v991, 0
        %v1041 = vsel %vm381, %v943, 0
        %1043 = vmatpush.bf16.msra.mxu0 0
        %1044 = vmatpush.bf16.msra.mxu0 0
        %1045 = vmatpush.bf16.msra.mxu0 0
        %1046 = vmatpush.bf16.msra.mxu0 0
        %1047 = vmatpush.bf16.msra.mxu0 0
        %1048 = vmatpush.bf16.msra.mxu0 0
        %1049 = vmatpush.bf16.msra.mxu0 0
        %1050 = vmatpush.bf16.msra.mxu0 %v1041
        %1051 = vmatmul.bf16.gmra.mxu0 %v993
        %v1052 = vpop.f32.mrf.mxu0
        %v1053 = vadd.f32 0.0, %v1052
        %v1054 = vpop.f32.mrf.mxu0
        %v1055 = vadd.f32 0.0, %v1054
        %1056 = vmatmul.bf16.gmra.mxu0 %v996
        %v1057 = vpop.f32.mrf.mxu0
        %v1058 = vadd.f32 0.0, %v1057
        %v1059 = vpop.f32.mrf.mxu0
        %v1060 = vadd.f32 0.0, %v1059
        %1061 = vmatmul.bf16.gmra.mxu0 %v999
        %v1062 = vpop.f32.mrf.mxu0
        %v1063 = vadd.f32 0.0, %v1062
        %v1064 = vpop.f32.mrf.mxu0
        %v1065 = vadd.f32 0.0, %v1064
        %1066 = vmatmul.bf16.gmra.mxu0 %v1002
        %v1067 = vpop.f32.mrf.mxu0
        %v1068 = vadd.f32 0.0, %v1067
        %v1069 = vpop.f32.mrf.mxu0
        %v1070 = vadd.f32 0.0, %v1069
        %1071 = vmatmul.bf16.gmra.mxu0 %v1005
        %v1072 = vpop.f32.mrf.mxu0
        %v1073 = vadd.f32 0.0, %v1072
        %v1074 = vpop.f32.mrf.mxu0
        %v1075 = vadd.f32 0.0, %v1074
        %1076 = vmatmul.bf16.gmra.mxu0 %v1008
        %v1077 = vpop.f32.mrf.mxu0
        %v1078 = vadd.f32 0.0, %v1077
        %v1079 = vpop.f32.mrf.mxu0
        %v1080 = vadd.f32 0.0, %v1079
        %1081 = vmatmul.bf16.gmra.mxu0 %v1011
        %v1082 = vpop.f32.mrf.mxu0
        %v1083 = vadd.f32 0.0, %v1082
        %v1084 = vpop.f32.mrf.mxu0
        %v1085 = vadd.f32 0.0, %v1084
        %1086 = vmatmul.bf16.gmra.mxu0 %v1014
        %v1087 = vpop.f32.mrf.mxu0
        %v1088 = vadd.f32 0.0, %v1087
        %v1089 = vpop.f32.mrf.mxu0
        %v1090 = vadd.f32 0.0, %v1089
        %1091 = vmatmul.bf16.gmra.mxu0 %v1017
        %v1092 = vpop.f32.mrf.mxu0
        %v1093 = vadd.f32 0.0, %v1092
        %v1094 = vpop.f32.mrf.mxu0
        %v1095 = vadd.f32 0.0, %v1094
        %1096 = vmatmul.bf16.gmra.mxu0 %v1020
        %v1097 = vpop.f32.mrf.mxu0
        %v1098 = vadd.f32 0.0, %v1097
        %v1099 = vpop.f32.mrf.mxu0
        %v1100 = vadd.f32 0.0, %v1099
        %1101 = vmatmul.bf16.gmra.mxu0 %v1023
        %v1102 = vpop.f32.mrf.mxu0
        %v1103 = vadd.f32 0.0, %v1102
        %v1104 = vpop.f32.mrf.mxu0
        %v1105 = vadd.f32 0.0, %v1104
        %1106 = vmatmul.bf16.gmra.mxu0 %v1026
        %v1107 = vpop.f32.mrf.mxu0
        %v1108 = vadd.f32 0.0, %v1107
        %v1109 = vpop.f32.mrf.mxu0
        %v1110 = vadd.f32 0.0, %v1109
        %1111 = vmatmul.bf16.gmra.mxu0 %v1029
        %v1112 = vpop.f32.mrf.mxu0
        %v1113 = vadd.f32 0.0, %v1112
        %v1114 = vpop.f32.mrf.mxu0
        %v1115 = vadd.f32 0.0, %v1114
        %1116 = vmatmul.bf16.gmra.mxu0 %v1032
        %v1117 = vpop.f32.mrf.mxu0
        %v1118 = vadd.f32 0.0, %v1117
        %v1119 = vpop.f32.mrf.mxu0
        %v1120 = vadd.f32 0.0, %v1119
        %1121 = vmatmul.bf16.gmra.mxu0 %v1035
        %v1122 = vpop.f32.mrf.mxu0
        %v1123 = vadd.f32 0.0, %v1122
        %v1124 = vpop.f32.mrf.mxu0
        %v1125 = vadd.f32 0.0, %v1124
        %1126 = vmatmul.bf16.gmra.mxu0 %v1038
        %v1127 = vpop.f32.mrf.mxu0
        %v1128 = vadd.f32 0.0, %v1127
        %v1129 = vpop.f32.mrf.mxu0
        %v1130 = vadd.f32 0.0, %v1129
        %1131 = vdwg.mxu0
        %v1132 = vld [vmem:[#allocation2] sm:$0xff]
        %v1133 = vld [vmem:[#allocation2 + $0x8] sm:$0xff]
        %v1134 = vld [vmem:[#allocation2 + $0x10] sm:$0xff]
        %v1135 = vld [vmem:[#allocation2 + $0x18] sm:$0xff]
        %v1136 = vld [vmem:[#allocation2 + $0x20] sm:$0xff]
        %v1137 = vld [vmem:[#allocation2 + $0x28] sm:$0xff]
        %v1138 = vld [vmem:[#allocation2 + $0x30] sm:$0xff]
        %v1139 = vld [vmem:[#allocation2 + $0x38] sm:$0xff]
        %v1140 = vld [vmem:[#allocation2 + $0x40] sm:$0xff]
        %v1141 = vld [vmem:[#allocation2 + $0x48] sm:$0xff]
        %v1142 = vld [vmem:[#allocation2 + $0x50] sm:$0xff]
        %v1143 = vld [vmem:[#allocation2 + $0x58] sm:$0xff]
        %v1144 = vld [vmem:[#allocation2 + $0x60] sm:$0xff]
        %v1145 = vld [vmem:[#allocation2 + $0x68] sm:$0xff]
        %v1146 = vld [vmem:[#allocation2 + $0x70] sm:$0xff]
        %v1147 = vld [vmem:[#allocation2 + $0x78] sm:$0xff]
        %v1148 = vld [vmem:[#allocation2 + $0x80] sm:$0xff]
        %v1149 = vld [vmem:[#allocation2 + $0x88] sm:$0xff]
        %v1150 = vld [vmem:[#allocation2 + $0x90] sm:$0xff]
        %v1151 = vld [vmem:[#allocation2 + $0x98] sm:$0xff]
        %v1152 = vld [vmem:[#allocation2 + $0xa0] sm:$0xff]
        %v1153 = vld [vmem:[#allocation2 + $0xa8] sm:$0xff]
        %v1154 = vld [vmem:[#allocation2 + $0xb0] sm:$0xff]
        %v1155 = vld [vmem:[#allocation2 + $0xb8] sm:$0xff]
        %v1156 = vld [vmem:[#allocation2 + $0xc0] sm:$0xff]
        %v1157 = vld [vmem:[#allocation2 + $0xc8] sm:$0xff]
        %v1158 = vld [vmem:[#allocation2 + $0xd0] sm:$0xff]
        %v1159 = vld [vmem:[#allocation2 + $0xd8] sm:$0xff]
        %v1160 = vld [vmem:[#allocation2 + $0xe0] sm:$0xff]
        %v1161 = vld [vmem:[#allocation2 + $0xe8] sm:$0xff]
        %v1162 = vld [vmem:[#allocation2 + $0xf0] sm:$0xff]
        %v1163 = vld [vmem:[#allocation2 + $0xf8] sm:$0xff]
        %v1164 = vadd.f32 %v1132, %v1053
        %v1165 = vadd.f32 %v1133, %v1055
        %v1166 = vadd.f32 %v1134, %v1058
        %v1167 = vadd.f32 %v1135, %v1060
        %v1168 = vadd.f32 %v1136, %v1063
        %v1169 = vadd.f32 %v1137, %v1065
        %v1170 = vadd.f32 %v1138, %v1068
        %v1171 = vadd.f32 %v1139, %v1070
        %v1172 = vadd.f32 %v1140, %v1073
        %v1173 = vadd.f32 %v1141, %v1075
        %v1174 = vadd.f32 %v1142, %v1078
        %v1175 = vadd.f32 %v1143, %v1080
        %v1176 = vadd.f32 %v1144, %v1083
        %v1177 = vadd.f32 %v1145, %v1085
        %v1178 = vadd.f32 %v1146, %v1088
        %v1179 = vadd.f32 %v1147, %v1090
        %v1180 = vadd.f32 %v1148, %v1093
        %v1181 = vadd.f32 %v1149, %v1095
        %v1182 = vadd.f32 %v1150, %v1098
        %v1183 = vadd.f32 %v1151, %v1100
        %v1184 = vadd.f32 %v1152, %v1103
        %v1185 = vadd.f32 %v1153, %v1105
        %v1186 = vadd.f32 %v1154, %v1108
        %v1187 = vadd.f32 %v1155, %v1110
        %v1188 = vadd.f32 %v1156, %v1113
        %v1189 = vadd.f32 %v1157, %v1115
        %v1190 = vadd.f32 %v1158, %v1118
        %v1191 = vadd.f32 %v1159, %v1120
        %v1192 = vadd.f32 %v1160, %v1123
        %v1193 = vadd.f32 %v1161, %v1125
        %v1194 = vadd.f32 %v1162, %v1128
        %v1195 = vadd.f32 %v1163, %v1130
        %1196 = vst.msk [vmem:[#allocation2] sm:$0xff] %vm474, %v1164
        %1197 = vst.msk [vmem:[#allocation2 + $0x8] sm:$0xff] %vm474, %v1165
        %1198 = vst.msk [vmem:[#allocation2 + $0x10] sm:$0xff] %vm474, %v1166
        %1199 = vst.msk [vmem:[#allocation2 + $0x18] sm:$0xff] %vm474, %v1167
        %1200 = vst.msk [vmem:[#allocation2 + $0x20] sm:$0xff] %vm474, %v1168
        %1201 = vst.msk [vmem:[#allocation2 + $0x28] sm:$0xff] %vm474, %v1169
        %1202 = vst.msk [vmem:[#allocation2 + $0x30] sm:$0xff] %vm474, %v1170
        %1203 = vst.msk [vmem:[#allocation2 + $0x38] sm:$0xff] %vm474, %v1171
        %1204 = vst.msk [vmem:[#allocation2 + $0x40] sm:$0xff] %vm474, %v1172
        %1205 = vst.msk [vmem:[#allocation2 + $0x48] sm:$0xff] %vm474, %v1173
        %1206 = vst.msk [vmem:[#allocation2 + $0x50] sm:$0xff] %vm474, %v1174
        %1207 = vst.msk [vmem:[#allocation2 + $0x58] sm:$0xff] %vm474, %v1175
        %1208 = vst.msk [vmem:[#allocation2 + $0x60] sm:$0xff] %vm474, %v1176
        %1209 = vst.msk [vmem:[#allocation2 + $0x68] sm:$0xff] %vm474, %v1177
        %1210 = vst.msk [vmem:[#allocation2 + $0x70] sm:$0xff] %vm474, %v1178
        %1211 = vst.msk [vmem:[#allocation2 + $0x78] sm:$0xff] %vm474, %v1179
        %1212 = vst.msk [vmem:[#allocation2 + $0x80] sm:$0xff] %vm474, %v1180
        %1213 = vst.msk [vmem:[#allocation2 + $0x88] sm:$0xff] %vm474, %v1181
        %1214 = vst.msk [vmem:[#allocation2 + $0x90] sm:$0xff] %vm474, %v1182
        %1215 = vst.msk [vmem:[#allocation2 + $0x98] sm:$0xff] %vm474, %v1183
        %1216 = vst.msk [vmem:[#allocation2 + $0xa0] sm:$0xff] %vm474, %v1184
        %1217 = vst.msk [vmem:[#allocation2 + $0xa8] sm:$0xff] %vm474, %v1185
        %1218 = vst.msk [vmem:[#allocation2 + $0xb0] sm:$0xff] %vm474, %v1186
        %1219 = vst.msk [vmem:[#allocation2 + $0xb8] sm:$0xff] %vm474, %v1187
        %1220 = vst.msk [vmem:[#allocation2 + $0xc0] sm:$0xff] %vm474, %v1188
        %1221 = vst.msk [vmem:[#allocation2 + $0xc8] sm:$0xff] %vm474, %v1189
        %1222 = vst.msk [vmem:[#allocation2 + $0xd0] sm:$0xff] %vm474, %v1190
        %1223 = vst.msk [vmem:[#allocation2 + $0xd8] sm:$0xff] %vm474, %v1191
        %1224 = vst.msk [vmem:[#allocation2 + $0xe0] sm:$0xff] %vm474, %v1192
        %1225 = vst.msk [vmem:[#allocation2 + $0xe8] sm:$0xff] %vm474, %v1193
        %1226 = vst.msk [vmem:[#allocation2 + $0xf0] sm:$0xff] %vm474, %v1194
        %1227 = vst.msk [vmem:[#allocation2 + $0xf8] sm:$0xff] %vm474, %v1195
        %v1228 = vld [vmem:[%s211] sm:$0xe]
        %v1229 = vld [vmem:[%s211 + $0x4] sm:$0xf]
        %v1230 = vld [vmem:[%s211 + $0x8] sm:$0x1]
        %v1231 = vld [vmem:[%s211 + $0xc] sm:$0xe]
        %v1232 = vld [vmem:[%s211 + $0x10] sm:$0xf]
        %v1233 = vld [vmem:[%s211 + $0x14] sm:$0x1]
        %v1234 = vld [vmem:[%s211 + $0x18] sm:$0xe]
        %v1235 = vld [vmem:[%s211 + $0x1c] sm:$0xf]
        %v1236 = vld [vmem:[%s211 + $0x20] sm:$0x1]
        %v1237 = vld [vmem:[%s211 + $0x24] sm:$0xe]
        %v1238 = vld [vmem:[%s211 + $0x28] sm:$0xf]
        %v1239 = vld [vmem:[%s211 + $0x2c] sm:$0x1]
        %v1240 = vld [vmem:[%s211 + $0x30] sm:$0xe]
        %v1241 = vld [vmem:[%s211 + $0x34] sm:$0xf]
        %v1242 = vld [vmem:[%s211 + $0x38] sm:$0x1]
        %v1243 = vld [vmem:[%s211 + $0x3c] sm:$0xe]
        %v1244 = vld [vmem:[%s211 + $0x40] sm:$0xf]
        %v1245 = vld [vmem:[%s211 + $0x44] sm:$0x1]
        %v1246 = vld [vmem:[%s211 + $0x48] sm:$0xe]
        %v1247 = vld [vmem:[%s211 + $0x4c] sm:$0xf]
        %v1248 = vld [vmem:[%s211 + $0x50] sm:$0x1]
        %v1249 = vld [vmem:[%s211 + $0x54] sm:$0xe]
        %v1250 = vld [vmem:[%s211 + $0x58] sm:$0xf]
        %v1251 = vld [vmem:[%s211 + $0x5c] sm:$0x1]
        %v1252 = vld [vmem:[%s211 + $0x60] sm:$0xe]
        %v1253 = vld [vmem:[%s211 + $0x64] sm:$0xf]
        %v1254 = vld [vmem:[%s211 + $0x68] sm:$0x1]
        %v1255 = vld [vmem:[%s211 + $0x6c] sm:$0xe]
        %v1256 = vld [vmem:[%s211 + $0x70] sm:$0xf]
        %v1257 = vld [vmem:[%s211 + $0x74] sm:$0x1]
        %v1258 = vld [vmem:[%s211 + $0x78] sm:$0xe]
        %v1259 = vld [vmem:[%s211 + $0x7c] sm:$0xf]
        %v1260 = vld [vmem:[%s211 + $0x80] sm:$0x1]
        %v1261 = vld [vmem:[%s211 + $0x84] sm:$0xe]
        %v1262 = vld [vmem:[%s211 + $0x88] sm:$0xf]
        %v1263 = vld [vmem:[%s211 + $0x8c] sm:$0x1]
        %v1264 = vld [vmem:[%s211 + $0x90] sm:$0xe]
        %v1265 = vld [vmem:[%s211 + $0x94] sm:$0xf]
        %v1266 = vld [vmem:[%s211 + $0x98] sm:$0x1]
        %v1267 = vld [vmem:[%s211 + $0x9c] sm:$0xe]
        %v1268 = vld [vmem:[%s211 + $0xa0] sm:$0xf]
        %v1269 = vld [vmem:[%s211 + $0xa4] sm:$0x1]
        %v1270 = vld [vmem:[%s211 + $0xa8] sm:$0xe]
        %v1271 = vld [vmem:[%s211 + $0xac] sm:$0xf]
        %v1272 = vld [vmem:[%s211 + $0xb0] sm:$0x1]
        %v1273 = vld [vmem:[%s211 + $0xb4] sm:$0xe]
        %v1274 = vld [vmem:[%s211 + $0xb8] sm:$0xf]
        %v1275 = vld [vmem:[%s211 + $0xbc] sm:$0x1]
        %vm1324 = vcmask 1042432
        %vm1325 = vcmask 1046532
        %vm1326 = vmor %vm1324, %vm1325
        %v1327 = vrot.slane %v1228, 5
        %v1328 = vrot.slane %v1327, 4
        %v1329 = vrot.slane %v1229, 5
        %v1330 = vsel %vm1326, %v1328, %v1329
        %v1331 = vrot.slane %v1329, 4
        %v1332 = vrot.slane %v1230, 5
        %v1333 = vsel %vm1326, %v1331, %v1332
        %v1334 = vrot.slane %v1231, 5
        %v1335 = vrot.slane %v1334, 4
        %v1336 = vrot.slane %v1232, 5
        %v1337 = vsel %vm1326, %v1335, %v1336
        %v1338 = vrot.slane %v1336, 4
        %v1339 = vrot.slane %v1233, 5
        %v1340 = vsel %vm1326, %v1338, %v1339
        %v1341 = vrot.slane %v1234, 5
        %v1342 = vrot.slane %v1341, 4
        %v1343 = vrot.slane %v1235, 5
        %v1344 = vsel %vm1326, %v1342, %v1343
        %v1345 = vrot.slane %v1343, 4
        %v1346 = vrot.slane %v1236, 5
        %v1347 = vsel %vm1326, %v1345, %v1346
        %v1348 = vrot.slane %v1237, 5
        %v1349 = vrot.slane %v1348, 4
        %v1350 = vrot.slane %v1238, 5
        %v1351 = vsel %vm1326, %v1349, %v1350
        %v1352 = vrot.slane %v1350, 4
        %v1353 = vrot.slane %v1239, 5
        %v1354 = vsel %vm1326, %v1352, %v1353
        %v1355 = vrot.slane %v1240, 5
        %v1356 = vrot.slane %v1355, 4
        %v1357 = vrot.slane %v1241, 5
        %v1358 = vsel %vm1326, %v1356, %v1357
        %v1359 = vrot.slane %v1357, 4
        %v1360 = vrot.slane %v1242, 5
        %v1361 = vsel %vm1326, %v1359, %v1360
        %v1362 = vrot.slane %v1243, 5
        %v1363 = vrot.slane %v1362, 4
        %v1364 = vrot.slane %v1244, 5
        %v1365 = vsel %vm1326, %v1363, %v1364
        %v1366 = vrot.slane %v1364, 4
        %v1367 = vrot.slane %v1245, 5
        %v1368 = vsel %vm1326, %v1366, %v1367
        %v1369 = vrot.slane %v1246, 5
        %v1370 = vrot.slane %v1369, 4
        %v1371 = vrot.slane %v1247, 5
        %v1372 = vsel %vm1326, %v1370, %v1371
        %v1373 = vrot.slane %v1371, 4
        %v1374 = vrot.slane %v1248, 5
        %v1375 = vsel %vm1326, %v1373, %v1374
        %v1376 = vrot.slane %v1249, 5
        %v1377 = vrot.slane %v1376, 4
        %v1378 = vrot.slane %v1250, 5
        %v1379 = vsel %vm1326, %v1377, %v1378
        %v1380 = vrot.slane %v1378, 4
        %v1381 = vrot.slane %v1251, 5
        %v1382 = vsel %vm1326, %v1380, %v1381
        %v1383 = vrot.slane %v1252, 5
        %v1384 = vrot.slane %v1383, 4
        %v1385 = vrot.slane %v1253, 5
        %v1386 = vsel %vm1326, %v1384, %v1385
        %v1387 = vrot.slane %v1385, 4
        %v1388 = vrot.slane %v1254, 5
        %v1389 = vsel %vm1326, %v1387, %v1388
        %v1390 = vrot.slane %v1255, 5
        %v1391 = vrot.slane %v1390, 4
        %v1392 = vrot.slane %v1256, 5
        %v1393 = vsel %vm1326, %v1391, %v1392
        %v1394 = vrot.slane %v1392, 4
        %v1395 = vrot.slane %v1257, 5
        %v1396 = vsel %vm1326, %v1394, %v1395
        %v1397 = vrot.slane %v1258, 5
        %v1398 = vrot.slane %v1397, 4
        %v1399 = vrot.slane %v1259, 5
        %v1400 = vsel %vm1326, %v1398, %v1399
        %v1401 = vrot.slane %v1399, 4
        %v1402 = vrot.slane %v1260, 5
        %v1403 = vsel %vm1326, %v1401, %v1402
        %v1404 = vrot.slane %v1261, 5
        %v1405 = vrot.slane %v1404, 4
        %v1406 = vrot.slane %v1262, 5
        %v1407 = vsel %vm1326, %v1405, %v1406
        %v1408 = vrot.slane %v1406, 4
        %v1409 = vrot.slane %v1263, 5
        %v1410 = vsel %vm1326, %v1408, %v1409
        %v1411 = vrot.slane %v1264, 5
        %v1412 = vrot.slane %v1411, 4
        %v1413 = vrot.slane %v1265, 5
        %v1414 = vsel %vm1326, %v1412, %v1413
        %v1415 = vrot.slane %v1413, 4
        %v1416 = vrot.slane %v1266, 5
        %v1417 = vsel %vm1326, %v1415, %v1416
        %v1418 = vrot.slane %v1267, 5
        %v1419 = vrot.slane %v1418, 4
        %v1420 = vrot.slane %v1268, 5
        %v1421 = vsel %vm1326, %v1419, %v1420
        %v1422 = vrot.slane %v1420, 4
        %v1423 = vrot.slane %v1269, 5
        %v1424 = vsel %vm1326, %v1422, %v1423
        %v1425 = vrot.slane %v1270, 5
        %v1426 = vrot.slane %v1425, 4
        %v1427 = vrot.slane %v1271, 5
        %v1428 = vsel %vm1326, %v1426, %v1427
        %v1429 = vrot.slane %v1427, 4
        %v1430 = vrot.slane %v1272, 5
        %v1431 = vsel %vm1326, %v1429, %v1430
        %v1432 = vrot.slane %v1273, 5
        %v1433 = vrot.slane %v1432, 4
        %v1434 = vrot.slane %v1274, 5
        %v1435 = vsel %vm1326, %v1433, %v1434
        %v1436 = vrot.slane %v1434, 4
        %v1437 = vrot.slane %v1275, 5
        %v1438 = vsel %vm1326, %v1436, %v1437
        %s1439 = scalar_lea.vmem %s1, 4
        %v1440 = vld [vmem:[%s1439] sm:$0x3]
        %v1441 = vunpack.c.l.b16 %v1330
        %v1442 = vunpack.c.l.b16 %v1333
        %v1443 = vunpack.c.l.b16 %v1337
        %v1444 = vunpack.c.l.b16 %v1340
        %v1445 = vunpack.c.l.b16 %v1344
        %v1446 = vunpack.c.l.b16 %v1347
        %v1447 = vunpack.c.l.b16 %v1351
        %v1448 = vunpack.c.l.b16 %v1354
        %v1449 = vunpack.c.l.b16 %v1358
        %v1450 = vunpack.c.l.b16 %v1361
        %v1451 = vunpack.c.l.b16 %v1365
        %v1452 = vunpack.c.l.b16 %v1368
        %v1453 = vunpack.c.l.b16 %v1372
        %v1454 = vunpack.c.l.b16 %v1375
        %v1455 = vunpack.c.l.b16 %v1379
        %v1456 = vunpack.c.l.b16 %v1382
        %v1457 = vunpack.c.l.b16 %v1386
        %v1458 = vunpack.c.l.b16 %v1389
        %v1459 = vunpack.c.l.b16 %v1393
        %v1460 = vunpack.c.l.b16 %v1396
        %v1461 = vunpack.c.l.b16 %v1400
        %v1462 = vunpack.c.l.b16 %v1403
        %v1463 = vunpack.c.l.b16 %v1407
        %v1464 = vunpack.c.l.b16 %v1410
        %v1465 = vunpack.c.l.b16 %v1414
        %v1466 = vunpack.c.l.b16 %v1417
        %v1467 = vunpack.c.l.b16 %v1421
        %v1468 = vunpack.c.l.b16 %v1424
        %v1469 = vunpack.c.l.b16 %v1428
        %v1470 = vunpack.c.l.b16 %v1431
        %v1471 = vunpack.c.l.b16 %v1435
        %v1472 = vunpack.c.l.b16 %v1438
        %v1473 = vpack.c.b16 %v1442, %v1441
        %v1474 = vpack.c.b16 %v1444, %v1443
        %v1475 = vpack.c.b16 %v1446, %v1445
        %v1476 = vpack.c.b16 %v1448, %v1447
        %v1477 = vpack.c.b16 %v1450, %v1449
        %v1478 = vpack.c.b16 %v1452, %v1451
        %v1479 = vpack.c.b16 %v1454, %v1453
        %v1480 = vpack.c.b16 %v1456, %v1455
        %v1481 = vpack.c.b16 %v1458, %v1457
        %v1482 = vpack.c.b16 %v1460, %v1459
        %v1483 = vpack.c.b16 %v1462, %v1461
        %v1484 = vpack.c.b16 %v1464, %v1463
        %v1485 = vpack.c.b16 %v1466, %v1465
        %v1486 = vpack.c.b16 %v1468, %v1467
        %v1487 = vpack.c.b16 %v1470, %v1469
        %v1488 = vpack.c.b16 %v1472, %v1471
        %v1490 = vsel %vm332, %v1473, 0
        %v1493 = vsel %vm332, %v1474, 0
        %v1496 = vsel %vm332, %v1475, 0
        %v1499 = vsel %vm332, %v1476, 0
        %v1502 = vsel %vm332, %v1477, 0
        %v1505 = vsel %vm332, %v1478, 0
        %v1508 = vsel %vm332, %v1479, 0
        %v1511 = vsel %vm332, %v1480, 0
        %v1514 = vsel %vm332, %v1481, 0
        %v1517 = vsel %vm332, %v1482, 0
        %v1520 = vsel %vm332, %v1483, 0
        %v1523 = vsel %vm332, %v1484, 0
        %v1526 = vsel %vm332, %v1485, 0
        %v1529 = vsel %vm332, %v1486, 0
        %v1532 = vsel %vm332, %v1487, 0
        %v1535 = vsel %vm332, %v1488, 0
        %v1538 = vsel %vm381, %v1440, 0
        %1540 = vmatpush.bf16.msra.mxu0 0
        %1541 = vmatpush.bf16.msra.mxu0 0
        %1542 = vmatpush.bf16.msra.mxu0 0
        %1543 = vmatpush.bf16.msra.mxu0 0
        %1544 = vmatpush.bf16.msra.mxu0 0
        %1545 = vmatpush.bf16.msra.mxu0 0
        %1546 = vmatpush.bf16.msra.mxu0 0
        %1547 = vmatpush.bf16.msra.mxu0 %v1538
        %1548 = vmatmul.bf16.gmra.mxu0 %v1490
        %v1549 = vpop.f32.mrf.mxu0
        %v1550 = vadd.f32 0.0, %v1549
        %v1551 = vpop.f32.mrf.mxu0
        %v1552 = vadd.f32 0.0, %v1551
        %1553 = vmatmul.bf16.gmra.mxu0 %v1493
        %v1554 = vpop.f32.mrf.mxu0
        %v1555 = vadd.f32 0.0, %v1554
        %v1556 = vpop.f32.mrf.mxu0
        %v1557 = vadd.f32 0.0, %v1556
        %1558 = vmatmul.bf16.gmra.mxu0 %v1496
        %v1559 = vpop.f32.mrf.mxu0
        %v1560 = vadd.f32 0.0, %v1559
        %v1561 = vpop.f32.mrf.mxu0
        %v1562 = vadd.f32 0.0, %v1561
        %1563 = vmatmul.bf16.gmra.mxu0 %v1499
        %v1564 = vpop.f32.mrf.mxu0
        %v1565 = vadd.f32 0.0, %v1564
        %v1566 = vpop.f32.mrf.mxu0
        %v1567 = vadd.f32 0.0, %v1566
        %1568 = vmatmul.bf16.gmra.mxu0 %v1502
        %v1569 = vpop.f32.mrf.mxu0
        %v1570 = vadd.f32 0.0, %v1569
        %v1571 = vpop.f32.mrf.mxu0
        %v1572 = vadd.f32 0.0, %v1571
        %1573 = vmatmul.bf16.gmra.mxu0 %v1505
        %v1574 = vpop.f32.mrf.mxu0
        %v1575 = vadd.f32 0.0, %v1574
        %v1576 = vpop.f32.mrf.mxu0
        %v1577 = vadd.f32 0.0, %v1576
        %1578 = vmatmul.bf16.gmra.mxu0 %v1508
        %v1579 = vpop.f32.mrf.mxu0
        %v1580 = vadd.f32 0.0, %v1579
        %v1581 = vpop.f32.mrf.mxu0
        %v1582 = vadd.f32 0.0, %v1581
        %1583 = vmatmul.bf16.gmra.mxu0 %v1511
        %v1584 = vpop.f32.mrf.mxu0
        %v1585 = vadd.f32 0.0, %v1584
        %v1586 = vpop.f32.mrf.mxu0
        %v1587 = vadd.f32 0.0, %v1586
        %1588 = vmatmul.bf16.gmra.mxu0 %v1514
        %v1589 = vpop.f32.mrf.mxu0
        %v1590 = vadd.f32 0.0, %v1589
        %v1591 = vpop.f32.mrf.mxu0
        %v1592 = vadd.f32 0.0, %v1591
        %1593 = vmatmul.bf16.gmra.mxu0 %v1517
        %v1594 = vpop.f32.mrf.mxu0
        %v1595 = vadd.f32 0.0, %v1594
        %v1596 = vpop.f32.mrf.mxu0
        %v1597 = vadd.f32 0.0, %v1596
        %1598 = vmatmul.bf16.gmra.mxu0 %v1520
        %v1599 = vpop.f32.mrf.mxu0
        %v1600 = vadd.f32 0.0, %v1599
        %v1601 = vpop.f32.mrf.mxu0
        %v1602 = vadd.f32 0.0, %v1601
        %1603 = vmatmul.bf16.gmra.mxu0 %v1523
        %v1604 = vpop.f32.mrf.mxu0
        %v1605 = vadd.f32 0.0, %v1604
        %v1606 = vpop.f32.mrf.mxu0
        %v1607 = vadd.f32 0.0, %v1606
        %1608 = vmatmul.bf16.gmra.mxu0 %v1526
        %v1609 = vpop.f32.mrf.mxu0
        %v1610 = vadd.f32 0.0, %v1609
        %v1611 = vpop.f32.mrf.mxu0
        %v1612 = vadd.f32 0.0, %v1611
        %1613 = vmatmul.bf16.gmra.mxu0 %v1529
        %v1614 = vpop.f32.mrf.mxu0
        %v1615 = vadd.f32 0.0, %v1614
        %v1616 = vpop.f32.mrf.mxu0
        %v1617 = vadd.f32 0.0, %v1616
        %1618 = vmatmul.bf16.gmra.mxu0 %v1532
        %v1619 = vpop.f32.mrf.mxu0
        %v1620 = vadd.f32 0.0, %v1619
        %v1621 = vpop.f32.mrf.mxu0
        %v1622 = vadd.f32 0.0, %v1621
        %1623 = vmatmul.bf16.gmra.mxu0 %v1535
        %v1624 = vpop.f32.mrf.mxu0
        %v1625 = vadd.f32 0.0, %v1624
        %v1626 = vpop.f32.mrf.mxu0
        %v1627 = vadd.f32 0.0, %v1626
        %1628 = vdwg.mxu0
        %v1629 = vld [vmem:[#allocation2] sm:$0xff]
        %v1630 = vld [vmem:[#allocation2 + $0x8] sm:$0xff]
        %v1631 = vld [vmem:[#allocation2 + $0x10] sm:$0xff]
        %v1632 = vld [vmem:[#allocation2 + $0x18] sm:$0xff]
        %v1633 = vld [vmem:[#allocation2 + $0x20] sm:$0xff]
        %v1634 = vld [vmem:[#allocation2 + $0x28] sm:$0xff]
        %v1635 = vld [vmem:[#allocation2 + $0x30] sm:$0xff]
        %v1636 = vld [vmem:[#allocation2 + $0x38] sm:$0xff]
        %v1637 = vld [vmem:[#allocation2 + $0x40] sm:$0xff]
        %v1638 = vld [vmem:[#allocation2 + $0x48] sm:$0xff]
        %v1639 = vld [vmem:[#allocation2 + $0x50] sm:$0xff]
        %v1640 = vld [vmem:[#allocation2 + $0x58] sm:$0xff]
        %v1641 = vld [vmem:[#allocation2 + $0x60] sm:$0xff]
        %v1642 = vld [vmem:[#allocation2 + $0x68] sm:$0xff]
        %v1643 = vld [vmem:[#allocation2 + $0x70] sm:$0xff]
        %v1644 = vld [vmem:[#allocation2 + $0x78] sm:$0xff]
        %v1645 = vld [vmem:[#allocation2 + $0x80] sm:$0xff]
        %v1646 = vld [vmem:[#allocation2 + $0x88] sm:$0xff]
        %v1647 = vld [vmem:[#allocation2 + $0x90] sm:$0xff]
        %v1648 = vld [vmem:[#allocation2 + $0x98] sm:$0xff]
        %v1649 = vld [vmem:[#allocation2 + $0xa0] sm:$0xff]
        %v1650 = vld [vmem:[#allocation2 + $0xa8] sm:$0xff]
        %v1651 = vld [vmem:[#allocation2 + $0xb0] sm:$0xff]
        %v1652 = vld [vmem:[#allocation2 + $0xb8] sm:$0xff]
        %v1653 = vld [vmem:[#allocation2 + $0xc0] sm:$0xff]
        %v1654 = vld [vmem:[#allocation2 + $0xc8] sm:$0xff]
        %v1655 = vld [vmem:[#allocation2 + $0xd0] sm:$0xff]
        %v1656 = vld [vmem:[#allocation2 + $0xd8] sm:$0xff]
        %v1657 = vld [vmem:[#allocation2 + $0xe0] sm:$0xff]
        %v1658 = vld [vmem:[#allocation2 + $0xe8] sm:$0xff]
        %v1659 = vld [vmem:[#allocation2 + $0xf0] sm:$0xff]
        %v1660 = vld [vmem:[#allocation2 + $0xf8] sm:$0xff]
        %v1661 = vadd.f32 %v1629, %v1550
        %v1662 = vadd.f32 %v1630, %v1552
        %v1663 = vadd.f32 %v1631, %v1555
        %v1664 = vadd.f32 %v1632, %v1557
        %v1665 = vadd.f32 %v1633, %v1560
        %v1666 = vadd.f32 %v1634, %v1562
        %v1667 = vadd.f32 %v1635, %v1565
        %v1668 = vadd.f32 %v1636, %v1567
        %v1669 = vadd.f32 %v1637, %v1570
        %v1670 = vadd.f32 %v1638, %v1572
        %v1671 = vadd.f32 %v1639, %v1575
        %v1672 = vadd.f32 %v1640, %v1577
        %v1673 = vadd.f32 %v1641, %v1580
        %v1674 = vadd.f32 %v1642, %v1582
        %v1675 = vadd.f32 %v1643, %v1585
        %v1676 = vadd.f32 %v1644, %v1587
        %v1677 = vadd.f32 %v1645, %v1590
        %v1678 = vadd.f32 %v1646, %v1592
        %v1679 = vadd.f32 %v1647, %v1595
        %v1680 = vadd.f32 %v1648, %v1597
        %v1681 = vadd.f32 %v1649, %v1600
        %v1682 = vadd.f32 %v1650, %v1602
        %v1683 = vadd.f32 %v1651, %v1605
        %v1684 = vadd.f32 %v1652, %v1607
        %v1685 = vadd.f32 %v1653, %v1610
        %v1686 = vadd.f32 %v1654, %v1612
        %v1687 = vadd.f32 %v1655, %v1615
        %v1688 = vadd.f32 %v1656, %v1617
        %v1689 = vadd.f32 %v1657, %v1620
        %v1690 = vadd.f32 %v1658, %v1622
        %v1691 = vadd.f32 %v1659, %v1625
        %v1692 = vadd.f32 %v1660, %v1627
        %1693 = vst.msk [vmem:[#allocation2] sm:$0xff] %vm474, %v1661
        %1694 = vst.msk [vmem:[#allocation2 + $0x8] sm:$0xff] %vm474, %v1662
        %1695 = vst.msk [vmem:[#allocation2 + $0x10] sm:$0xff] %vm474, %v1663
        %1696 = vst.msk [vmem:[#allocation2 + $0x18] sm:$0xff] %vm474, %v1664
        %1697 = vst.msk [vmem:[#allocation2 + $0x20] sm:$0xff] %vm474, %v1665
        %1698 = vst.msk [vmem:[#allocation2 + $0x28] sm:$0xff] %vm474, %v1666
        %1699 = vst.msk [vmem:[#allocation2 + $0x30] sm:$0xff] %vm474, %v1667
        %1700 = vst.msk [vmem:[#allocation2 + $0x38] sm:$0xff] %vm474, %v1668
        %1701 = vst.msk [vmem:[#allocation2 + $0x40] sm:$0xff] %vm474, %v1669
        %1702 = vst.msk [vmem:[#allocation2 + $0x48] sm:$0xff] %vm474, %v1670
        %1703 = vst.msk [vmem:[#allocation2 + $0x50] sm:$0xff] %vm474, %v1671
        %1704 = vst.msk [vmem:[#allocation2 + $0x58] sm:$0xff] %vm474, %v1672
        %1705 = vst.msk [vmem:[#allocation2 + $0x60] sm:$0xff] %vm474, %v1673
        %1706 = vst.msk [vmem:[#allocation2 + $0x68] sm:$0xff] %vm474, %v1674
        %1707 = vst.msk [vmem:[#allocation2 + $0x70] sm:$0xff] %vm474, %v1675
        %1708 = vst.msk [vmem:[#allocation2 + $0x78] sm:$0xff] %vm474, %v1676
        %1709 = vst.msk [vmem:[#allocation2 + $0x80] sm:$0xff] %vm474, %v1677
        %1710 = vst.msk [vmem:[#allocation2 + $0x88] sm:$0xff] %vm474, %v1678
        %1711 = vst.msk [vmem:[#allocation2 + $0x90] sm:$0xff] %vm474, %v1679
        %1712 = vst.msk [vmem:[#allocation2 + $0x98] sm:$0xff] %vm474, %v1680
        %1713 = vst.msk [vmem:[#allocation2 + $0xa0] sm:$0xff] %vm474, %v1681
        %1714 = vst.msk [vmem:[#allocation2 + $0xa8] sm:$0xff] %vm474, %v1682
        %1715 = vst.msk [vmem:[#allocation2 + $0xb0] sm:$0xff] %vm474, %v1683
        %1716 = vst.msk [vmem:[#allocation2 + $0xb8] sm:$0xff] %vm474, %v1684
        %1717 = vst.msk [vmem:[#allocation2 + $0xc0] sm:$0xff] %vm474, %v1685
        %1718 = vst.msk [vmem:[#allocation2 + $0xc8] sm:$0xff] %vm474, %v1686
        %1719 = vst.msk [vmem:[#allocation2 + $0xd0] sm:$0xff] %vm474, %v1687
        %1720 = vst.msk [vmem:[#allocation2 + $0xd8] sm:$0xff] %vm474, %v1688
        %1721 = vst.msk [vmem:[#allocation2 + $0xe0] sm:$0xff] %vm474, %v1689
        %1722 = vst.msk [vmem:[#allocation2 + $0xe8] sm:$0xff] %vm474, %v1690
        %1723 = vst.msk [vmem:[#allocation2 + $0xf0] sm:$0xff] %vm474, %v1691
        %1724 = vst.msk [vmem:[#allocation2 + $0xf8] sm:$0xff] %vm474, %v1692
        %s1725 = scalar_lea.vmem %s211, 12
        %v1726 = vld [vmem:[%s1725] sm:$0xf]
        %v1727 = vld [vmem:[%s1725 + $0x4] sm:$0xf]
        %v1728 = vld [vmem:[%s1725 + $0xc] sm:$0xf]
        %v1729 = vld [vmem:[%s1725 + $0x10] sm:$0xf]
        %v1730 = vld [vmem:[%s1725 + $0x18] sm:$0xf]
        %v1731 = vld [vmem:[%s1725 + $0x1c] sm:$0xf]
        %v1732 = vld [vmem:[%s1725 + $0x24] sm:$0xf]
        %v1733 = vld [vmem:[%s1725 + $0x28] sm:$0xf]
        %v1734 = vld [vmem:[%s1725 + $0x30] sm:$0xf]
        %v1735 = vld [vmem:[%s1725 + $0x34] sm:$0xf]
        %v1736 = vld [vmem:[%s1725 + $0x3c] sm:$0xf]
        %v1737 = vld [vmem:[%s1725 + $0x40] sm:$0xf]
        %v1738 = vld [vmem:[%s1725 + $0x48] sm:$0xf]
        %v1739 = vld [vmem:[%s1725 + $0x4c] sm:$0xf]
        %v1740 = vld [vmem:[%s1725 + $0x54] sm:$0xf]
        %v1741 = vld [vmem:[%s1725 + $0x58] sm:$0xf]
        %v1742 = vld [vmem:[%s1725 + $0x60] sm:$0xf]
        %v1743 = vld [vmem:[%s1725 + $0x64] sm:$0xf]
        %v1744 = vld [vmem:[%s1725 + $0x6c] sm:$0xf]
        %v1745 = vld [vmem:[%s1725 + $0x70] sm:$0xf]
        %v1746 = vld [vmem:[%s1725 + $0x78] sm:$0xf]
        %v1747 = vld [vmem:[%s1725 + $0x7c] sm:$0xf]
        %v1748 = vld [vmem:[%s1725 + $0x84] sm:$0xf]
        %v1749 = vld [vmem:[%s1725 + $0x88] sm:$0xf]
        %v1750 = vld [vmem:[%s1725 + $0x90] sm:$0xf]
        %v1751 = vld [vmem:[%s1725 + $0x94] sm:$0xf]
        %v1752 = vld [vmem:[%s1725 + $0x9c] sm:$0xf]
        %v1753 = vld [vmem:[%s1725 + $0xa0] sm:$0xf]
        %v1754 = vld [vmem:[%s1725 + $0xa8] sm:$0xf]
        %v1755 = vld [vmem:[%s1725 + $0xac] sm:$0xf]
        %v1756 = vld [vmem:[%s1725 + $0xb4] sm:$0xf]
        %v1757 = vld [vmem:[%s1725 + $0xb8] sm:$0xf]
        %s1758 = scalar_lea.vmem %s1, 6
        %v1759 = vld [vmem:[%s1758] sm:$0x3]
        %v1792 = vunpack.c.l.b16 %v1726
        %v1793 = vunpack.c.l.b16 %v1727
        %v1794 = vunpack.c.l.b16 %v1728
        %v1795 = vunpack.c.l.b16 %v1729
        %v1796 = vunpack.c.l.b16 %v1730
        %v1797 = vunpack.c.l.b16 %v1731
        %v1798 = vunpack.c.l.b16 %v1732
        %v1799 = vunpack.c.l.b16 %v1733
        %v1800 = vunpack.c.l.b16 %v1734
        %v1801 = vunpack.c.l.b16 %v1735
        %v1802 = vunpack.c.l.b16 %v1736
        %v1803 = vunpack.c.l.b16 %v1737
        %v1804 = vunpack.c.l.b16 %v1738
        %v1805 = vunpack.c.l.b16 %v1739
        %v1806 = vunpack.c.l.b16 %v1740
        %v1807 = vunpack.c.l.b16 %v1741
        %v1808 = vunpack.c.l.b16 %v1742
        %v1809 = vunpack.c.l.b16 %v1743
        %v1810 = vunpack.c.l.b16 %v1744
        %v1811 = vunpack.c.l.b16 %v1745
        %v1812 = vunpack.c.l.b16 %v1746
        %v1813 = vunpack.c.l.b16 %v1747
        %v1814 = vunpack.c.l.b16 %v1748
        %v1815 = vunpack.c.l.b16 %v1749
        %v1816 = vunpack.c.l.b16 %v1750
        %v1817 = vunpack.c.l.b16 %v1751
        %v1818 = vunpack.c.l.b16 %v1752
        %v1819 = vunpack.c.l.b16 %v1753
        %v1820 = vunpack.c.l.b16 %v1754
        %v1821 = vunpack.c.l.b16 %v1755
        %v1822 = vunpack.c.l.b16 %v1756
        %v1823 = vunpack.c.l.b16 %v1757
        %v1824 = vpack.c.b16 %v1793, %v1792
        %v1825 = vpack.c.b16 %v1795, %v1794
        %v1826 = vpack.c.b16 %v1797, %v1796
        %v1827 = vpack.c.b16 %v1799, %v1798
        %v1828 = vpack.c.b16 %v1801, %v1800
        %v1829 = vpack.c.b16 %v1803, %v1802
        %v1830 = vpack.c.b16 %v1805, %v1804
        %v1831 = vpack.c.b16 %v1807, %v1806
        %v1832 = vpack.c.b16 %v1809, %v1808
        %v1833 = vpack.c.b16 %v1811, %v1810
        %v1834 = vpack.c.b16 %v1813, %v1812
        %v1835 = vpack.c.b16 %v1815, %v1814
        %v1836 = vpack.c.b16 %v1817, %v1816
        %v1837 = vpack.c.b16 %v1819, %v1818
        %v1838 = vpack.c.b16 %v1821, %v1820
        %v1839 = vpack.c.b16 %v1823, %v1822
        %v1841 = vsel %vm332, %v1824, 0
        %v1844 = vsel %vm332, %v1825, 0
        %v1847 = vsel %vm332, %v1826, 0
        %v1850 = vsel %vm332, %v1827, 0
        %v1853 = vsel %vm332, %v1828, 0
        %v1856 = vsel %vm332, %v1829, 0
        %v1859 = vsel %vm332, %v1830, 0
        %v1862 = vsel %vm332, %v1831, 0
        %v1865 = vsel %vm332, %v1832, 0
        %v1868 = vsel %vm332, %v1833, 0
        %v1871 = vsel %vm332, %v1834, 0
        %v1874 = vsel %vm332, %v1835, 0
        %v1877 = vsel %vm332, %v1836, 0
        %v1880 = vsel %vm332, %v1837, 0
        %v1883 = vsel %vm332, %v1838, 0
        %v1886 = vsel %vm332, %v1839, 0
        %v1889 = vsel %vm381, %v1759, 0
        %1891 = vmatpush.bf16.msra.mxu0 0
        %1892 = vmatpush.bf16.msra.mxu0 0
        %1893 = vmatpush.bf16.msra.mxu0 0
        %1894 = vmatpush.bf16.msra.mxu0 0
        %1895 = vmatpush.bf16.msra.mxu0 0
        %1896 = vmatpush.bf16.msra.mxu0 0
        %1897 = vmatpush.bf16.msra.mxu0 0
        %1898 = vmatpush.bf16.msra.mxu0 %v1889
        %1899 = vmatmul.bf16.gmra.mxu0 %v1841
        %v1900 = vpop.f32.mrf.mxu0
        %v1901 = vadd.f32 0.0, %v1900
        %v1902 = vpop.f32.mrf.mxu0
        %v1903 = vadd.f32 0.0, %v1902
        %1904 = vmatmul.bf16.gmra.mxu0 %v1844
        %v1905 = vpop.f32.mrf.mxu0
        %v1906 = vadd.f32 0.0, %v1905
        %v1907 = vpop.f32.mrf.mxu0
        %v1908 = vadd.f32 0.0, %v1907
        %1909 = vmatmul.bf16.gmra.mxu0 %v1847
        %v1910 = vpop.f32.mrf.mxu0
        %v1911 = vadd.f32 0.0, %v1910
        %v1912 = vpop.f32.mrf.mxu0
        %v1913 = vadd.f32 0.0, %v1912
        %1914 = vmatmul.bf16.gmra.mxu0 %v1850
        %v1915 = vpop.f32.mrf.mxu0
        %v1916 = vadd.f32 0.0, %v1915
        %v1917 = vpop.f32.mrf.mxu0
        %v1918 = vadd.f32 0.0, %v1917
        %1919 = vmatmul.bf16.gmra.mxu0 %v1853
        %v1920 = vpop.f32.mrf.mxu0
        %v1921 = vadd.f32 0.0, %v1920
        %v1922 = vpop.f32.mrf.mxu0
        %v1923 = vadd.f32 0.0, %v1922
        %1924 = vmatmul.bf16.gmra.mxu0 %v1856
        %v1925 = vpop.f32.mrf.mxu0
        %v1926 = vadd.f32 0.0, %v1925
        %v1927 = vpop.f32.mrf.mxu0
        %v1928 = vadd.f32 0.0, %v1927
        %1929 = vmatmul.bf16.gmra.mxu0 %v1859
        %v1930 = vpop.f32.mrf.mxu0
        %v1931 = vadd.f32 0.0, %v1930
        %v1932 = vpop.f32.mrf.mxu0
        %v1933 = vadd.f32 0.0, %v1932
        %1934 = vmatmul.bf16.gmra.mxu0 %v1862
        %v1935 = vpop.f32.mrf.mxu0
        %v1936 = vadd.f32 0.0, %v1935
        %v1937 = vpop.f32.mrf.mxu0
        %v1938 = vadd.f32 0.0, %v1937
        %1939 = vmatmul.bf16.gmra.mxu0 %v1865
        %v1940 = vpop.f32.mrf.mxu0
        %v1941 = vadd.f32 0.0, %v1940
        %v1942 = vpop.f32.mrf.mxu0
        %v1943 = vadd.f32 0.0, %v1942
        %1944 = vmatmul.bf16.gmra.mxu0 %v1868
        %v1945 = vpop.f32.mrf.mxu0
        %v1946 = vadd.f32 0.0, %v1945
        %v1947 = vpop.f32.mrf.mxu0
        %v1948 = vadd.f32 0.0, %v1947
        %1949 = vmatmul.bf16.gmra.mxu0 %v1871
        %v1950 = vpop.f32.mrf.mxu0
        %v1951 = vadd.f32 0.0, %v1950
        %v1952 = vpop.f32.mrf.mxu0
        %v1953 = vadd.f32 0.0, %v1952
        %1954 = vmatmul.bf16.gmra.mxu0 %v1874
        %v1955 = vpop.f32.mrf.mxu0
        %v1956 = vadd.f32 0.0, %v1955
        %v1957 = vpop.f32.mrf.mxu0
        %v1958 = vadd.f32 0.0, %v1957
        %1959 = vmatmul.bf16.gmra.mxu0 %v1877
        %v1960 = vpop.f32.mrf.mxu0
        %v1961 = vadd.f32 0.0, %v1960
        %v1962 = vpop.f32.mrf.mxu0
        %v1963 = vadd.f32 0.0, %v1962
        %1964 = vmatmul.bf16.gmra.mxu0 %v1880
        %v1965 = vpop.f32.mrf.mxu0
        %v1966 = vadd.f32 0.0, %v1965
        %v1967 = vpop.f32.mrf.mxu0
        %v1968 = vadd.f32 0.0, %v1967
        %1969 = vmatmul.bf16.gmra.mxu0 %v1883
        %v1970 = vpop.f32.mrf.mxu0
        %v1971 = vadd.f32 0.0, %v1970
        %v1972 = vpop.f32.mrf.mxu0
        %v1973 = vadd.f32 0.0, %v1972
        %1974 = vmatmul.bf16.gmra.mxu0 %v1886
        %v1975 = vpop.f32.mrf.mxu0
        %v1976 = vadd.f32 0.0, %v1975
        %v1977 = vpop.f32.mrf.mxu0
        %v1978 = vadd.f32 0.0, %v1977
        %1979 = vdwg.mxu0
        %v1980 = vld [vmem:[#allocation2] sm:$0xff]
        %v1981 = vld [vmem:[#allocation2 + $0x8] sm:$0xff]
        %v1982 = vld [vmem:[#allocation2 + $0x10] sm:$0xff]
        %v1983 = vld [vmem:[#allocation2 + $0x18] sm:$0xff]
        %v1984 = vld [vmem:[#allocation2 + $0x20] sm:$0xff]
        %v1985 = vld [vmem:[#allocation2 + $0x28] sm:$0xff]
        %v1986 = vld [vmem:[#allocation2 + $0x30] sm:$0xff]
        %v1987 = vld [vmem:[#allocation2 + $0x38] sm:$0xff]
        %v1988 = vld [vmem:[#allocation2 + $0x40] sm:$0xff]
        %v1989 = vld [vmem:[#allocation2 + $0x48] sm:$0xff]
        %v1990 = vld [vmem:[#allocation2 + $0x50] sm:$0xff]
        %v1991 = vld [vmem:[#allocation2 + $0x58] sm:$0xff]
        %v1992 = vld [vmem:[#allocation2 + $0x60] sm:$0xff]
        %v1993 = vld [vmem:[#allocation2 + $0x68] sm:$0xff]
        %v1994 = vld [vmem:[#allocation2 + $0x70] sm:$0xff]
        %v1995 = vld [vmem:[#allocation2 + $0x78] sm:$0xff]
        %v1996 = vld [vmem:[#allocation2 + $0x80] sm:$0xff]
        %v1997 = vld [vmem:[#allocation2 + $0x88] sm:$0xff]
        %v1998 = vld [vmem:[#allocation2 + $0x90] sm:$0xff]
        %v1999 = vld [vmem:[#allocation2 + $0x98] sm:$0xff]
        %v2000 = vld [vmem:[#allocation2 + $0xa0] sm:$0xff]
        %v2001 = vld [vmem:[#allocation2 + $0xa8] sm:$0xff]
        %v2002 = vld [vmem:[#allocation2 + $0xb0] sm:$0xff]
        %v2003 = vld [vmem:[#allocation2 + $0xb8] sm:$0xff]
        %v2004 = vld [vmem:[#allocation2 + $0xc0] sm:$0xff]
        %v2005 = vld [vmem:[#allocation2 + $0xc8] sm:$0xff]
        %v2006 = vld [vmem:[#allocation2 + $0xd0] sm:$0xff]
        %v2007 = vld [vmem:[#allocation2 + $0xd8] sm:$0xff]
        %v2008 = vld [vmem:[#allocation2 + $0xe0] sm:$0xff]
        %v2009 = vld [vmem:[#allocation2 + $0xe8] sm:$0xff]
        %v2010 = vld [vmem:[#allocation2 + $0xf0] sm:$0xff]
        %v2011 = vld [vmem:[#allocation2 + $0xf8] sm:$0xff]
        %v2012 = vadd.f32 %v1980, %v1901
        %v2013 = vadd.f32 %v1981, %v1903
        %v2014 = vadd.f32 %v1982, %v1906
        %v2015 = vadd.f32 %v1983, %v1908
        %v2016 = vadd.f32 %v1984, %v1911
        %v2017 = vadd.f32 %v1985, %v1913
        %v2018 = vadd.f32 %v1986, %v1916
        %v2019 = vadd.f32 %v1987, %v1918
        %v2020 = vadd.f32 %v1988, %v1921
        %v2021 = vadd.f32 %v1989, %v1923
        %v2022 = vadd.f32 %v1990, %v1926
        %v2023 = vadd.f32 %v1991, %v1928
        %v2024 = vadd.f32 %v1992, %v1931
        %v2025 = vadd.f32 %v1993, %v1933
        %v2026 = vadd.f32 %v1994, %v1936
        %v2027 = vadd.f32 %v1995, %v1938
        %v2028 = vadd.f32 %v1996, %v1941
        %v2029 = vadd.f32 %v1997, %v1943
        %v2030 = vadd.f32 %v1998, %v1946
        %v2031 = vadd.f32 %v1999, %v1948
        %v2032 = vadd.f32 %v2000, %v1951
        %v2033 = vadd.f32 %v2001, %v1953
        %v2034 = vadd.f32 %v2002, %v1956
        %v2035 = vadd.f32 %v2003, %v1958
        %v2036 = vadd.f32 %v2004, %v1961
        %v2037 = vadd.f32 %v2005, %v1963
        %v2038 = vadd.f32 %v2006, %v1966
        %v2039 = vadd.f32 %v2007, %v1968
        %v2040 = vadd.f32 %v2008, %v1971
        %v2041 = vadd.f32 %v2009, %v1973
        %v2042 = vadd.f32 %v2010, %v1976
        %v2043 = vadd.f32 %v2011, %v1978
        %2044 = vst.msk [vmem:[#allocation2] sm:$0xff] %vm474, %v2012
        %2045 = vst.msk [vmem:[#allocation2 + $0x8] sm:$0xff] %vm474, %v2013
        %2046 = vst.msk [vmem:[#allocation2 + $0x10] sm:$0xff] %vm474, %v2014
        %2047 = vst.msk [vmem:[#allocation2 + $0x18] sm:$0xff] %vm474, %v2015
        %2048 = vst.msk [vmem:[#allocation2 + $0x20] sm:$0xff] %vm474, %v2016
        %2049 = vst.msk [vmem:[#allocation2 + $0x28] sm:$0xff] %vm474, %v2017
        %2050 = vst.msk [vmem:[#allocation2 + $0x30] sm:$0xff] %vm474, %v2018
        %2051 = vst.msk [vmem:[#allocation2 + $0x38] sm:$0xff] %vm474, %v2019
        %2052 = vst.msk [vmem:[#allocation2 + $0x40] sm:$0xff] %vm474, %v2020
        %2053 = vst.msk [vmem:[#allocation2 + $0x48] sm:$0xff] %vm474, %v2021
        %2054 = vst.msk [vmem:[#allocation2 + $0x50] sm:$0xff] %vm474, %v2022
        %2055 = vst.msk [vmem:[#allocation2 + $0x58] sm:$0xff] %vm474, %v2023
        %2056 = vst.msk [vmem:[#allocation2 + $0x60] sm:$0xff] %vm474, %v2024
        %2057 = vst.msk [vmem:[#allocation2 + $0x68] sm:$0xff] %vm474, %v2025
        %2058 = vst.msk [vmem:[#allocation2 + $0x70] sm:$0xff] %vm474, %v2026
        %2059 = vst.msk [vmem:[#allocation2 + $0x78] sm:$0xff] %vm474, %v2027
        %2060 = vst.msk [vmem:[#allocation2 + $0x80] sm:$0xff] %vm474, %v2028
        %2061 = vst.msk [vmem:[#allocation2 + $0x88] sm:$0xff] %vm474, %v2029
        %2062 = vst.msk [vmem:[#allocation2 + $0x90] sm:$0xff] %vm474, %v2030
        %2063 = vst.msk [vmem:[#allocation2 + $0x98] sm:$0xff] %vm474, %v2031
        %2064 = vst.msk [vmem:[#allocation2 + $0xa0] sm:$0xff] %vm474, %v2032
        %2065 = vst.msk [vmem:[#allocation2 + $0xa8] sm:$0xff] %vm474, %v2033
        %2066 = vst.msk [vmem:[#allocation2 + $0xb0] sm:$0xff] %vm474, %v2034
        %2067 = vst.msk [vmem:[#allocation2 + $0xb8] sm:$0xff] %vm474, %v2035
        %2068 = vst.msk [vmem:[#allocation2 + $0xc0] sm:$0xff] %vm474, %v2036
        %2069 = vst.msk [vmem:[#allocation2 + $0xc8] sm:$0xff] %vm474, %v2037
        %2070 = vst.msk [vmem:[#allocation2 + $0xd0] sm:$0xff] %vm474, %v2038
        %2071 = vst.msk [vmem:[#allocation2 + $0xd8] sm:$0xff] %vm474, %v2039
        %2072 = vst.msk [vmem:[#allocation2 + $0xe0] sm:$0xff] %vm474, %v2040
        %2073 = vst.msk [vmem:[#allocation2 + $0xe8] sm:$0xff] %vm474, %v2041
        %2074 = vst.msk [vmem:[#allocation2 + $0xf0] sm:$0xff] %vm474, %v2042
        %2075 = vst.msk [vmem:[#allocation2 + $0xf8] sm:$0xff] %vm474, %v2043
        %v2076 = vld [vmem:[%s1725] sm:$0xf]
        %v2077 = vld [vmem:[%s1725 + $0x4] sm:$0xf]
        %v2078 = vld [vmem:[%s1725 + $0x8] sm:$0x1]
        %v2079 = vld [vmem:[%s1725 + $0xc] sm:$0xf]
        %v2080 = vld [vmem:[%s1725 + $0x10] sm:$0xf]
        %v2081 = vld [vmem:[%s1725 + $0x14] sm:$0x1]
        %v2082 = vld [vmem:[%s1725 + $0x18] sm:$0xf]
        %v2083 = vld [vmem:[%s1725 + $0x1c] sm:$0xf]
        %v2084 = vld [vmem:[%s1725 + $0x20] sm:$0x1]
        %v2085 = vld [vmem:[%s1725 + $0x24] sm:$0xf]
        %v2086 = vld [vmem:[%s1725 + $0x28] sm:$0xf]
        %v2087 = vld [vmem:[%s1725 + $0x2c] sm:$0x1]
        %v2088 = vld [vmem:[%s1725 + $0x30] sm:$0xf]
        %v2089 = vld [vmem:[%s1725 + $0x34] sm:$0xf]
        %v2090 = vld [vmem:[%s1725 + $0x38] sm:$0x1]
        %v2091 = vld [vmem:[%s1725 + $0x3c] sm:$0xf]
        %v2092 = vld [vmem:[%s1725 + $0x40] sm:$0xf]
        %v2093 = vld [vmem:[%s1725 + $0x44] sm:$0x1]
        %v2094 = vld [vmem:[%s1725 + $0x48] sm:$0xf]
        %v2095 = vld [vmem:[%s1725 + $0x4c] sm:$0xf]
        %v2096 = vld [vmem:[%s1725 + $0x50] sm:$0x1]
        %v2097 = vld [vmem:[%s1725 + $0x54] sm:$0xf]
        %v2098 = vld [vmem:[%s1725 + $0x58] sm:$0xf]
        %v2099 = vld [vmem:[%s1725 + $0x5c] sm:$0x1]
        %v2100 = vld [vmem:[%s1725 + $0x60] sm:$0xf]
        %v2101 = vld [vmem:[%s1725 + $0x64] sm:$0xf]
        %v2102 = vld [vmem:[%s1725 + $0x68] sm:$0x1]
        %v2103 = vld [vmem:[%s1725 + $0x6c] sm:$0xf]
        %v2104 = vld [vmem:[%s1725 + $0x70] sm:$0xf]
        %v2105 = vld [vmem:[%s1725 + $0x74] sm:$0x1]
        %v2106 = vld [vmem:[%s1725 + $0x78] sm:$0xf]
        %v2107 = vld [vmem:[%s1725 + $0x7c] sm:$0xf]
        %v2108 = vld [vmem:[%s1725 + $0x80] sm:$0x1]
        %v2109 = vld [vmem:[%s1725 + $0x84] sm:$0xf]
        %v2110 = vld [vmem:[%s1725 + $0x88] sm:$0xf]
        %v2111 = vld [vmem:[%s1725 + $0x8c] sm:$0x1]
        %v2112 = vld [vmem:[%s1725 + $0x90] sm:$0xf]
        %v2113 = vld [vmem:[%s1725 + $0x94] sm:$0xf]
        %v2114 = vld [vmem:[%s1725 + $0x98] sm:$0x1]
        %v2115 = vld [vmem:[%s1725 + $0x9c] sm:$0xf]
        %v2116 = vld [vmem:[%s1725 + $0xa0] sm:$0xf]
        %v2117 = vld [vmem:[%s1725 + $0xa4] sm:$0x1]
        %v2118 = vld [vmem:[%s1725 + $0xa8] sm:$0xf]
        %v2119 = vld [vmem:[%s1725 + $0xac] sm:$0xf]
        %v2120 = vld [vmem:[%s1725 + $0xb0] sm:$0x1]
        %v2121 = vld [vmem:[%s1725 + $0xb4] sm:$0xf]
        %v2122 = vld [vmem:[%s1725 + $0xb8] sm:$0xf]
        %v2123 = vld [vmem:[%s1725 + $0xbc] sm:$0x1]
        %v2125 = vshrl.u32 %v2076, 16
        %v2127 = vrot.slane %v2125, 4
        %v2128 = vshll.u32 %v2076, 16
        %v2130 = vrot.slane %v2128, 5
        %v2131 = vor.u32 %v2127, %v2130
        %v2132 = vrot.slane %v2131, 4
        %v2134 = vshll.u32 %v2077, 16
        %v2136 = vrot.slane %v2134, 5
        %v2137 = vsel %vm557, %v2132, %v2136
        %v2138 = vshrl.u32 %v2077, 16
        %v2140 = vrot.slane %v2138, 4
        %v2141 = vor.u32 %v2140, %v2136
        %v2142 = vrot.slane %v2141, 4
        %v2144 = vshll.u32 %v2078, 16
        %v2146 = vrot.slane %v2144, 5
        %v2147 = vsel %vm557, %v2142, %v2146
        %v2149 = vshrl.u32 %v2079, 16
        %v2151 = vrot.slane %v2149, 4
        %v2152 = vshll.u32 %v2079, 16
        %v2154 = vrot.slane %v2152, 5
        %v2155 = vor.u32 %v2151, %v2154
        %v2156 = vrot.slane %v2155, 4
        %v2158 = vshll.u32 %v2080, 16
        %v2160 = vrot.slane %v2158, 5
        %v2161 = vsel %vm557, %v2156, %v2160
        %v2162 = vshrl.u32 %v2080, 16
        %v2164 = vrot.slane %v2162, 4
        %v2165 = vor.u32 %v2164, %v2160
        %v2166 = vrot.slane %v2165, 4
        %v2168 = vshll.u32 %v2081, 16
        %v2170 = vrot.slane %v2168, 5
        %v2171 = vsel %vm557, %v2166, %v2170
        %v2173 = vshrl.u32 %v2082, 16
        %v2175 = vrot.slane %v2173, 4
        %v2176 = vshll.u32 %v2082, 16
        %v2178 = vrot.slane %v2176, 5
        %v2179 = vor.u32 %v2175, %v2178
        %v2180 = vrot.slane %v2179, 4
        %v2182 = vshll.u32 %v2083, 16
        %v2184 = vrot.slane %v2182, 5
        %v2185 = vsel %vm557, %v2180, %v2184
        %v2186 = vshrl.u32 %v2083, 16
        %v2188 = vrot.slane %v2186, 4
        %v2189 = vor.u32 %v2188, %v2184
        %v2190 = vrot.slane %v2189, 4
        %v2192 = vshll.u32 %v2084, 16
        %v2194 = vrot.slane %v2192, 5
        %v2195 = vsel %vm557, %v2190, %v2194
        %v2197 = vshrl.u32 %v2085, 16
        %v2199 = vrot.slane %v2197, 4
        %v2200 = vshll.u32 %v2085, 16
        %v2202 = vrot.slane %v2200, 5
        %v2203 = vor.u32 %v2199, %v2202
        %v2204 = vrot.slane %v2203, 4
        %v2206 = vshll.u32 %v2086, 16
        %v2208 = vrot.slane %v2206, 5
        %v2209 = vsel %vm557, %v2204, %v2208
        %v2210 = vshrl.u32 %v2086, 16
        %v2212 = vrot.slane %v2210, 4
        %v2213 = vor.u32 %v2212, %v2208
        %v2214 = vrot.slane %v2213, 4
        %v2216 = vshll.u32 %v2087, 16
        %v2218 = vrot.slane %v2216, 5
        %v2219 = vsel %vm557, %v2214, %v2218
        %v2221 = vshrl.u32 %v2088, 16
        %v2223 = vrot.slane %v2221, 4
        %v2224 = vshll.u32 %v2088, 16
        %v2226 = vrot.slane %v2224, 5
        %v2227 = vor.u32 %v2223, %v2226
        %v2228 = vrot.slane %v2227, 4
        %v2230 = vshll.u32 %v2089, 16
        %v2232 = vrot.slane %v2230, 5
        %v2233 = vsel %vm557, %v2228, %v2232
        %v2234 = vshrl.u32 %v2089, 16
        %v2236 = vrot.slane %v2234, 4
        %v2237 = vor.u32 %v2236, %v2232
        %v2238 = vrot.slane %v2237, 4
        %v2240 = vshll.u32 %v2090, 16
        %v2242 = vrot.slane %v2240, 5
        %v2243 = vsel %vm557, %v2238, %v2242
        %v2245 = vshrl.u32 %v2091, 16
        %v2247 = vrot.slane %v2245, 4
        %v2248 = vshll.u32 %v2091, 16
        %v2250 = vrot.slane %v2248, 5
        %v2251 = vor.u32 %v2247, %v2250
        %v2252 = vrot.slane %v2251, 4
        %v2254 = vshll.u32 %v2092, 16
        %v2256 = vrot.slane %v2254, 5
        %v2257 = vsel %vm557, %v2252, %v2256
        %v2258 = vshrl.u32 %v2092, 16
        %v2260 = vrot.slane %v2258, 4
        %v2261 = vor.u32 %v2260, %v2256
        %v2262 = vrot.slane %v2261, 4
        %v2264 = vshll.u32 %v2093, 16
        %v2266 = vrot.slane %v2264, 5
        %v2267 = vsel %vm557, %v2262, %v2266
        %v2269 = vshrl.u32 %v2094, 16
        %v2271 = vrot.slane %v2269, 4
        %v2272 = vshll.u32 %v2094, 16
        %v2274 = vrot.slane %v2272, 5
        %v2275 = vor.u32 %v2271, %v2274
        %v2276 = vrot.slane %v2275, 4
        %v2278 = vshll.u32 %v2095, 16
        %v2280 = vrot.slane %v2278, 5
        %v2281 = vsel %vm557, %v2276, %v2280
        %v2282 = vshrl.u32 %v2095, 16
        %v2284 = vrot.slane %v2282, 4
        %v2285 = vor.u32 %v2284, %v2280
        %v2286 = vrot.slane %v2285, 4
        %v2288 = vshll.u32 %v2096, 16
        %v2290 = vrot.slane %v2288, 5
        %v2291 = vsel %vm557, %v2286, %v2290
        %v2293 = vshrl.u32 %v2097, 16
        %v2295 = vrot.slane %v2293, 4
        %v2296 = vshll.u32 %v2097, 16
        %v2298 = vrot.slane %v2296, 5
        %v2299 = vor.u32 %v2295, %v2298
        %v2300 = vrot.slane %v2299, 4
        %v2302 = vshll.u32 %v2098, 16
        %v2304 = vrot.slane %v2302, 5
        %v2305 = vsel %vm557, %v2300, %v2304
        %v2306 = vshrl.u32 %v2098, 16
        %v2308 = vrot.slane %v2306, 4
        %v2309 = vor.u32 %v2308, %v2304
        %v2310 = vrot.slane %v2309, 4
        %v2312 = vshll.u32 %v2099, 16
        %v2314 = vrot.slane %v2312, 5
        %v2315 = vsel %vm557, %v2310, %v2314
        %v2317 = vshrl.u32 %v2100, 16
        %v2319 = vrot.slane %v2317, 4
        %v2320 = vshll.u32 %v2100, 16
        %v2322 = vrot.slane %v2320, 5
        %v2323 = vor.u32 %v2319, %v2322
        %v2324 = vrot.slane %v2323, 4
        %v2326 = vshll.u32 %v2101, 16
        %v2328 = vrot.slane %v2326, 5
        %v2329 = vsel %vm557, %v2324, %v2328
        %v2330 = vshrl.u32 %v2101, 16
        %v2332 = vrot.slane %v2330, 4
        %v2333 = vor.u32 %v2332, %v2328
        %v2334 = vrot.slane %v2333, 4
        %v2336 = vshll.u32 %v2102, 16
        %v2338 = vrot.slane %v2336, 5
        %v2339 = vsel %vm557, %v2334, %v2338
        %v2341 = vshrl.u32 %v2103, 16
        %v2343 = vrot.slane %v2341, 4
        %v2344 = vshll.u32 %v2103, 16
        %v2346 = vrot.slane %v2344, 5
        %v2347 = vor.u32 %v2343, %v2346
        %v2348 = vrot.slane %v2347, 4
        %v2350 = vshll.u32 %v2104, 16
        %v2352 = vrot.slane %v2350, 5
        %v2353 = vsel %vm557, %v2348, %v2352
        %v2354 = vshrl.u32 %v2104, 16
        %v2356 = vrot.slane %v2354, 4
        %v2357 = vor.u32 %v2356, %v2352
        %v2358 = vrot.slane %v2357, 4
        %v2360 = vshll.u32 %v2105, 16
        %v2362 = vrot.slane %v2360, 5
        %v2363 = vsel %vm557, %v2358, %v2362
        %v2365 = vshrl.u32 %v2106, 16
        %v2367 = vrot.slane %v2365, 4
        %v2368 = vshll.u32 %v2106, 16
        %v2370 = vrot.slane %v2368, 5
        %v2371 = vor.u32 %v2367, %v2370
        %v2372 = vrot.slane %v2371, 4
        %v2374 = vshll.u32 %v2107, 16
        %v2376 = vrot.slane %v2374, 5
        %v2377 = vsel %vm557, %v2372, %v2376
        %v2378 = vshrl.u32 %v2107, 16
        %v2380 = vrot.slane %v2378, 4
        %v2381 = vor.u32 %v2380, %v2376
        %v2382 = vrot.slane %v2381, 4
        %v2384 = vshll.u32 %v2108, 16
        %v2386 = vrot.slane %v2384, 5
        %v2387 = vsel %vm557, %v2382, %v2386
        %v2389 = vshrl.u32 %v2109, 16
        %v2391 = vrot.slane %v2389, 4
        %v2392 = vshll.u32 %v2109, 16
        %v2394 = vrot.slane %v2392, 5
        %v2395 = vor.u32 %v2391, %v2394
        %v2396 = vrot.slane %v2395, 4
        %v2398 = vshll.u32 %v2110, 16
        %v2400 = vrot.slane %v2398, 5
        %v2401 = vsel %vm557, %v2396, %v2400
        %v2402 = vshrl.u32 %v2110, 16
        %v2404 = vrot.slane %v2402, 4
        %v2405 = vor.u32 %v2404, %v2400
        %v2406 = vrot.slane %v2405, 4
        %v2408 = vshll.u32 %v2111, 16
        %v2410 = vrot.slane %v2408, 5
        %v2411 = vsel %vm557, %v2406, %v2410
        %v2413 = vshrl.u32 %v2112, 16
        %v2415 = vrot.slane %v2413, 4
        %v2416 = vshll.u32 %v2112, 16
        %v2418 = vrot.slane %v2416, 5
        %v2419 = vor.u32 %v2415, %v2418
        %v2420 = vrot.slane %v2419, 4
        %v2422 = vshll.u32 %v2113, 16
        %v2424 = vrot.slane %v2422, 5
        %v2425 = vsel %vm557, %v2420, %v2424
        %v2426 = vshrl.u32 %v2113, 16
        %v2428 = vrot.slane %v2426, 4
        %v2429 = vor.u32 %v2428, %v2424
        %v2430 = vrot.slane %v2429, 4
        %v2432 = vshll.u32 %v2114, 16
        %v2434 = vrot.slane %v2432, 5
        %v2435 = vsel %vm557, %v2430, %v2434
        %v2437 = vshrl.u32 %v2115, 16
        %v2439 = vrot.slane %v2437, 4
        %v2440 = vshll.u32 %v2115, 16
        %v2442 = vrot.slane %v2440, 5
        %v2443 = vor.u32 %v2439, %v2442
        %v2444 = vrot.slane %v2443, 4
        %v2446 = vshll.u32 %v2116, 16
        %v2448 = vrot.slane %v2446, 5
        %v2449 = vsel %vm557, %v2444, %v2448
        %v2450 = vshrl.u32 %v2116, 16
        %v2452 = vrot.slane %v2450, 4
        %v2453 = vor.u32 %v2452, %v2448
        %v2454 = vrot.slane %v2453, 4
        %v2456 = vshll.u32 %v2117, 16
        %v2458 = vrot.slane %v2456, 5
        %v2459 = vsel %vm557, %v2454, %v2458
        %v2461 = vshrl.u32 %v2118, 16
        %v2463 = vrot.slane %v2461, 4
        %v2464 = vshll.u32 %v2118, 16
        %v2466 = vrot.slane %v2464, 5
        %v2467 = vor.u32 %v2463, %v2466
        %v2468 = vrot.slane %v2467, 4
        %v2470 = vshll.u32 %v2119, 16
        %v2472 = vrot.slane %v2470, 5
        %v2473 = vsel %vm557, %v2468, %v2472
        %v2474 = vshrl.u32 %v2119, 16
        %v2476 = vrot.slane %v2474, 4
        %v2477 = vor.u32 %v2476, %v2472
        %v2478 = vrot.slane %v2477, 4
        %v2480 = vshll.u32 %v2120, 16
        %v2482 = vrot.slane %v2480, 5
        %v2483 = vsel %vm557, %v2478, %v2482
        %v2485 = vshrl.u32 %v2121, 16
        %v2487 = vrot.slane %v2485, 4
        %v2488 = vshll.u32 %v2121, 16
        %v2490 = vrot.slane %v2488, 5
        %v2491 = vor.u32 %v2487, %v2490
        %v2492 = vrot.slane %v2491, 4
        %v2494 = vshll.u32 %v2122, 16
        %v2496 = vrot.slane %v2494, 5
        %v2497 = vsel %vm557, %v2492, %v2496
        %v2498 = vshrl.u32 %v2122, 16
        %v2500 = vrot.slane %v2498, 4
        %v2501 = vor.u32 %v2500, %v2496
        %v2502 = vrot.slane %v2501, 4
        %v2504 = vshll.u32 %v2123, 16
        %v2506 = vrot.slane %v2504, 5
        %v2507 = vsel %vm557, %v2502, %v2506
        %s2508 = scalar_lea.vmem %s1, 8
        %v2509 = vld [vmem:[%s2508] sm:$0x3]
        %v2510 = vunpack.c.l.b16 %v2137
        %v2511 = vunpack.c.l.b16 %v2147
        %v2512 = vunpack.c.l.b16 %v2161
        %v2513 = vunpack.c.l.b16 %v2171
        %v2514 = vunpack.c.l.b16 %v2185
        %v2515 = vunpack.c.l.b16 %v2195
        %v2516 = vunpack.c.l.b16 %v2209
        %v2517 = vunpack.c.l.b16 %v2219
        %v2518 = vunpack.c.l.b16 %v2233
        %v2519 = vunpack.c.l.b16 %v2243
        %v2520 = vunpack.c.l.b16 %v2257
        %v2521 = vunpack.c.l.b16 %v2267
        %v2522 = vunpack.c.l.b16 %v2281
        %v2523 = vunpack.c.l.b16 %v2291
        %v2524 = vunpack.c.l.b16 %v2305
        %v2525 = vunpack.c.l.b16 %v2315
        %v2526 = vunpack.c.l.b16 %v2329
        %v2527 = vunpack.c.l.b16 %v2339
        %v2528 = vunpack.c.l.b16 %v2353
        %v2529 = vunpack.c.l.b16 %v2363
        %v2530 = vunpack.c.l.b16 %v2377
        %v2531 = vunpack.c.l.b16 %v2387
        %v2532 = vunpack.c.l.b16 %v2401
        %v2533 = vunpack.c.l.b16 %v2411
        %v2534 = vunpack.c.l.b16 %v2425
        %v2535 = vunpack.c.l.b16 %v2435
        %v2536 = vunpack.c.l.b16 %v2449
        %v2537 = vunpack.c.l.b16 %v2459
        %v2538 = vunpack.c.l.b16 %v2473
        %v2539 = vunpack.c.l.b16 %v2483
        %v2540 = vunpack.c.l.b16 %v2497
        %v2541 = vunpack.c.l.b16 %v2507
        %v2542 = vpack.c.b16 %v2511, %v2510
        %v2543 = vpack.c.b16 %v2513, %v2512
        %v2544 = vpack.c.b16 %v2515, %v2514
        %v2545 = vpack.c.b16 %v2517, %v2516
        %v2546 = vpack.c.b16 %v2519, %v2518
        %v2547 = vpack.c.b16 %v2521, %v2520
        %v2548 = vpack.c.b16 %v2523, %v2522
        %v2549 = vpack.c.b16 %v2525, %v2524
        %v2550 = vpack.c.b16 %v2527, %v2526
        %v2551 = vpack.c.b16 %v2529, %v2528
        %v2552 = vpack.c.b16 %v2531, %v2530
        %v2553 = vpack.c.b16 %v2533, %v2532
        %v2554 = vpack.c.b16 %v2535, %v2534
        %v2555 = vpack.c.b16 %v2537, %v2536
        %v2556 = vpack.c.b16 %v2539, %v2538
        %v2557 = vpack.c.b16 %v2541, %v2540
        %v2559 = vsel %vm332, %v2542, 0
        %v2562 = vsel %vm332, %v2543, 0
        %v2565 = vsel %vm332, %v2544, 0
        %v2568 = vsel %vm332, %v2545, 0
        %v2571 = vsel %vm332, %v2546, 0
        %v2574 = vsel %vm332, %v2547, 0
        %v2577 = vsel %vm332, %v2548, 0
        %v2580 = vsel %vm332, %v2549, 0
        %v2583 = vsel %vm332, %v2550, 0
        %v2586 = vsel %vm332, %v2551, 0
        %v2589 = vsel %vm332, %v2552, 0
        %v2592 = vsel %vm332, %v2553, 0
        %v2595 = vsel %vm332, %v2554, 0
        %v2598 = vsel %vm332, %v2555, 0
        %v2601 = vsel %vm332, %v2556, 0
        %v2604 = vsel %vm332, %v2557, 0
        %v2607 = vsel %vm381, %v2509, 0
        %2609 = vmatpush.bf16.msra.mxu0 0
        %2610 = vmatpush.bf16.msra.mxu0 0
        %2611 = vmatpush.bf16.msra.mxu0 0
        %2612 = vmatpush.bf16.msra.mxu0 0
        %2613 = vmatpush.bf16.msra.mxu0 0
        %2614 = vmatpush.bf16.msra.mxu0 0
        %2615 = vmatpush.bf16.msra.mxu0 0
        %2616 = vmatpush.bf16.msra.mxu0 %v2607
        %2617 = vmatmul.bf16.gmra.mxu0 %v2559
        %v2618 = vpop.f32.mrf.mxu0
        %v2619 = vadd.f32 0.0, %v2618
        %v2620 = vpop.f32.mrf.mxu0
        %v2621 = vadd.f32 0.0, %v2620
        %2622 = vmatmul.bf16.gmra.mxu0 %v2562
        %v2623 = vpop.f32.mrf.mxu0
        %v2624 = vadd.f32 0.0, %v2623
        %v2625 = vpop.f32.mrf.mxu0
        %v2626 = vadd.f32 0.0, %v2625
        %2627 = vmatmul.bf16.gmra.mxu0 %v2565
        %v2628 = vpop.f32.mrf.mxu0
        %v2629 = vadd.f32 0.0, %v2628
        %v2630 = vpop.f32.mrf.mxu0
        %v2631 = vadd.f32 0.0, %v2630
        %2632 = vmatmul.bf16.gmra.mxu0 %v2568
        %v2633 = vpop.f32.mrf.mxu0
        %v2634 = vadd.f32 0.0, %v2633
        %v2635 = vpop.f32.mrf.mxu0
        %v2636 = vadd.f32 0.0, %v2635
        %2637 = vmatmul.bf16.gmra.mxu0 %v2571
        %v2638 = vpop.f32.mrf.mxu0
        %v2639 = vadd.f32 0.0, %v2638
        %v2640 = vpop.f32.mrf.mxu0
        %v2641 = vadd.f32 0.0, %v2640
        %2642 = vmatmul.bf16.gmra.mxu0 %v2574
        %v2643 = vpop.f32.mrf.mxu0
        %v2644 = vadd.f32 0.0, %v2643
        %v2645 = vpop.f32.mrf.mxu0
        %v2646 = vadd.f32 0.0, %v2645
        %2647 = vmatmul.bf16.gmra.mxu0 %v2577
        %v2648 = vpop.f32.mrf.mxu0
        %v2649 = vadd.f32 0.0, %v2648
        %v2650 = vpop.f32.mrf.mxu0
        %v2651 = vadd.f32 0.0, %v2650
        %2652 = vmatmul.bf16.gmra.mxu0 %v2580
        %v2653 = vpop.f32.mrf.mxu0
        %v2654 = vadd.f32 0.0, %v2653
        %v2655 = vpop.f32.mrf.mxu0
        %v2656 = vadd.f32 0.0, %v2655
        %2657 = vmatmul.bf16.gmra.mxu0 %v2583
        %v2658 = vpop.f32.mrf.mxu0
        %v2659 = vadd.f32 0.0, %v2658
        %v2660 = vpop.f32.mrf.mxu0
        %v2661 = vadd.f32 0.0, %v2660
        %2662 = vmatmul.bf16.gmra.mxu0 %v2586
        %v2663 = vpop.f32.mrf.mxu0
        %v2664 = vadd.f32 0.0, %v2663
        %v2665 = vpop.f32.mrf.mxu0
        %v2666 = vadd.f32 0.0, %v2665
        %2667 = vmatmul.bf16.gmra.mxu0 %v2589
        %v2668 = vpop.f32.mrf.mxu0
        %v2669 = vadd.f32 0.0, %v2668
        %v2670 = vpop.f32.mrf.mxu0
        %v2671 = vadd.f32 0.0, %v2670
        %2672 = vmatmul.bf16.gmra.mxu0 %v2592
        %v2673 = vpop.f32.mrf.mxu0
        %v2674 = vadd.f32 0.0, %v2673
        %v2675 = vpop.f32.mrf.mxu0
        %v2676 = vadd.f32 0.0, %v2675
        %2677 = vmatmul.bf16.gmra.mxu0 %v2595
        %v2678 = vpop.f32.mrf.mxu0
        %v2679 = vadd.f32 0.0, %v2678
        %v2680 = vpop.f32.mrf.mxu0
        %v2681 = vadd.f32 0.0, %v2680
        %2682 = vmatmul.bf16.gmra.mxu0 %v2598
        %v2683 = vpop.f32.mrf.mxu0
        %v2684 = vadd.f32 0.0, %v2683
        %v2685 = vpop.f32.mrf.mxu0
        %v2686 = vadd.f32 0.0, %v2685
        %2687 = vmatmul.bf16.gmra.mxu0 %v2601
        %v2688 = vpop.f32.mrf.mxu0
        %v2689 = vadd.f32 0.0, %v2688
        %v2690 = vpop.f32.mrf.mxu0
        %v2691 = vadd.f32 0.0, %v2690
        %2692 = vmatmul.bf16.gmra.mxu0 %v2604
        %v2693 = vpop.f32.mrf.mxu0
        %v2694 = vadd.f32 0.0, %v2693
        %v2695 = vpop.f32.mrf.mxu0
        %v2696 = vadd.f32 0.0, %v2695
        %2697 = vdwg.mxu0
        %v2698 = vld [vmem:[#allocation2] sm:$0xff]
        %v2699 = vld [vmem:[#allocation2 + $0x8] sm:$0xff]
        %v2700 = vld [vmem:[#allocation2 + $0x10] sm:$0xff]
        %v2701 = vld [vmem:[#allocation2 + $0x18] sm:$0xff]
        %v2702 = vld [vmem:[#allocation2 + $0x20] sm:$0xff]
        %v2703 = vld [vmem:[#allocation2 + $0x28] sm:$0xff]
        %v2704 = vld [vmem:[#allocation2 + $0x30] sm:$0xff]
        %v2705 = vld [vmem:[#allocation2 + $0x38] sm:$0xff]
        %v2706 = vld [vmem:[#allocation2 + $0x40] sm:$0xff]
        %v2707 = vld [vmem:[#allocation2 + $0x48] sm:$0xff]
        %v2708 = vld [vmem:[#allocation2 + $0x50] sm:$0xff]
        %v2709 = vld [vmem:[#allocation2 + $0x58] sm:$0xff]
        %v2710 = vld [vmem:[#allocation2 + $0x60] sm:$0xff]
        %v2711 = vld [vmem:[#allocation2 + $0x68] sm:$0xff]
        %v2712 = vld [vmem:[#allocation2 + $0x70] sm:$0xff]
        %v2713 = vld [vmem:[#allocation2 + $0x78] sm:$0xff]
        %v2714 = vld [vmem:[#allocation2 + $0x80] sm:$0xff]
        %v2715 = vld [vmem:[#allocation2 + $0x88] sm:$0xff]
        %v2716 = vld [vmem:[#allocation2 + $0x90] sm:$0xff]
        %v2717 = vld [vmem:[#allocation2 + $0x98] sm:$0xff]
        %v2718 = vld [vmem:[#allocation2 + $0xa0] sm:$0xff]
        %v2719 = vld [vmem:[#allocation2 + $0xa8] sm:$0xff]
        %v2720 = vld [vmem:[#allocation2 + $0xb0] sm:$0xff]
        %v2721 = vld [vmem:[#allocation2 + $0xb8] sm:$0xff]
        %v2722 = vld [vmem:[#allocation2 + $0xc0] sm:$0xff]
        %v2723 = vld [vmem:[#allocation2 + $0xc8] sm:$0xff]
        %v2724 = vld [vmem:[#allocation2 + $0xd0] sm:$0xff]
        %v2725 = vld [vmem:[#allocation2 + $0xd8] sm:$0xff]
        %v2726 = vld [vmem:[#allocation2 + $0xe0] sm:$0xff]
        %v2727 = vld [vmem:[#allocation2 + $0xe8] sm:$0xff]
        %v2728 = vld [vmem:[#allocation2 + $0xf0] sm:$0xff]
        %v2729 = vld [vmem:[#allocation2 + $0xf8] sm:$0xff]
        %v2730 = vadd.f32 %v2698, %v2619
        %v2731 = vadd.f32 %v2699, %v2621
        %v2732 = vadd.f32 %v2700, %v2624
        %v2733 = vadd.f32 %v2701, %v2626
        %v2734 = vadd.f32 %v2702, %v2629
        %v2735 = vadd.f32 %v2703, %v2631
        %v2736 = vadd.f32 %v2704, %v2634
        %v2737 = vadd.f32 %v2705, %v2636
        %v2738 = vadd.f32 %v2706, %v2639
        %v2739 = vadd.f32 %v2707, %v2641
        %v2740 = vadd.f32 %v2708, %v2644
        %v2741 = vadd.f32 %v2709, %v2646
        %v2742 = vadd.f32 %v2710, %v2649
        %v2743 = vadd.f32 %v2711, %v2651
        %v2744 = vadd.f32 %v2712, %v2654
        %v2745 = vadd.f32 %v2713, %v2656
        %v2746 = vadd.f32 %v2714, %v2659
        %v2747 = vadd.f32 %v2715, %v2661
        %v2748 = vadd.f32 %v2716, %v2664
        %v2749 = vadd.f32 %v2717, %v2666
        %v2750 = vadd.f32 %v2718, %v2669
        %v2751 = vadd.f32 %v2719, %v2671
        %v2752 = vadd.f32 %v2720, %v2674
        %v2753 = vadd.f32 %v2721, %v2676
        %v2754 = vadd.f32 %v2722, %v2679
        %v2755 = vadd.f32 %v2723, %v2681
        %v2756 = vadd.f32 %v2724, %v2684
        %v2757 = vadd.f32 %v2725, %v2686
        %v2758 = vadd.f32 %v2726, %v2689
        %v2759 = vadd.f32 %v2727, %v2691
        %v2760 = vadd.f32 %v2728, %v2694
        %v2761 = vadd.f32 %v2729, %v2696
        %2762 = vst.msk [vmem:[#allocation2] sm:$0xff] %vm474, %v2730
        %2763 = vst.msk [vmem:[#allocation2 + $0x8] sm:$0xff] %vm474, %v2731
        %2764 = vst.msk [vmem:[#allocation2 + $0x10] sm:$0xff] %vm474, %v2732
        %2765 = vst.msk [vmem:[#allocation2 + $0x18] sm:$0xff] %vm474, %v2733
        %2766 = vst.msk [vmem:[#allocation2 + $0x20] sm:$0xff] %vm474, %v2734
        %2767 = vst.msk [vmem:[#allocation2 + $0x28] sm:$0xff] %vm474, %v2735
        %2768 = vst.msk [vmem:[#allocation2 + $0x30] sm:$0xff] %vm474, %v2736
        %2769 = vst.msk [vmem:[#allocation2 + $0x38] sm:$0xff] %vm474, %v2737
        %2770 = vst.msk [vmem:[#allocation2 + $0x40] sm:$0xff] %vm474, %v2738
        %2771 = vst.msk [vmem:[#allocation2 + $0x48] sm:$0xff] %vm474, %v2739
        %2772 = vst.msk [vmem:[#allocation2 + $0x50] sm:$0xff] %vm474, %v2740
        %2773 = vst.msk [vmem:[#allocation2 + $0x58] sm:$0xff] %vm474, %v2741
        %2774 = vst.msk [vmem:[#allocation2 + $0x60] sm:$0xff] %vm474, %v2742
        %2775 = vst.msk [vmem:[#allocation2 + $0x68] sm:$0xff] %vm474, %v2743
        %2776 = vst.msk [vmem:[#allocation2 + $0x70] sm:$0xff] %vm474, %v2744
        %2777 = vst.msk [vmem:[#allocation2 + $0x78] sm:$0xff] %vm474, %v2745
        %2778 = vst.msk [vmem:[#allocation2 + $0x80] sm:$0xff] %vm474, %v2746
        %2779 = vst.msk [vmem:[#allocation2 + $0x88] sm:$0xff] %vm474, %v2747
        %2780 = vst.msk [vmem:[#allocation2 + $0x90] sm:$0xff] %vm474, %v2748
        %2781 = vst.msk [vmem:[#allocation2 + $0x98] sm:$0xff] %vm474, %v2749
        %2782 = vst.msk [vmem:[#allocation2 + $0xa0] sm:$0xff] %vm474, %v2750
        %2783 = vst.msk [vmem:[#allocation2 + $0xa8] sm:$0xff] %vm474, %v2751
        %2784 = vst.msk [vmem:[#allocation2 + $0xb0] sm:$0xff] %vm474, %v2752
        %2785 = vst.msk [vmem:[#allocation2 + $0xb8] sm:$0xff] %vm474, %v2753
        %2786 = vst.msk [vmem:[#allocation2 + $0xc0] sm:$0xff] %vm474, %v2754
        %2787 = vst.msk [vmem:[#allocation2 + $0xc8] sm:$0xff] %vm474, %v2755
        %2788 = vst.msk [vmem:[#allocation2 + $0xd0] sm:$0xff] %vm474, %v2756
        %2789 = vst.msk [vmem:[#allocation2 + $0xd8] sm:$0xff] %vm474, %v2757
        %2790 = vst.msk [vmem:[#allocation2 + $0xe0] sm:$0xff] %vm474, %v2758
        %2791 = vst.msk [vmem:[#allocation2 + $0xe8] sm:$0xff] %vm474, %v2759
        %2792 = vst.msk [vmem:[#allocation2 + $0xf0] sm:$0xff] %vm474, %v2760
        %2793 = vst.msk [vmem:[#allocation2 + $0xf8] sm:$0xff] %vm474, %v2761
        %v2794 = vld [vmem:[%s1725] sm:$0xe]
        %v2795 = vld [vmem:[%s1725 + $0x4] sm:$0xf]
        %v2796 = vld [vmem:[%s1725 + $0x8] sm:$0x1]
        %v2797 = vld [vmem:[%s1725 + $0xc] sm:$0xe]
        %v2798 = vld [vmem:[%s1725 + $0x10] sm:$0xf]
        %v2799 = vld [vmem:[%s1725 + $0x14] sm:$0x1]
        %v2800 = vld [vmem:[%s1725 + $0x18] sm:$0xe]
        %v2801 = vld [vmem:[%s1725 + $0x1c] sm:$0xf]
        %v2802 = vld [vmem:[%s1725 + $0x20] sm:$0x1]
        %v2803 = vld [vmem:[%s1725 + $0x24] sm:$0xe]
        %v2804 = vld [vmem:[%s1725 + $0x28] sm:$0xf]
        %v2805 = vld [vmem:[%s1725 + $0x2c] sm:$0x1]
        %v2806 = vld [vmem:[%s1725 + $0x30] sm:$0xe]
        %v2807 = vld [vmem:[%s1725 + $0x34] sm:$0xf]
        %v2808 = vld [vmem:[%s1725 + $0x38] sm:$0x1]
        %v2809 = vld [vmem:[%s1725 + $0x3c] sm:$0xe]
        %v2810 = vld [vmem:[%s1725 + $0x40] sm:$0xf]
        %v2811 = vld [vmem:[%s1725 + $0x44] sm:$0x1]
        %v2812 = vld [vmem:[%s1725 + $0x48] sm:$0xe]
        %v2813 = vld [vmem:[%s1725 + $0x4c] sm:$0xf]
        %v2814 = vld [vmem:[%s1725 + $0x50] sm:$0x1]
        %v2815 = vld [vmem:[%s1725 + $0x54] sm:$0xe]
        %v2816 = vld [vmem:[%s1725 + $0x58] sm:$0xf]
        %v2817 = vld [vmem:[%s1725 + $0x5c] sm:$0x1]
        %v2818 = vld [vmem:[%s1725 + $0x60] sm:$0xe]
        %v2819 = vld [vmem:[%s1725 + $0x64] sm:$0xf]
        %v2820 = vld [vmem:[%s1725 + $0x68] sm:$0x1]
        %v2821 = vld [vmem:[%s1725 + $0x6c] sm:$0xe]
        %v2822 = vld [vmem:[%s1725 + $0x70] sm:$0xf]
        %v2823 = vld [vmem:[%s1725 + $0x74] sm:$0x1]
        %v2824 = vld [vmem:[%s1725 + $0x78] sm:$0xe]
        %v2825 = vld [vmem:[%s1725 + $0x7c] sm:$0xf]
        %v2826 = vld [vmem:[%s1725 + $0x80] sm:$0x1]
        %v2827 = vld [vmem:[%s1725 + $0x84] sm:$0xe]
        %v2828 = vld [vmem:[%s1725 + $0x88] sm:$0xf]
        %v2829 = vld [vmem:[%s1725 + $0x8c] sm:$0x1]
        %v2830 = vld [vmem:[%s1725 + $0x90] sm:$0xe]
        %v2831 = vld [vmem:[%s1725 + $0x94] sm:$0xf]
        %v2832 = vld [vmem:[%s1725 + $0x98] sm:$0x1]
        %v2833 = vld [vmem:[%s1725 + $0x9c] sm:$0xe]
        %v2834 = vld [vmem:[%s1725 + $0xa0] sm:$0xf]
        %v2835 = vld [vmem:[%s1725 + $0xa4] sm:$0x1]
        %v2836 = vld [vmem:[%s1725 + $0xa8] sm:$0xe]
        %v2837 = vld [vmem:[%s1725 + $0xac] sm:$0xf]
        %v2838 = vld [vmem:[%s1725 + $0xb0] sm:$0x1]
        %v2839 = vld [vmem:[%s1725 + $0xb4] sm:$0xe]
        %v2840 = vld [vmem:[%s1725 + $0xb8] sm:$0xf]
        %v2841 = vld [vmem:[%s1725 + $0xbc] sm:$0x1]
        %v2890 = vrot.slane %v2794, 5
        %v2891 = vrot.slane %v2890, 4
        %v2892 = vrot.slane %v2795, 5
        %v2893 = vsel %vm1326, %v2891, %v2892
        %v2894 = vrot.slane %v2892, 4
        %v2895 = vrot.slane %v2796, 5
        %v2896 = vsel %vm1326, %v2894, %v2895
        %v2897 = vrot.slane %v2797, 5
        %v2898 = vrot.slane %v2897, 4
        %v2899 = vrot.slane %v2798, 5
        %v2900 = vsel %vm1326, %v2898, %v2899
        %v2901 = vrot.slane %v2899, 4
        %v2902 = vrot.slane %v2799, 5
        %v2903 = vsel %vm1326, %v2901, %v2902
        %v2904 = vrot.slane %v2800, 5
        %v2905 = vrot.slane %v2904, 4
        %v2906 = vrot.slane %v2801, 5
        %v2907 = vsel %vm1326, %v2905, %v2906
        %v2908 = vrot.slane %v2906, 4
        %v2909 = vrot.slane %v2802, 5
        %v2910 = vsel %vm1326, %v2908, %v2909
        %v2911 = vrot.slane %v2803, 5
        %v2912 = vrot.slane %v2911, 4
        %v2913 = vrot.slane %v2804, 5
        %v2914 = vsel %vm1326, %v2912, %v2913
        %v2915 = vrot.slane %v2913, 4
        %v2916 = vrot.slane %v2805, 5
        %v2917 = vsel %vm1326, %v2915, %v2916
        %v2918 = vrot.slane %v2806, 5
        %v2919 = vrot.slane %v2918, 4
        %v2920 = vrot.slane %v2807, 5
        %v2921 = vsel %vm1326, %v2919, %v2920
        %v2922 = vrot.slane %v2920, 4
        %v2923 = vrot.slane %v2808, 5
        %v2924 = vsel %vm1326, %v2922, %v2923
        %v2925 = vrot.slane %v2809, 5
        %v2926 = vrot.slane %v2925, 4
        %v2927 = vrot.slane %v2810, 5
        %v2928 = vsel %vm1326, %v2926, %v2927
        %v2929 = vrot.slane %v2927, 4
        %v2930 = vrot.slane %v2811, 5
        %v2931 = vsel %vm1326, %v2929, %v2930
        %v2932 = vrot.slane %v2812, 5
        %v2933 = vrot.slane %v2932, 4
        %v2934 = vrot.slane %v2813, 5
        %v2935 = vsel %vm1326, %v2933, %v2934
        %v2936 = vrot.slane %v2934, 4
        %v2937 = vrot.slane %v2814, 5
        %v2938 = vsel %vm1326, %v2936, %v2937
        %v2939 = vrot.slane %v2815, 5
        %v2940 = vrot.slane %v2939, 4
        %v2941 = vrot.slane %v2816, 5
        %v2942 = vsel %vm1326, %v2940, %v2941
        %v2943 = vrot.slane %v2941, 4
        %v2944 = vrot.slane %v2817, 5
        %v2945 = vsel %vm1326, %v2943, %v2944
        %v2946 = vrot.slane %v2818, 5
        %v2947 = vrot.slane %v2946, 4
        %v2948 = vrot.slane %v2819, 5
        %v2949 = vsel %vm1326, %v2947, %v2948
        %v2950 = vrot.slane %v2948, 4
        %v2951 = vrot.slane %v2820, 5
        %v2952 = vsel %vm1326, %v2950, %v2951
        %v2953 = vrot.slane %v2821, 5
        %v2954 = vrot.slane %v2953, 4
        %v2955 = vrot.slane %v2822, 5
        %v2956 = vsel %vm1326, %v2954, %v2955
        %v2957 = vrot.slane %v2955, 4
        %v2958 = vrot.slane %v2823, 5
        %v2959 = vsel %vm1326, %v2957, %v2958
        %v2960 = vrot.slane %v2824, 5
        %v2961 = vrot.slane %v2960, 4
        %v2962 = vrot.slane %v2825, 5
        %v2963 = vsel %vm1326, %v2961, %v2962
        %v2964 = vrot.slane %v2962, 4
        %v2965 = vrot.slane %v2826, 5
        %v2966 = vsel %vm1326, %v2964, %v2965
        %v2967 = vrot.slane %v2827, 5
        %v2968 = vrot.slane %v2967, 4
        %v2969 = vrot.slane %v2828, 5
        %v2970 = vsel %vm1326, %v2968, %v2969
        %v2971 = vrot.slane %v2969, 4
        %v2972 = vrot.slane %v2829, 5
        %v2973 = vsel %vm1326, %v2971, %v2972
        %v2974 = vrot.slane %v2830, 5
        %v2975 = vrot.slane %v2974, 4
        %v2976 = vrot.slane %v2831, 5
        %v2977 = vsel %vm1326, %v2975, %v2976
        %v2978 = vrot.slane %v2976, 4
        %v2979 = vrot.slane %v2832, 5
        %v2980 = vsel %vm1326, %v2978, %v2979
        %v2981 = vrot.slane %v2833, 5
        %v2982 = vrot.slane %v2981, 4
        %v2983 = vrot.slane %v2834, 5
        %v2984 = vsel %vm1326, %v2982, %v2983
        %v2985 = vrot.slane %v2983, 4
        %v2986 = vrot.slane %v2835, 5
        %v2987 = vsel %vm1326, %v2985, %v2986
        %v2988 = vrot.slane %v2836, 5
        %v2989 = vrot.slane %v2988, 4
        %v2990 = vrot.slane %v2837, 5
        %v2991 = vsel %vm1326, %v2989, %v2990
        %v2992 = vrot.slane %v2990, 4
        %v2993 = vrot.slane %v2838, 5
        %v2994 = vsel %vm1326, %v2992, %v2993
        %v2995 = vrot.slane %v2839, 5
        %v2996 = vrot.slane %v2995, 4
        %v2997 = vrot.slane %v2840, 5
        %v2998 = vsel %vm1326, %v2996, %v2997
        %v2999 = vrot.slane %v2997, 4
        %v3000 = vrot.slane %v2841, 5
        %v3001 = vsel %vm1326, %v2999, %v3000
        %s3002 = scalar_lea.vmem %s1, 10
        %v3003 = vld [vmem:[%s3002] sm:$0x3]
        %v3004 = vunpack.c.l.b16 %v2893
        %v3005 = vunpack.c.l.b16 %v2896
        %v3006 = vunpack.c.l.b16 %v2900
        %v3007 = vunpack.c.l.b16 %v2903
        %v3008 = vunpack.c.l.b16 %v2907
        %v3009 = vunpack.c.l.b16 %v2910
        %v3010 = vunpack.c.l.b16 %v2914
        %v3011 = vunpack.c.l.b16 %v2917
        %v3012 = vunpack.c.l.b16 %v2921
        %v3013 = vunpack.c.l.b16 %v2924
        %v3014 = vunpack.c.l.b16 %v2928
        %v3015 = vunpack.c.l.b16 %v2931
        %v3016 = vunpack.c.l.b16 %v2935
        %v3017 = vunpack.c.l.b16 %v2938
        %v3018 = vunpack.c.l.b16 %v2942
        %v3019 = vunpack.c.l.b16 %v2945
        %v3020 = vunpack.c.l.b16 %v2949
        %v3021 = vunpack.c.l.b16 %v2952
        %v3022 = vunpack.c.l.b16 %v2956
        %v3023 = vunpack.c.l.b16 %v2959
        %v3024 = vunpack.c.l.b16 %v2963
        %v3025 = vunpack.c.l.b16 %v2966
        %v3026 = vunpack.c.l.b16 %v2970
        %v3027 = vunpack.c.l.b16 %v2973
        %v3028 = vunpack.c.l.b16 %v2977
        %v3029 = vunpack.c.l.b16 %v2980
        %v3030 = vunpack.c.l.b16 %v2984
        %v3031 = vunpack.c.l.b16 %v2987
        %v3032 = vunpack.c.l.b16 %v2991
        %v3033 = vunpack.c.l.b16 %v2994
        %v3034 = vunpack.c.l.b16 %v2998
        %v3035 = vunpack.c.l.b16 %v3001
        %v3036 = vpack.c.b16 %v3005, %v3004
        %v3037 = vpack.c.b16 %v3007, %v3006
        %v3038 = vpack.c.b16 %v3009, %v3008
        %v3039 = vpack.c.b16 %v3011, %v3010
        %v3040 = vpack.c.b16 %v3013, %v3012
        %v3041 = vpack.c.b16 %v3015, %v3014
        %v3042 = vpack.c.b16 %v3017, %v3016
        %v3043 = vpack.c.b16 %v3019, %v3018
        %v3044 = vpack.c.b16 %v3021, %v3020
        %v3045 = vpack.c.b16 %v3023, %v3022
        %v3046 = vpack.c.b16 %v3025, %v3024
        %v3047 = vpack.c.b16 %v3027, %v3026
        %v3048 = vpack.c.b16 %v3029, %v3028
        %v3049 = vpack.c.b16 %v3031, %v3030
        %v3050 = vpack.c.b16 %v3033, %v3032
        %v3051 = vpack.c.b16 %v3035, %v3034
        %v3053 = vsel %vm332, %v3036, 0
        %v3056 = vsel %vm332, %v3037, 0
        %v3059 = vsel %vm332, %v3038, 0
        %v3062 = vsel %vm332, %v3039, 0
        %v3065 = vsel %vm332, %v3040, 0
        %v3068 = vsel %vm332, %v3041, 0
        %v3071 = vsel %vm332, %v3042, 0
        %v3074 = vsel %vm332, %v3043, 0
        %v3077 = vsel %vm332, %v3044, 0
        %v3080 = vsel %vm332, %v3045, 0
        %v3083 = vsel %vm332, %v3046, 0
        %v3086 = vsel %vm332, %v3047, 0
        %v3089 = vsel %vm332, %v3048, 0
        %v3092 = vsel %vm332, %v3049, 0
        %v3095 = vsel %vm332, %v3050, 0
        %v3098 = vsel %vm332, %v3051, 0
        %v3101 = vsel %vm381, %v3003, 0
        %3103 = vmatpush.bf16.msra.mxu0 0
        %3104 = vmatpush.bf16.msra.mxu0 0
        %3105 = vmatpush.bf16.msra.mxu0 0
        %3106 = vmatpush.bf16.msra.mxu0 0
        %3107 = vmatpush.bf16.msra.mxu0 0
        %3108 = vmatpush.bf16.msra.mxu0 0
        %3109 = vmatpush.bf16.msra.mxu0 0
        %3110 = vmatpush.bf16.msra.mxu0 %v3101
        %3111 = vmatmul.bf16.gmra.mxu0 %v3053
        %v3112 = vpop.f32.mrf.mxu0
        %v3113 = vadd.f32 0.0, %v3112
        %v3114 = vpop.f32.mrf.mxu0
        %v3115 = vadd.f32 0.0, %v3114
        %3116 = vmatmul.bf16.gmra.mxu0 %v3056
        %v3117 = vpop.f32.mrf.mxu0
        %v3118 = vadd.f32 0.0, %v3117
        %v3119 = vpop.f32.mrf.mxu0
        %v3120 = vadd.f32 0.0, %v3119
        %3121 = vmatmul.bf16.gmra.mxu0 %v3059
        %v3122 = vpop.f32.mrf.mxu0
        %v3123 = vadd.f32 0.0, %v3122
        %v3124 = vpop.f32.mrf.mxu0
        %v3125 = vadd.f32 0.0, %v3124
        %3126 = vmatmul.bf16.gmra.mxu0 %v3062
        %v3127 = vpop.f32.mrf.mxu0
        %v3128 = vadd.f32 0.0, %v3127
        %v3129 = vpop.f32.mrf.mxu0
        %v3130 = vadd.f32 0.0, %v3129
        %3131 = vmatmul.bf16.gmra.mxu0 %v3065
        %v3132 = vpop.f32.mrf.mxu0
        %v3133 = vadd.f32 0.0, %v3132
        %v3134 = vpop.f32.mrf.mxu0
        %v3135 = vadd.f32 0.0, %v3134
        %3136 = vmatmul.bf16.gmra.mxu0 %v3068
        %v3137 = vpop.f32.mrf.mxu0
        %v3138 = vadd.f32 0.0, %v3137
        %v3139 = vpop.f32.mrf.mxu0
        %v3140 = vadd.f32 0.0, %v3139
        %3141 = vmatmul.bf16.gmra.mxu0 %v3071
        %v3142 = vpop.f32.mrf.mxu0
        %v3143 = vadd.f32 0.0, %v3142
        %v3144 = vpop.f32.mrf.mxu0
        %v3145 = vadd.f32 0.0, %v3144
        %3146 = vmatmul.bf16.gmra.mxu0 %v3074
        %v3147 = vpop.f32.mrf.mxu0
        %v3148 = vadd.f32 0.0, %v3147
        %v3149 = vpop.f32.mrf.mxu0
        %v3150 = vadd.f32 0.0, %v3149
        %3151 = vmatmul.bf16.gmra.mxu0 %v3077
        %v3152 = vpop.f32.mrf.mxu0
        %v3153 = vadd.f32 0.0, %v3152
        %v3154 = vpop.f32.mrf.mxu0
        %v3155 = vadd.f32 0.0, %v3154
        %3156 = vmatmul.bf16.gmra.mxu0 %v3080
        %v3157 = vpop.f32.mrf.mxu0
        %v3158 = vadd.f32 0.0, %v3157
        %v3159 = vpop.f32.mrf.mxu0
        %v3160 = vadd.f32 0.0, %v3159
        %3161 = vmatmul.bf16.gmra.mxu0 %v3083
        %v3162 = vpop.f32.mrf.mxu0
        %v3163 = vadd.f32 0.0, %v3162
        %v3164 = vpop.f32.mrf.mxu0
        %v3165 = vadd.f32 0.0, %v3164
        %3166 = vmatmul.bf16.gmra.mxu0 %v3086
        %v3167 = vpop.f32.mrf.mxu0
        %v3168 = vadd.f32 0.0, %v3167
        %v3169 = vpop.f32.mrf.mxu0
        %v3170 = vadd.f32 0.0, %v3169
        %3171 = vmatmul.bf16.gmra.mxu0 %v3089
        %v3172 = vpop.f32.mrf.mxu0
        %v3173 = vadd.f32 0.0, %v3172
        %v3174 = vpop.f32.mrf.mxu0
        %v3175 = vadd.f32 0.0, %v3174
        %3176 = vmatmul.bf16.gmra.mxu0 %v3092
        %v3177 = vpop.f32.mrf.mxu0
        %v3178 = vadd.f32 0.0, %v3177
        %v3179 = vpop.f32.mrf.mxu0
        %v3180 = vadd.f32 0.0, %v3179
        %3181 = vmatmul.bf16.gmra.mxu0 %v3095
        %v3182 = vpop.f32.mrf.mxu0
        %v3183 = vadd.f32 0.0, %v3182
        %v3184 = vpop.f32.mrf.mxu0
        %v3185 = vadd.f32 0.0, %v3184
        %3186 = vmatmul.bf16.gmra.mxu0 %v3098
        %v3187 = vpop.f32.mrf.mxu0
        %v3188 = vadd.f32 0.0, %v3187
        %v3189 = vpop.f32.mrf.mxu0
        %v3190 = vadd.f32 0.0, %v3189
        %3191 = vdwg.mxu0
        %v3192 = vld [vmem:[#allocation2] sm:$0xff]
        %v3193 = vld [vmem:[#allocation2 + $0x8] sm:$0xff]
        %v3194 = vld [vmem:[#allocation2 + $0x10] sm:$0xff]
        %v3195 = vld [vmem:[#allocation2 + $0x18] sm:$0xff]
        %v3196 = vld [vmem:[#allocation2 + $0x20] sm:$0xff]
        %v3197 = vld [vmem:[#allocation2 + $0x28] sm:$0xff]
        %v3198 = vld [vmem:[#allocation2 + $0x30] sm:$0xff]
        %v3199 = vld [vmem:[#allocation2 + $0x38] sm:$0xff]
        %v3200 = vld [vmem:[#allocation2 + $0x40] sm:$0xff]
        %v3201 = vld [vmem:[#allocation2 + $0x48] sm:$0xff]
        %v3202 = vld [vmem:[#allocation2 + $0x50] sm:$0xff]
        %v3203 = vld [vmem:[#allocation2 + $0x58] sm:$0xff]
        %v3204 = vld [vmem:[#allocation2 + $0x60] sm:$0xff]
        %v3205 = vld [vmem:[#allocation2 + $0x68] sm:$0xff]
        %v3206 = vld [vmem:[#allocation2 + $0x70] sm:$0xff]
        %v3207 = vld [vmem:[#allocation2 + $0x78] sm:$0xff]
        %v3208 = vld [vmem:[#allocation2 + $0x80] sm:$0xff]
        %v3209 = vld [vmem:[#allocation2 + $0x88] sm:$0xff]
        %v3210 = vld [vmem:[#allocation2 + $0x90] sm:$0xff]
        %v3211 = vld [vmem:[#allocation2 + $0x98] sm:$0xff]
        %v3212 = vld [vmem:[#allocation2 + $0xa0] sm:$0xff]
        %v3213 = vld [vmem:[#allocation2 + $0xa8] sm:$0xff]
        %v3214 = vld [vmem:[#allocation2 + $0xb0] sm:$0xff]
        %v3215 = vld [vmem:[#allocation2 + $0xb8] sm:$0xff]
        %v3216 = vld [vmem:[#allocation2 + $0xc0] sm:$0xff]
        %v3217 = vld [vmem:[#allocation2 + $0xc8] sm:$0xff]
        %v3218 = vld [vmem:[#allocation2 + $0xd0] sm:$0xff]
        %v3219 = vld [vmem:[#allocation2 + $0xd8] sm:$0xff]
        %v3220 = vld [vmem:[#allocation2 + $0xe0] sm:$0xff]
        %v3221 = vld [vmem:[#allocation2 + $0xe8] sm:$0xff]
        %v3222 = vld [vmem:[#allocation2 + $0xf0] sm:$0xff]
        %v3223 = vld [vmem:[#allocation2 + $0xf8] sm:$0xff]
        %v3224 = vadd.f32 %v3192, %v3113
        %v3225 = vadd.f32 %v3193, %v3115
        %v3226 = vadd.f32 %v3194, %v3118
        %v3227 = vadd.f32 %v3195, %v3120
        %v3228 = vadd.f32 %v3196, %v3123
        %v3229 = vadd.f32 %v3197, %v3125
        %v3230 = vadd.f32 %v3198, %v3128
        %v3231 = vadd.f32 %v3199, %v3130
        %v3232 = vadd.f32 %v3200, %v3133
        %v3233 = vadd.f32 %v3201, %v3135
        %v3234 = vadd.f32 %v3202, %v3138
        %v3235 = vadd.f32 %v3203, %v3140
        %v3236 = vadd.f32 %v3204, %v3143
        %v3237 = vadd.f32 %v3205, %v3145
        %v3238 = vadd.f32 %v3206, %v3148
        %v3239 = vadd.f32 %v3207, %v3150
        %v3240 = vadd.f32 %v3208, %v3153
        %v3241 = vadd.f32 %v3209, %v3155
        %v3242 = vadd.f32 %v3210, %v3158
        %v3243 = vadd.f32 %v3211, %v3160
        %v3244 = vadd.f32 %v3212, %v3163
        %v3245 = vadd.f32 %v3213, %v3165
        %v3246 = vadd.f32 %v3214, %v3168
        %v3247 = vadd.f32 %v3215, %v3170
        %v3248 = vadd.f32 %v3216, %v3173
        %v3249 = vadd.f32 %v3217, %v3175
        %v3250 = vadd.f32 %v3218, %v3178
        %v3251 = vadd.f32 %v3219, %v3180
        %v3252 = vadd.f32 %v3220, %v3183
        %v3253 = vadd.f32 %v3221, %v3185
        %v3254 = vadd.f32 %v3222, %v3188
        %v3255 = vadd.f32 %v3223, %v3190
        %3256 = vst.msk [vmem:[#allocation2] sm:$0xff] %vm474, %v3224
        %3257 = vst.msk [vmem:[#allocation2 + $0x8] sm:$0xff] %vm474, %v3225
        %3258 = vst.msk [vmem:[#allocation2 + $0x10] sm:$0xff] %vm474, %v3226
        %3259 = vst.msk [vmem:[#allocation2 + $0x18] sm:$0xff] %vm474, %v3227
        %3260 = vst.msk [vmem:[#allocation2 + $0x20] sm:$0xff] %vm474, %v3228
        %3261 = vst.msk [vmem:[#allocation2 + $0x28] sm:$0xff] %vm474, %v3229
        %3262 = vst.msk [vmem:[#allocation2 + $0x30] sm:$0xff] %vm474, %v3230
        %3263 = vst.msk [vmem:[#allocation2 + $0x38] sm:$0xff] %vm474, %v3231
        %3264 = vst.msk [vmem:[#allocation2 + $0x40] sm:$0xff] %vm474, %v3232
        %3265 = vst.msk [vmem:[#allocation2 + $0x48] sm:$0xff] %vm474, %v3233
        %3266 = vst.msk [vmem:[#allocation2 + $0x50] sm:$0xff] %vm474, %v3234
        %3267 = vst.msk [vmem:[#allocation2 + $0x58] sm:$0xff] %vm474, %v3235
        %3268 = vst.msk [vmem:[#allocation2 + $0x60] sm:$0xff] %vm474, %v3236
        %3269 = vst.msk [vmem:[#allocation2 + $0x68] sm:$0xff] %vm474, %v3237
        %3270 = vst.msk [vmem:[#allocation2 + $0x70] sm:$0xff] %vm474, %v3238
        %3271 = vst.msk [vmem:[#allocation2 + $0x78] sm:$0xff] %vm474, %v3239
        %3272 = vst.msk [vmem:[#allocation2 + $0x80] sm:$0xff] %vm474, %v3240
        %3273 = vst.msk [vmem:[#allocation2 + $0x88] sm:$0xff] %vm474, %v3241
        %3274 = vst.msk [vmem:[#allocation2 + $0x90] sm:$0xff] %vm474, %v3242
        %3275 = vst.msk [vmem:[#allocation2 + $0x98] sm:$0xff] %vm474, %v3243
        %3276 = vst.msk [vmem:[#allocation2 + $0xa0] sm:$0xff] %vm474, %v3244
        %3277 = vst.msk [vmem:[#allocation2 + $0xa8] sm:$0xff] %vm474, %v3245
        %3278 = vst.msk [vmem:[#allocation2 + $0xb0] sm:$0xff] %vm474, %v3246
        %3279 = vst.msk [vmem:[#allocation2 + $0xb8] sm:$0xff] %vm474, %v3247
        %3280 = vst.msk [vmem:[#allocation2 + $0xc0] sm:$0xff] %vm474, %v3248
        %3281 = vst.msk [vmem:[#allocation2 + $0xc8] sm:$0xff] %vm474, %v3249
        %3282 = vst.msk [vmem:[#allocation2 + $0xd0] sm:$0xff] %vm474, %v3250
        %3283 = vst.msk [vmem:[#allocation2 + $0xd8] sm:$0xff] %vm474, %v3251
        %3284 = vst.msk [vmem:[#allocation2 + $0xe0] sm:$0xff] %vm474, %v3252
        %3285 = vst.msk [vmem:[#allocation2 + $0xe8] sm:$0xff] %vm474, %v3253
        %3286 = vst.msk [vmem:[#allocation2 + $0xf0] sm:$0xff] %vm474, %v3254
        %3287 = vst.msk [vmem:[#allocation2 + $0xf8] sm:$0xff] %vm474, %v3255
        %s3288 = scalar_lea.vmem %s211, 24
        %v3289 = vld [vmem:[%s3288] sm:$0xf]
        %v3290 = vld [vmem:[%s3288 + $0x4] sm:$0xf]
        %v3291 = vld [vmem:[%s3288 + $0xc] sm:$0xf]
        %v3292 = vld [vmem:[%s3288 + $0x10] sm:$0xf]
        %v3293 = vld [vmem:[%s3288 + $0x18] sm:$0xf]
        %v3294 = vld [vmem:[%s3288 + $0x1c] sm:$0xf]
        %v3295 = vld [vmem:[%s3288 + $0x24] sm:$0xf]
        %v3296 = vld [vmem:[%s3288 + $0x28] sm:$0xf]
        %v3297 = vld [vmem:[%s3288 + $0x30] sm:$0xf]
        %v3298 = vld [vmem:[%s3288 + $0x34] sm:$0xf]
        %v3299 = vld [vmem:[%s3288 + $0x3c] sm:$0xf]
        %v3300 = vld [vmem:[%s3288 + $0x40] sm:$0xf]
        %v3301 = vld [vmem:[%s3288 + $0x48] sm:$0xf]
        %v3302 = vld [vmem:[%s3288 + $0x4c] sm:$0xf]
        %v3303 = vld [vmem:[%s3288 + $0x54] sm:$0xf]
        %v3304 = vld [vmem:[%s3288 + $0x58] sm:$0xf]
        %v3305 = vld [vmem:[%s3288 + $0x60] sm:$0xf]
        %v3306 = vld [vmem:[%s3288 + $0x64] sm:$0xf]
        %v3307 = vld [vmem:[%s3288 + $0x6c] sm:$0xf]
        %v3308 = vld [vmem:[%s3288 + $0x70] sm:$0xf]
        %v3309 = vld [vmem:[%s3288 + $0x78] sm:$0xf]
        %v3310 = vld [vmem:[%s3288 + $0x7c] sm:$0xf]
        %v3311 = vld [vmem:[%s3288 + $0x84] sm:$0xf]
        %v3312 = vld [vmem:[%s3288 + $0x88] sm:$0xf]
        %v3313 = vld [vmem:[%s3288 + $0x90] sm:$0xf]
        %v3314 = vld [vmem:[%s3288 + $0x94] sm:$0xf]
        %v3315 = vld [vmem:[%s3288 + $0x9c] sm:$0xf]
        %v3316 = vld [vmem:[%s3288 + $0xa0] sm:$0xf]
        %v3317 = vld [vmem:[%s3288 + $0xa8] sm:$0xf]
        %v3318 = vld [vmem:[%s3288 + $0xac] sm:$0xf]
        %v3319 = vld [vmem:[%s3288 + $0xb4] sm:$0xf]
        %v3320 = vld [vmem:[%s3288 + $0xb8] sm:$0xf]
        %s3321 = scalar_lea.vmem %s1, 12
        %v3322 = vld [vmem:[%s3321] sm:$0x3]
        %v3355 = vunpack.c.l.b16 %v3289
        %v3356 = vunpack.c.l.b16 %v3290
        %v3357 = vunpack.c.l.b16 %v3291
        %v3358 = vunpack.c.l.b16 %v3292
        %v3359 = vunpack.c.l.b16 %v3293
        %v3360 = vunpack.c.l.b16 %v3294
        %v3361 = vunpack.c.l.b16 %v3295
        %v3362 = vunpack.c.l.b16 %v3296
        %v3363 = vunpack.c.l.b16 %v3297
        %v3364 = vunpack.c.l.b16 %v3298
        %v3365 = vunpack.c.l.b16 %v3299
        %v3366 = vunpack.c.l.b16 %v3300
        %v3367 = vunpack.c.l.b16 %v3301
        %v3368 = vunpack.c.l.b16 %v3302
        %v3369 = vunpack.c.l.b16 %v3303
        %v3370 = vunpack.c.l.b16 %v3304
        %v3371 = vunpack.c.l.b16 %v3305
        %v3372 = vunpack.c.l.b16 %v3306
        %v3373 = vunpack.c.l.b16 %v3307
        %v3374 = vunpack.c.l.b16 %v3308
        %v3375 = vunpack.c.l.b16 %v3309
        %v3376 = vunpack.c.l.b16 %v3310
        %v3377 = vunpack.c.l.b16 %v3311
        %v3378 = vunpack.c.l.b16 %v3312
        %v3379 = vunpack.c.l.b16 %v3313
        %v3380 = vunpack.c.l.b16 %v3314
        %v3381 = vunpack.c.l.b16 %v3315
        %v3382 = vunpack.c.l.b16 %v3316
        %v3383 = vunpack.c.l.b16 %v3317
        %v3384 = vunpack.c.l.b16 %v3318
        %v3385 = vunpack.c.l.b16 %v3319
        %v3386 = vunpack.c.l.b16 %v3320
        %v3387 = vpack.c.b16 %v3356, %v3355
        %v3388 = vpack.c.b16 %v3358, %v3357
        %v3389 = vpack.c.b16 %v3360, %v3359
        %v3390 = vpack.c.b16 %v3362, %v3361
        %v3391 = vpack.c.b16 %v3364, %v3363
        %v3392 = vpack.c.b16 %v3366, %v3365
        %v3393 = vpack.c.b16 %v3368, %v3367
        %v3394 = vpack.c.b16 %v3370, %v3369
        %v3395 = vpack.c.b16 %v3372, %v3371
        %v3396 = vpack.c.b16 %v3374, %v3373
        %v3397 = vpack.c.b16 %v3376, %v3375
        %v3398 = vpack.c.b16 %v3378, %v3377
        %v3399 = vpack.c.b16 %v3380, %v3379
        %v3400 = vpack.c.b16 %v3382, %v3381
        %v3401 = vpack.c.b16 %v3384, %v3383
        %v3402 = vpack.c.b16 %v3386, %v3385
        %v3404 = vsel %vm332, %v3387, 0
        %v3407 = vsel %vm332, %v3388, 0
        %v3410 = vsel %vm332, %v3389, 0
        %v3413 = vsel %vm332, %v3390, 0
        %v3416 = vsel %vm332, %v3391, 0
        %v3419 = vsel %vm332, %v3392, 0
        %v3422 = vsel %vm332, %v3393, 0
        %v3425 = vsel %vm332, %v3394, 0
        %v3428 = vsel %vm332, %v3395, 0
        %v3431 = vsel %vm332, %v3396, 0
        %v3434 = vsel %vm332, %v3397, 0
        %v3437 = vsel %vm332, %v3398, 0
        %v3440 = vsel %vm332, %v3399, 0
        %v3443 = vsel %vm332, %v3400, 0
        %v3446 = vsel %vm332, %v3401, 0
        %v3449 = vsel %vm332, %v3402, 0
        %v3452 = vsel %vm381, %v3322, 0
        %3454 = vmatpush.bf16.msra.mxu0 0
        %3455 = vmatpush.bf16.msra.mxu0 0
        %3456 = vmatpush.bf16.msra.mxu0 0
        %3457 = vmatpush.bf16.msra.mxu0 0
        %3458 = vmatpush.bf16.msra.mxu0 0
        %3459 = vmatpush.bf16.msra.mxu0 0
        %3460 = vmatpush.bf16.msra.mxu0 0
        %3461 = vmatpush.bf16.msra.mxu0 %v3452
        %3462 = vmatmul.bf16.gmra.mxu0 %v3404
        %v3463 = vpop.f32.mrf.mxu0
        %v3464 = vadd.f32 0.0, %v3463
        %v3465 = vpop.f32.mrf.mxu0
        %v3466 = vadd.f32 0.0, %v3465
        %3467 = vmatmul.bf16.gmra.mxu0 %v3407
        %v3468 = vpop.f32.mrf.mxu0
        %v3469 = vadd.f32 0.0, %v3468
        %v3470 = vpop.f32.mrf.mxu0
        %v3471 = vadd.f32 0.0, %v3470
        %3472 = vmatmul.bf16.gmra.mxu0 %v3410
        %v3473 = vpop.f32.mrf.mxu0
        %v3474 = vadd.f32 0.0, %v3473
        %v3475 = vpop.f32.mrf.mxu0
        %v3476 = vadd.f32 0.0, %v3475
        %3477 = vmatmul.bf16.gmra.mxu0 %v3413
        %v3478 = vpop.f32.mrf.mxu0
        %v3479 = vadd.f32 0.0, %v3478
        %v3480 = vpop.f32.mrf.mxu0
        %v3481 = vadd.f32 0.0, %v3480
        %3482 = vmatmul.bf16.gmra.mxu0 %v3416
        %v3483 = vpop.f32.mrf.mxu0
        %v3484 = vadd.f32 0.0, %v3483
        %v3485 = vpop.f32.mrf.mxu0
        %v3486 = vadd.f32 0.0, %v3485
        %3487 = vmatmul.bf16.gmra.mxu0 %v3419
        %v3488 = vpop.f32.mrf.mxu0
        %v3489 = vadd.f32 0.0, %v3488
        %v3490 = vpop.f32.mrf.mxu0
        %v3491 = vadd.f32 0.0, %v3490
        %3492 = vmatmul.bf16.gmra.mxu0 %v3422
        %v3493 = vpop.f32.mrf.mxu0
        %v3494 = vadd.f32 0.0, %v3493
        %v3495 = vpop.f32.mrf.mxu0
        %v3496 = vadd.f32 0.0, %v3495
        %3497 = vmatmul.bf16.gmra.mxu0 %v3425
        %v3498 = vpop.f32.mrf.mxu0
        %v3499 = vadd.f32 0.0, %v3498
        %v3500 = vpop.f32.mrf.mxu0
        %v3501 = vadd.f32 0.0, %v3500
        %3502 = vmatmul.bf16.gmra.mxu0 %v3428
        %v3503 = vpop.f32.mrf.mxu0
        %v3504 = vadd.f32 0.0, %v3503
        %v3505 = vpop.f32.mrf.mxu0
        %v3506 = vadd.f32 0.0, %v3505
        %3507 = vmatmul.bf16.gmra.mxu0 %v3431
        %v3508 = vpop.f32.mrf.mxu0
        %v3509 = vadd.f32 0.0, %v3508
        %v3510 = vpop.f32.mrf.mxu0
        %v3511 = vadd.f32 0.0, %v3510
        %3512 = vmatmul.bf16.gmra.mxu0 %v3434
        %v3513 = vpop.f32.mrf.mxu0
        %v3514 = vadd.f32 0.0, %v3513
        %v3515 = vpop.f32.mrf.mxu0
        %v3516 = vadd.f32 0.0, %v3515
        %3517 = vmatmul.bf16.gmra.mxu0 %v3437
        %v3518 = vpop.f32.mrf.mxu0
        %v3519 = vadd.f32 0.0, %v3518
        %v3520 = vpop.f32.mrf.mxu0
        %v3521 = vadd.f32 0.0, %v3520
        %3522 = vmatmul.bf16.gmra.mxu0 %v3440
        %v3523 = vpop.f32.mrf.mxu0
        %v3524 = vadd.f32 0.0, %v3523
        %v3525 = vpop.f32.mrf.mxu0
        %v3526 = vadd.f32 0.0, %v3525
        %3527 = vmatmul.bf16.gmra.mxu0 %v3443
        %v3528 = vpop.f32.mrf.mxu0
        %v3529 = vadd.f32 0.0, %v3528
        %v3530 = vpop.f32.mrf.mxu0
        %v3531 = vadd.f32 0.0, %v3530
        %3532 = vmatmul.bf16.gmra.mxu0 %v3446
        %v3533 = vpop.f32.mrf.mxu0
        %v3534 = vadd.f32 0.0, %v3533
        %v3535 = vpop.f32.mrf.mxu0
        %v3536 = vadd.f32 0.0, %v3535
        %3537 = vmatmul.bf16.gmra.mxu0 %v3449
        %v3538 = vpop.f32.mrf.mxu0
        %v3539 = vadd.f32 0.0, %v3538
        %v3540 = vpop.f32.mrf.mxu0
        %v3541 = vadd.f32 0.0, %v3540
        %3542 = vdwg.mxu0
        %v3543 = vld [vmem:[#allocation2] sm:$0xff]
        %v3544 = vld [vmem:[#allocation2 + $0x8] sm:$0xff]
        %v3545 = vld [vmem:[#allocation2 + $0x10] sm:$0xff]
        %v3546 = vld [vmem:[#allocation2 + $0x18] sm:$0xff]
        %v3547 = vld [vmem:[#allocation2 + $0x20] sm:$0xff]
        %v3548 = vld [vmem:[#allocation2 + $0x28] sm:$0xff]
        %v3549 = vld [vmem:[#allocation2 + $0x30] sm:$0xff]
        %v3550 = vld [vmem:[#allocation2 + $0x38] sm:$0xff]
        %v3551 = vld [vmem:[#allocation2 + $0x40] sm:$0xff]
        %v3552 = vld [vmem:[#allocation2 + $0x48] sm:$0xff]
        %v3553 = vld [vmem:[#allocation2 + $0x50] sm:$0xff]
        %v3554 = vld [vmem:[#allocation2 + $0x58] sm:$0xff]
        %v3555 = vld [vmem:[#allocation2 + $0x60] sm:$0xff]
        %v3556 = vld [vmem:[#allocation2 + $0x68] sm:$0xff]
        %v3557 = vld [vmem:[#allocation2 + $0x70] sm:$0xff]
        %v3558 = vld [vmem:[#allocation2 + $0x78] sm:$0xff]
        %v3559 = vld [vmem:[#allocation2 + $0x80] sm:$0xff]
        %v3560 = vld [vmem:[#allocation2 + $0x88] sm:$0xff]
        %v3561 = vld [vmem:[#allocation2 + $0x90] sm:$0xff]
        %v3562 = vld [vmem:[#allocation2 + $0x98] sm:$0xff]
        %v3563 = vld [vmem:[#allocation2 + $0xa0] sm:$0xff]
        %v3564 = vld [vmem:[#allocation2 + $0xa8] sm:$0xff]
        %v3565 = vld [vmem:[#allocation2 + $0xb0] sm:$0xff]
        %v3566 = vld [vmem:[#allocation2 + $0xb8] sm:$0xff]
        %v3567 = vld [vmem:[#allocation2 + $0xc0] sm:$0xff]
        %v3568 = vld [vmem:[#allocation2 + $0xc8] sm:$0xff]
        %v3569 = vld [vmem:[#allocation2 + $0xd0] sm:$0xff]
        %v3570 = vld [vmem:[#allocation2 + $0xd8] sm:$0xff]
        %v3571 = vld [vmem:[#allocation2 + $0xe0] sm:$0xff]
        %v3572 = vld [vmem:[#allocation2 + $0xe8] sm:$0xff]
        %v3573 = vld [vmem:[#allocation2 + $0xf0] sm:$0xff]
        %v3574 = vld [vmem:[#allocation2 + $0xf8] sm:$0xff]
        %v3575 = vadd.f32 %v3543, %v3464
        %v3576 = vadd.f32 %v3544, %v3466
        %v3577 = vadd.f32 %v3545, %v3469
        %v3578 = vadd.f32 %v3546, %v3471
        %v3579 = vadd.f32 %v3547, %v3474
        %v3580 = vadd.f32 %v3548, %v3476
        %v3581 = vadd.f32 %v3549, %v3479
        %v3582 = vadd.f32 %v3550, %v3481
        %v3583 = vadd.f32 %v3551, %v3484
        %v3584 = vadd.f32 %v3552, %v3486
        %v3585 = vadd.f32 %v3553, %v3489
        %v3586 = vadd.f32 %v3554, %v3491
        %v3587 = vadd.f32 %v3555, %v3494
        %v3588 = vadd.f32 %v3556, %v3496
        %v3589 = vadd.f32 %v3557, %v3499
        %v3590 = vadd.f32 %v3558, %v3501
        %v3591 = vadd.f32 %v3559, %v3504
        %v3592 = vadd.f32 %v3560, %v3506
        %v3593 = vadd.f32 %v3561, %v3509
        %v3594 = vadd.f32 %v3562, %v3511
        %v3595 = vadd.f32 %v3563, %v3514
        %v3596 = vadd.f32 %v3564, %v3516
        %v3597 = vadd.f32 %v3565, %v3519
        %v3598 = vadd.f32 %v3566, %v3521
        %v3599 = vadd.f32 %v3567, %v3524
        %v3600 = vadd.f32 %v3568, %v3526
        %v3601 = vadd.f32 %v3569, %v3529
        %v3602 = vadd.f32 %v3570, %v3531
        %v3603 = vadd.f32 %v3571, %v3534
        %v3604 = vadd.f32 %v3572, %v3536
        %v3605 = vadd.f32 %v3573, %v3539
        %v3606 = vadd.f32 %v3574, %v3541
        %3607 = vst.msk [vmem:[#allocation2] sm:$0xff] %vm474, %v3575
        %3608 = vst.msk [vmem:[#allocation2 + $0x8] sm:$0xff] %vm474, %v3576
        %3609 = vst.msk [vmem:[#allocation2 + $0x10] sm:$0xff] %vm474, %v3577
        %3610 = vst.msk [vmem:[#allocation2 + $0x18] sm:$0xff] %vm474, %v3578
        %3611 = vst.msk [vmem:[#allocation2 + $0x20] sm:$0xff] %vm474, %v3579
        %3612 = vst.msk [vmem:[#allocation2 + $0x28] sm:$0xff] %vm474, %v3580
        %3613 = vst.msk [vmem:[#allocation2 + $0x30] sm:$0xff] %vm474, %v3581
        %3614 = vst.msk [vmem:[#allocation2 + $0x38] sm:$0xff] %vm474, %v3582
        %3615 = vst.msk [vmem:[#allocation2 + $0x40] sm:$0xff] %vm474, %v3583
        %3616 = vst.msk [vmem:[#allocation2 + $0x48] sm:$0xff] %vm474, %v3584
        %3617 = vst.msk [vmem:[#allocation2 + $0x50] sm:$0xff] %vm474, %v3585
        %3618 = vst.msk [vmem:[#allocation2 + $0x58] sm:$0xff] %vm474, %v3586
        %3619 = vst.msk [vmem:[#allocation2 + $0x60] sm:$0xff] %vm474, %v3587
        %3620 = vst.msk [vmem:[#allocation2 + $0x68] sm:$0xff] %vm474, %v3588
        %3621 = vst.msk [vmem:[#allocation2 + $0x70] sm:$0xff] %vm474, %v3589
        %3622 = vst.msk [vmem:[#allocation2 + $0x78] sm:$0xff] %vm474, %v3590
        %3623 = vst.msk [vmem:[#allocation2 + $0x80] sm:$0xff] %vm474, %v3591
        %3624 = vst.msk [vmem:[#allocation2 + $0x88] sm:$0xff] %vm474, %v3592
        %3625 = vst.msk [vmem:[#allocation2 + $0x90] sm:$0xff] %vm474, %v3593
        %3626 = vst.msk [vmem:[#allocation2 + $0x98] sm:$0xff] %vm474, %v3594
        %3627 = vst.msk [vmem:[#allocation2 + $0xa0] sm:$0xff] %vm474, %v3595
        %3628 = vst.msk [vmem:[#allocation2 + $0xa8] sm:$0xff] %vm474, %v3596
        %3629 = vst.msk [vmem:[#allocation2 + $0xb0] sm:$0xff] %vm474, %v3597
        %3630 = vst.msk [vmem:[#allocation2 + $0xb8] sm:$0xff] %vm474, %v3598
        %3631 = vst.msk [vmem:[#allocation2 + $0xc0] sm:$0xff] %vm474, %v3599
        %3632 = vst.msk [vmem:[#allocation2 + $0xc8] sm:$0xff] %vm474, %v3600
        %3633 = vst.msk [vmem:[#allocation2 + $0xd0] sm:$0xff] %vm474, %v3601
        %3634 = vst.msk [vmem:[#allocation2 + $0xd8] sm:$0xff] %vm474, %v3602
        %3635 = vst.msk [vmem:[#allocation2 + $0xe0] sm:$0xff] %vm474, %v3603
        %3636 = vst.msk [vmem:[#allocation2 + $0xe8] sm:$0xff] %vm474, %v3604
        %3637 = vst.msk [vmem:[#allocation2 + $0xf0] sm:$0xff] %vm474, %v3605
        %3638 = vst.msk [vmem:[#allocation2 + $0xf8] sm:$0xff] %vm474, %v3606
        %v3639 = vld [vmem:[%s3288] sm:$0xf]
        %v3640 = vld [vmem:[%s3288 + $0x4] sm:$0xf]
        %v3641 = vld [vmem:[%s3288 + $0x8] sm:$0x1]
        %v3642 = vld [vmem:[%s3288 + $0xc] sm:$0xf]
        %v3643 = vld [vmem:[%s3288 + $0x10] sm:$0xf]
        %v3644 = vld [vmem:[%s3288 + $0x14] sm:$0x1]
        %v3645 = vld [vmem:[%s3288 + $0x18] sm:$0xf]
        %v3646 = vld [vmem:[%s3288 + $0x1c] sm:$0xf]
        %v3647 = vld [vmem:[%s3288 + $0x20] sm:$0x1]
        %v3648 = vld [vmem:[%s3288 + $0x24] sm:$0xf]
        %v3649 = vld [vmem:[%s3288 + $0x28] sm:$0xf]
        %v3650 = vld [vmem:[%s3288 + $0x2c] sm:$0x1]
        %v3651 = vld [vmem:[%s3288 + $0x30] sm:$0xf]
        %v3652 = vld [vmem:[%s3288 + $0x34] sm:$0xf]
        %v3653 = vld [vmem:[%s3288 + $0x38] sm:$0x1]
        %v3654 = vld [vmem:[%s3288 + $0x3c] sm:$0xf]
        %v3655 = vld [vmem:[%s3288 + $0x40] sm:$0xf]
        %v3656 = vld [vmem:[%s3288 + $0x44] sm:$0x1]
        %v3657 = vld [vmem:[%s3288 + $0x48] sm:$0xf]
        %v3658 = vld [vmem:[%s3288 + $0x4c] sm:$0xf]
        %v3659 = vld [vmem:[%s3288 + $0x50] sm:$0x1]
        %v3660 = vld [vmem:[%s3288 + $0x54] sm:$0xf]
        %v3661 = vld [vmem:[%s3288 + $0x58] sm:$0xf]
        %v3662 = vld [vmem:[%s3288 + $0x5c] sm:$0x1]
        %v3663 = vld [vmem:[%s3288 + $0x60] sm:$0xf]
        %v3664 = vld [vmem:[%s3288 + $0x64] sm:$0xf]
        %v3665 = vld [vmem:[%s3288 + $0x68] sm:$0x1]
        %v3666 = vld [vmem:[%s3288 + $0x6c] sm:$0xf]
        %v3667 = vld [vmem:[%s3288 + $0x70] sm:$0xf]
        %v3668 = vld [vmem:[%s3288 + $0x74] sm:$0x1]
        %v3669 = vld [vmem:[%s3288 + $0x78] sm:$0xf]
        %v3670 = vld [vmem:[%s3288 + $0x7c] sm:$0xf]
        %v3671 = vld [vmem:[%s3288 + $0x80] sm:$0x1]
        %v3672 = vld [vmem:[%s3288 + $0x84] sm:$0xf]
        %v3673 = vld [vmem:[%s3288 + $0x88] sm:$0xf]
        %v3674 = vld [vmem:[%s3288 + $0x8c] sm:$0x1]
        %v3675 = vld [vmem:[%s3288 + $0x90] sm:$0xf]
        %v3676 = vld [vmem:[%s3288 + $0x94] sm:$0xf]
        %v3677 = vld [vmem:[%s3288 + $0x98] sm:$0x1]
        %v3678 = vld [vmem:[%s3288 + $0x9c] sm:$0xf]
        %v3679 = vld [vmem:[%s3288 + $0xa0] sm:$0xf]
        %v3680 = vld [vmem:[%s3288 + $0xa4] sm:$0x1]
        %v3681 = vld [vmem:[%s3288 + $0xa8] sm:$0xf]
        %v3682 = vld [vmem:[%s3288 + $0xac] sm:$0xf]
        %v3683 = vld [vmem:[%s3288 + $0xb0] sm:$0x1]
        %v3684 = vld [vmem:[%s3288 + $0xb4] sm:$0xf]
        %v3685 = vld [vmem:[%s3288 + $0xb8] sm:$0xf]
        %v3686 = vld [vmem:[%s3288 + $0xbc] sm:$0x1]
        %v3688 = vshrl.u32 %v3639, 16
        %v3690 = vrot.slane %v3688, 4
        %v3691 = vshll.u32 %v3639, 16
        %v3693 = vrot.slane %v3691, 5
        %v3694 = vor.u32 %v3690, %v3693
        %v3695 = vrot.slane %v3694, 4
        %v3697 = vshll.u32 %v3640, 16
        %v3699 = vrot.slane %v3697, 5
        %v3700 = vsel %vm557, %v3695, %v3699
        %v3701 = vshrl.u32 %v3640, 16
        %v3703 = vrot.slane %v3701, 4
        %v3704 = vor.u32 %v3703, %v3699
        %v3705 = vrot.slane %v3704, 4
        %v3707 = vshll.u32 %v3641, 16
        %v3709 = vrot.slane %v3707, 5
        %v3710 = vsel %vm557, %v3705, %v3709
        %v3712 = vshrl.u32 %v3642, 16
        %v3714 = vrot.slane %v3712, 4
        %v3715 = vshll.u32 %v3642, 16
        %v3717 = vrot.slane %v3715, 5
        %v3718 = vor.u32 %v3714, %v3717
        %v3719 = vrot.slane %v3718, 4
        %v3721 = vshll.u32 %v3643, 16
        %v3723 = vrot.slane %v3721, 5
        %v3724 = vsel %vm557, %v3719, %v3723
        %v3725 = vshrl.u32 %v3643, 16
        %v3727 = vrot.slane %v3725, 4
        %v3728 = vor.u32 %v3727, %v3723
        %v3729 = vrot.slane %v3728, 4
        %v3731 = vshll.u32 %v3644, 16
        %v3733 = vrot.slane %v3731, 5
        %v3734 = vsel %vm557, %v3729, %v3733
        %v3736 = vshrl.u32 %v3645, 16
        %v3738 = vrot.slane %v3736, 4
        %v3739 = vshll.u32 %v3645, 16
        %v3741 = vrot.slane %v3739, 5
        %v3742 = vor.u32 %v3738, %v3741
        %v3743 = vrot.slane %v3742, 4
        %v3745 = vshll.u32 %v3646, 16
        %v3747 = vrot.slane %v3745, 5
        %v3748 = vsel %vm557, %v3743, %v3747
        %v3749 = vshrl.u32 %v3646, 16
        %v3751 = vrot.slane %v3749, 4
        %v3752 = vor.u32 %v3751, %v3747
        %v3753 = vrot.slane %v3752, 4
        %v3755 = vshll.u32 %v3647, 16
        %v3757 = vrot.slane %v3755, 5
        %v3758 = vsel %vm557, %v3753, %v3757
        %v3760 = vshrl.u32 %v3648, 16
        %v3762 = vrot.slane %v3760, 4
        %v3763 = vshll.u32 %v3648, 16
        %v3765 = vrot.slane %v3763, 5
        %v3766 = vor.u32 %v3762, %v3765
        %v3767 = vrot.slane %v3766, 4
        %v3769 = vshll.u32 %v3649, 16
        %v3771 = vrot.slane %v3769, 5
        %v3772 = vsel %vm557, %v3767, %v3771
        %v3773 = vshrl.u32 %v3649, 16
        %v3775 = vrot.slane %v3773, 4
        %v3776 = vor.u32 %v3775, %v3771
        %v3777 = vrot.slane %v3776, 4
        %v3779 = vshll.u32 %v3650, 16
        %v3781 = vrot.slane %v3779, 5
        %v3782 = vsel %vm557, %v3777, %v3781
        %v3784 = vshrl.u32 %v3651, 16
        %v3786 = vrot.slane %v3784, 4
        %v3787 = vshll.u32 %v3651, 16
        %v3789 = vrot.slane %v3787, 5
        %v3790 = vor.u32 %v3786, %v3789
        %v3791 = vrot.slane %v3790, 4
        %v3793 = vshll.u32 %v3652, 16
        %v3795 = vrot.slane %v3793, 5
        %v3796 = vsel %vm557, %v3791, %v3795
        %v3797 = vshrl.u32 %v3652, 16
        %v3799 = vrot.slane %v3797, 4
        %v3800 = vor.u32 %v3799, %v3795
        %v3801 = vrot.slane %v3800, 4
        %v3803 = vshll.u32 %v3653, 16
        %v3805 = vrot.slane %v3803, 5
        %v3806 = vsel %vm557, %v3801, %v3805
        %v3808 = vshrl.u32 %v3654, 16
        %v3810 = vrot.slane %v3808, 4
        %v3811 = vshll.u32 %v3654, 16
        %v3813 = vrot.slane %v3811, 5
        %v3814 = vor.u32 %v3810, %v3813
        %v3815 = vrot.slane %v3814, 4
        %v3817 = vshll.u32 %v3655, 16
        %v3819 = vrot.slane %v3817, 5
        %v3820 = vsel %vm557, %v3815, %v3819
        %v3821 = vshrl.u32 %v3655, 16
        %v3823 = vrot.slane %v3821, 4
        %v3824 = vor.u32 %v3823, %v3819
        %v3825 = vrot.slane %v3824, 4
        %v3827 = vshll.u32 %v3656, 16
        %v3829 = vrot.slane %v3827, 5
        %v3830 = vsel %vm557, %v3825, %v3829
        %v3832 = vshrl.u32 %v3657, 16
        %v3834 = vrot.slane %v3832, 4
        %v3835 = vshll.u32 %v3657, 16
        %v3837 = vrot.slane %v3835, 5
        %v3838 = vor.u32 %v3834, %v3837
        %v3839 = vrot.slane %v3838, 4
        %v3841 = vshll.u32 %v3658, 16
        %v3843 = vrot.slane %v3841, 5
        %v3844 = vsel %vm557, %v3839, %v3843
        %v3845 = vshrl.u32 %v3658, 16
        %v3847 = vrot.slane %v3845, 4
        %v3848 = vor.u32 %v3847, %v3843
        %v3849 = vrot.slane %v3848, 4
        %v3851 = vshll.u32 %v3659, 16
        %v3853 = vrot.slane %v3851, 5
        %v3854 = vsel %vm557, %v3849, %v3853
        %v3856 = vshrl.u32 %v3660, 16
        %v3858 = vrot.slane %v3856, 4
        %v3859 = vshll.u32 %v3660, 16
        %v3861 = vrot.slane %v3859, 5
        %v3862 = vor.u32 %v3858, %v3861
        %v3863 = vrot.slane %v3862, 4
        %v3865 = vshll.u32 %v3661, 16
        %v3867 = vrot.slane %v3865, 5
        %v3868 = vsel %vm557, %v3863, %v3867
        %v3869 = vshrl.u32 %v3661, 16
        %v3871 = vrot.slane %v3869, 4
        %v3872 = vor.u32 %v3871, %v3867
        %v3873 = vrot.slane %v3872, 4
        %v3875 = vshll.u32 %v3662, 16
        %v3877 = vrot.slane %v3875, 5
        %v3878 = vsel %vm557, %v3873, %v3877
        %v3880 = vshrl.u32 %v3663, 16
        %v3882 = vrot.slane %v3880, 4
        %v3883 = vshll.u32 %v3663, 16
        %v3885 = vrot.slane %v3883, 5
        %v3886 = vor.u32 %v3882, %v3885
        %v3887 = vrot.slane %v3886, 4
        %v3889 = vshll.u32 %v3664, 16
        %v3891 = vrot.slane %v3889, 5
        %v3892 = vsel %vm557, %v3887, %v3891
        %v3893 = vshrl.u32 %v3664, 16
        %v3895 = vrot.slane %v3893, 4
        %v3896 = vor.u32 %v3895, %v3891
        %v3897 = vrot.slane %v3896, 4
        %v3899 = vshll.u32 %v3665, 16
        %v3901 = vrot.slane %v3899, 5
        %v3902 = vsel %vm557, %v3897, %v3901
        %v3904 = vshrl.u32 %v3666, 16
        %v3906 = vrot.slane %v3904, 4
        %v3907 = vshll.u32 %v3666, 16
        %v3909 = vrot.slane %v3907, 5
        %v3910 = vor.u32 %v3906, %v3909
        %v3911 = vrot.slane %v3910, 4
        %v3913 = vshll.u32 %v3667, 16
        %v3915 = vrot.slane %v3913, 5
        %v3916 = vsel %vm557, %v3911, %v3915
        %v3917 = vshrl.u32 %v3667, 16
        %v3919 = vrot.slane %v3917, 4
        %v3920 = vor.u32 %v3919, %v3915
        %v3921 = vrot.slane %v3920, 4
        %v3923 = vshll.u32 %v3668, 16
        %v3925 = vrot.slane %v3923, 5
        %v3926 = vsel %vm557, %v3921, %v3925
        %v3928 = vshrl.u32 %v3669, 16
        %v3930 = vrot.slane %v3928, 4
        %v3931 = vshll.u32 %v3669, 16
        %v3933 = vrot.slane %v3931, 5
        %v3934 = vor.u32 %v3930, %v3933
        %v3935 = vrot.slane %v3934, 4
        %v3937 = vshll.u32 %v3670, 16
        %v3939 = vrot.slane %v3937, 5
        %v3940 = vsel %vm557, %v3935, %v3939
        %v3941 = vshrl.u32 %v3670, 16
        %v3943 = vrot.slane %v3941, 4
        %v3944 = vor.u32 %v3943, %v3939
        %v3945 = vrot.slane %v3944, 4
        %v3947 = vshll.u32 %v3671, 16
        %v3949 = vrot.slane %v3947, 5
        %v3950 = vsel %vm557, %v3945, %v3949
        %v3952 = vshrl.u32 %v3672, 16
        %v3954 = vrot.slane %v3952, 4
        %v3955 = vshll.u32 %v3672, 16
        %v3957 = vrot.slane %v3955, 5
        %v3958 = vor.u32 %v3954, %v3957
        %v3959 = vrot.slane %v3958, 4
        %v3961 = vshll.u32 %v3673, 16
        %v3963 = vrot.slane %v3961, 5
        %v3964 = vsel %vm557, %v3959, %v3963
        %v3965 = vshrl.u32 %v3673, 16
        %v3967 = vrot.slane %v3965, 4
        %v3968 = vor.u32 %v3967, %v3963
        %v3969 = vrot.slane %v3968, 4
        %v3971 = vshll.u32 %v3674, 16
        %v3973 = vrot.slane %v3971, 5
        %v3974 = vsel %vm557, %v3969, %v3973
        %v3976 = vshrl.u32 %v3675, 16
        %v3978 = vrot.slane %v3976, 4
        %v3979 = vshll.u32 %v3675, 16
        %v3981 = vrot.slane %v3979, 5
        %v3982 = vor.u32 %v3978, %v3981
        %v3983 = vrot.slane %v3982, 4
        %v3985 = vshll.u32 %v3676, 16
        %v3987 = vrot.slane %v3985, 5
        %v3988 = vsel %vm557, %v3983, %v3987
        %v3989 = vshrl.u32 %v3676, 16
        %v3991 = vrot.slane %v3989, 4
        %v3992 = vor.u32 %v3991, %v3987
        %v3993 = vrot.slane %v3992, 4
        %v3995 = vshll.u32 %v3677, 16
        %v3997 = vrot.slane %v3995, 5
        %v3998 = vsel %vm557, %v3993, %v3997
        %v4000 = vshrl.u32 %v3678, 16
        %v4002 = vrot.slane %v4000, 4
        %v4003 = vshll.u32 %v3678, 16
        %v4005 = vrot.slane %v4003, 5
        %v4006 = vor.u32 %v4002, %v4005
        %v4007 = vrot.slane %v4006, 4
        %v4009 = vshll.u32 %v3679, 16
        %v4011 = vrot.slane %v4009, 5
        %v4012 = vsel %vm557, %v4007, %v4011
        %v4013 = vshrl.u32 %v3679, 16
        %v4015 = vrot.slane %v4013, 4
        %v4016 = vor.u32 %v4015, %v4011
        %v4017 = vrot.slane %v4016, 4
        %v4019 = vshll.u32 %v3680, 16
        %v4021 = vrot.slane %v4019, 5
        %v4022 = vsel %vm557, %v4017, %v4021
        %v4024 = vshrl.u32 %v3681, 16
        %v4026 = vrot.slane %v4024, 4
        %v4027 = vshll.u32 %v3681, 16
        %v4029 = vrot.slane %v4027, 5
        %v4030 = vor.u32 %v4026, %v4029
        %v4031 = vrot.slane %v4030, 4
        %v4033 = vshll.u32 %v3682, 16
        %v4035 = vrot.slane %v4033, 5
        %v4036 = vsel %vm557, %v4031, %v4035
        %v4037 = vshrl.u32 %v3682, 16
        %v4039 = vrot.slane %v4037, 4
        %v4040 = vor.u32 %v4039, %v4035
        %v4041 = vrot.slane %v4040, 4
        %v4043 = vshll.u32 %v3683, 16
        %v4045 = vrot.slane %v4043, 5
        %v4046 = vsel %vm557, %v4041, %v4045
        %v4048 = vshrl.u32 %v3684, 16
        %v4050 = vrot.slane %v4048, 4
        %v4051 = vshll.u32 %v3684, 16
        %v4053 = vrot.slane %v4051, 5
        %v4054 = vor.u32 %v4050, %v4053
        %v4055 = vrot.slane %v4054, 4
        %v4057 = vshll.u32 %v3685, 16
        %v4059 = vrot.slane %v4057, 5
        %v4060 = vsel %vm557, %v4055, %v4059
        %v4061 = vshrl.u32 %v3685, 16
        %v4063 = vrot.slane %v4061, 4
        %v4064 = vor.u32 %v4063, %v4059
        %v4065 = vrot.slane %v4064, 4
        %v4067 = vshll.u32 %v3686, 16
        %v4069 = vrot.slane %v4067, 5
        %v4070 = vsel %vm557, %v4065, %v4069
        %s4071 = scalar_lea.vmem %s1, 14
        %v4072 = vld [vmem:[%s4071] sm:$0x3]
        %v4073 = vunpack.c.l.b16 %v3700
        %v4074 = vunpack.c.l.b16 %v3710
        %v4075 = vunpack.c.l.b16 %v3724
        %v4076 = vunpack.c.l.b16 %v3734
        %v4077 = vunpack.c.l.b16 %v3748
        %v4078 = vunpack.c.l.b16 %v3758
        %v4079 = vunpack.c.l.b16 %v3772
        %v4080 = vunpack.c.l.b16 %v3782
        %v4081 = vunpack.c.l.b16 %v3796
        %v4082 = vunpack.c.l.b16 %v3806
        %v4083 = vunpack.c.l.b16 %v3820
        %v4084 = vunpack.c.l.b16 %v3830
        %v4085 = vunpack.c.l.b16 %v3844
        %v4086 = vunpack.c.l.b16 %v3854
        %v4087 = vunpack.c.l.b16 %v3868
        %v4088 = vunpack.c.l.b16 %v3878
        %v4089 = vunpack.c.l.b16 %v3892
        %v4090 = vunpack.c.l.b16 %v3902
        %v4091 = vunpack.c.l.b16 %v3916
        %v4092 = vunpack.c.l.b16 %v3926
        %v4093 = vunpack.c.l.b16 %v3940
        %v4094 = vunpack.c.l.b16 %v3950
        %v4095 = vunpack.c.l.b16 %v3964
        %v4096 = vunpack.c.l.b16 %v3974
        %v4097 = vunpack.c.l.b16 %v3988
        %v4098 = vunpack.c.l.b16 %v3998
        %v4099 = vunpack.c.l.b16 %v4012
        %v4100 = vunpack.c.l.b16 %v4022
        %v4101 = vunpack.c.l.b16 %v4036
        %v4102 = vunpack.c.l.b16 %v4046
        %v4103 = vunpack.c.l.b16 %v4060
        %v4104 = vunpack.c.l.b16 %v4070
        %v4105 = vpack.c.b16 %v4074, %v4073
        %v4106 = vpack.c.b16 %v4076, %v4075
        %v4107 = vpack.c.b16 %v4078, %v4077
        %v4108 = vpack.c.b16 %v4080, %v4079
        %v4109 = vpack.c.b16 %v4082, %v4081
        %v4110 = vpack.c.b16 %v4084, %v4083
        %v4111 = vpack.c.b16 %v4086, %v4085
        %v4112 = vpack.c.b16 %v4088, %v4087
        %v4113 = vpack.c.b16 %v4090, %v4089
        %v4114 = vpack.c.b16 %v4092, %v4091
        %v4115 = vpack.c.b16 %v4094, %v4093
        %v4116 = vpack.c.b16 %v4096, %v4095
        %v4117 = vpack.c.b16 %v4098, %v4097
        %v4118 = vpack.c.b16 %v4100, %v4099
        %v4119 = vpack.c.b16 %v4102, %v4101
        %v4120 = vpack.c.b16 %v4104, %v4103
        %v4122 = vsel %vm332, %v4105, 0
        %v4125 = vsel %vm332, %v4106, 0
        %v4128 = vsel %vm332, %v4107, 0
        %v4131 = vsel %vm332, %v4108, 0
        %v4134 = vsel %vm332, %v4109, 0
        %v4137 = vsel %vm332, %v4110, 0
        %v4140 = vsel %vm332, %v4111, 0
        %v4143 = vsel %vm332, %v4112, 0
        %v4146 = vsel %vm332, %v4113, 0
        %v4149 = vsel %vm332, %v4114, 0
        %v4152 = vsel %vm332, %v4115, 0
        %v4155 = vsel %vm332, %v4116, 0
        %v4158 = vsel %vm332, %v4117, 0
        %v4161 = vsel %vm332, %v4118, 0
        %v4164 = vsel %vm332, %v4119, 0
        %v4167 = vsel %vm332, %v4120, 0
        %v4170 = vsel %vm381, %v4072, 0
        %4172 = vmatpush.bf16.msra.mxu0 0
        %4173 = vmatpush.bf16.msra.mxu0 0
        %4174 = vmatpush.bf16.msra.mxu0 0
        %4175 = vmatpush.bf16.msra.mxu0 0
        %4176 = vmatpush.bf16.msra.mxu0 0
        %4177 = vmatpush.bf16.msra.mxu0 0
        %4178 = vmatpush.bf16.msra.mxu0 0
        %4179 = vmatpush.bf16.msra.mxu0 %v4170
        %4180 = vmatmul.bf16.gmra.mxu0 %v4122
        %v4181 = vpop.f32.mrf.mxu0
        %v4182 = vadd.f32 0.0, %v4181
        %v4183 = vpop.f32.mrf.mxu0
        %v4184 = vadd.f32 0.0, %v4183
        %4185 = vmatmul.bf16.gmra.mxu0 %v4125
        %v4186 = vpop.f32.mrf.mxu0
        %v4187 = vadd.f32 0.0, %v4186
        %v4188 = vpop.f32.mrf.mxu0
        %v4189 = vadd.f32 0.0, %v4188
        %4190 = vmatmul.bf16.gmra.mxu0 %v4128
        %v4191 = vpop.f32.mrf.mxu0
        %v4192 = vadd.f32 0.0, %v4191
        %v4193 = vpop.f32.mrf.mxu0
        %v4194 = vadd.f32 0.0, %v4193
        %4195 = vmatmul.bf16.gmra.mxu0 %v4131
        %v4196 = vpop.f32.mrf.mxu0
        %v4197 = vadd.f32 0.0, %v4196
        %v4198 = vpop.f32.mrf.mxu0
        %v4199 = vadd.f32 0.0, %v4198
        %4200 = vmatmul.bf16.gmra.mxu0 %v4134
        %v4201 = vpop.f32.mrf.mxu0
        %v4202 = vadd.f32 0.0, %v4201
        %v4203 = vpop.f32.mrf.mxu0
        %v4204 = vadd.f32 0.0, %v4203
        %4205 = vmatmul.bf16.gmra.mxu0 %v4137
        %v4206 = vpop.f32.mrf.mxu0
        %v4207 = vadd.f32 0.0, %v4206
        %v4208 = vpop.f32.mrf.mxu0
        %v4209 = vadd.f32 0.0, %v4208
        %4210 = vmatmul.bf16.gmra.mxu0 %v4140
        %v4211 = vpop.f32.mrf.mxu0
        %v4212 = vadd.f32 0.0, %v4211
        %v4213 = vpop.f32.mrf.mxu0
        %v4214 = vadd.f32 0.0, %v4213
        %4215 = vmatmul.bf16.gmra.mxu0 %v4143
        %v4216 = vpop.f32.mrf.mxu0
        %v4217 = vadd.f32 0.0, %v4216
        %v4218 = vpop.f32.mrf.mxu0
        %v4219 = vadd.f32 0.0, %v4218
        %4220 = vmatmul.bf16.gmra.mxu0 %v4146
        %v4221 = vpop.f32.mrf.mxu0
        %v4222 = vadd.f32 0.0, %v4221
        %v4223 = vpop.f32.mrf.mxu0
        %v4224 = vadd.f32 0.0, %v4223
        %4225 = vmatmul.bf16.gmra.mxu0 %v4149
        %v4226 = vpop.f32.mrf.mxu0
        %v4227 = vadd.f32 0.0, %v4226
        %v4228 = vpop.f32.mrf.mxu0
        %v4229 = vadd.f32 0.0, %v4228
        %4230 = vmatmul.bf16.gmra.mxu0 %v4152
        %v4231 = vpop.f32.mrf.mxu0
        %v4232 = vadd.f32 0.0, %v4231
        %v4233 = vpop.f32.mrf.mxu0
        %v4234 = vadd.f32 0.0, %v4233
        %4235 = vmatmul.bf16.gmra.mxu0 %v4155
        %v4236 = vpop.f32.mrf.mxu0
        %v4237 = vadd.f32 0.0, %v4236
        %v4238 = vpop.f32.mrf.mxu0
        %v4239 = vadd.f32 0.0, %v4238
        %4240 = vmatmul.bf16.gmra.mxu0 %v4158
        %v4241 = vpop.f32.mrf.mxu0
        %v4242 = vadd.f32 0.0, %v4241
        %v4243 = vpop.f32.mrf.mxu0
        %v4244 = vadd.f32 0.0, %v4243
        %4245 = vmatmul.bf16.gmra.mxu0 %v4161
        %v4246 = vpop.f32.mrf.mxu0
        %v4247 = vadd.f32 0.0, %v4246
        %v4248 = vpop.f32.mrf.mxu0
        %v4249 = vadd.f32 0.0, %v4248
        %4250 = vmatmul.bf16.gmra.mxu0 %v4164
        %v4251 = vpop.f32.mrf.mxu0
        %v4252 = vadd.f32 0.0, %v4251
        %v4253 = vpop.f32.mrf.mxu0
        %v4254 = vadd.f32 0.0, %v4253
        %4255 = vmatmul.bf16.gmra.mxu0 %v4167
        %v4256 = vpop.f32.mrf.mxu0
        %v4257 = vadd.f32 0.0, %v4256
        %v4258 = vpop.f32.mrf.mxu0
        %v4259 = vadd.f32 0.0, %v4258
        %4260 = vdwg.mxu0
        %v4261 = vld [vmem:[#allocation2] sm:$0xff]
        %v4262 = vld [vmem:[#allocation2 + $0x8] sm:$0xff]
        %v4263 = vld [vmem:[#allocation2 + $0x10] sm:$0xff]
        %v4264 = vld [vmem:[#allocation2 + $0x18] sm:$0xff]
        %v4265 = vld [vmem:[#allocation2 + $0x20] sm:$0xff]
        %v4266 = vld [vmem:[#allocation2 + $0x28] sm:$0xff]
        %v4267 = vld [vmem:[#allocation2 + $0x30] sm:$0xff]
        %v4268 = vld [vmem:[#allocation2 + $0x38] sm:$0xff]
        %v4269 = vld [vmem:[#allocation2 + $0x40] sm:$0xff]
        %v4270 = vld [vmem:[#allocation2 + $0x48] sm:$0xff]
        %v4271 = vld [vmem:[#allocation2 + $0x50] sm:$0xff]
        %v4272 = vld [vmem:[#allocation2 + $0x58] sm:$0xff]
        %v4273 = vld [vmem:[#allocation2 + $0x60] sm:$0xff]
        %v4274 = vld [vmem:[#allocation2 + $0x68] sm:$0xff]
        %v4275 = vld [vmem:[#allocation2 + $0x70] sm:$0xff]
        %v4276 = vld [vmem:[#allocation2 + $0x78] sm:$0xff]
        %v4277 = vld [vmem:[#allocation2 + $0x80] sm:$0xff]
        %v4278 = vld [vmem:[#allocation2 + $0x88] sm:$0xff]
        %v4279 = vld [vmem:[#allocation2 + $0x90] sm:$0xff]
        %v4280 = vld [vmem:[#allocation2 + $0x98] sm:$0xff]
        %v4281 = vld [vmem:[#allocation2 + $0xa0] sm:$0xff]
        %v4282 = vld [vmem:[#allocation2 + $0xa8] sm:$0xff]
        %v4283 = vld [vmem:[#allocation2 + $0xb0] sm:$0xff]
        %v4284 = vld [vmem:[#allocation2 + $0xb8] sm:$0xff]
        %v4285 = vld [vmem:[#allocation2 + $0xc0] sm:$0xff]
        %v4286 = vld [vmem:[#allocation2 + $0xc8] sm:$0xff]
        %v4287 = vld [vmem:[#allocation2 + $0xd0] sm:$0xff]
        %v4288 = vld [vmem:[#allocation2 + $0xd8] sm:$0xff]
        %v4289 = vld [vmem:[#allocation2 + $0xe0] sm:$0xff]
        %v4290 = vld [vmem:[#allocation2 + $0xe8] sm:$0xff]
        %v4291 = vld [vmem:[#allocation2 + $0xf0] sm:$0xff]
        %v4292 = vld [vmem:[#allocation2 + $0xf8] sm:$0xff]
        %v4293 = vadd.f32 %v4261, %v4182
        %v4294 = vadd.f32 %v4262, %v4184
        %v4295 = vadd.f32 %v4263, %v4187
        %v4296 = vadd.f32 %v4264, %v4189
        %v4297 = vadd.f32 %v4265, %v4192
        %v4298 = vadd.f32 %v4266, %v4194
        %v4299 = vadd.f32 %v4267, %v4197
        %v4300 = vadd.f32 %v4268, %v4199
        %v4301 = vadd.f32 %v4269, %v4202
        %v4302 = vadd.f32 %v4270, %v4204
        %v4303 = vadd.f32 %v4271, %v4207
        %v4304 = vadd.f32 %v4272, %v4209
        %v4305 = vadd.f32 %v4273, %v4212
        %v4306 = vadd.f32 %v4274, %v4214
        %v4307 = vadd.f32 %v4275, %v4217
        %v4308 = vadd.f32 %v4276, %v4219
        %v4309 = vadd.f32 %v4277, %v4222
        %v4310 = vadd.f32 %v4278, %v4224
        %v4311 = vadd.f32 %v4279, %v4227
        %v4312 = vadd.f32 %v4280, %v4229
        %v4313 = vadd.f32 %v4281, %v4232
        %v4314 = vadd.f32 %v4282, %v4234
        %v4315 = vadd.f32 %v4283, %v4237
        %v4316 = vadd.f32 %v4284, %v4239
        %v4317 = vadd.f32 %v4285, %v4242
        %v4318 = vadd.f32 %v4286, %v4244
        %v4319 = vadd.f32 %v4287, %v4247
        %v4320 = vadd.f32 %v4288, %v4249
        %v4321 = vadd.f32 %v4289, %v4252
        %v4322 = vadd.f32 %v4290, %v4254
        %v4323 = vadd.f32 %v4291, %v4257
        %v4324 = vadd.f32 %v4292, %v4259
        %4325 = vst.msk [vmem:[#allocation2] sm:$0xff] %vm474, %v4293
        %4326 = vst.msk [vmem:[#allocation2 + $0x8] sm:$0xff] %vm474, %v4294
        %4327 = vst.msk [vmem:[#allocation2 + $0x10] sm:$0xff] %vm474, %v4295
        %4328 = vst.msk [vmem:[#allocation2 + $0x18] sm:$0xff] %vm474, %v4296
        %4329 = vst.msk [vmem:[#allocation2 + $0x20] sm:$0xff] %vm474, %v4297
        %4330 = vst.msk [vmem:[#allocation2 + $0x28] sm:$0xff] %vm474, %v4298
        %4331 = vst.msk [vmem:[#allocation2 + $0x30] sm:$0xff] %vm474, %v4299
        %4332 = vst.msk [vmem:[#allocation2 + $0x38] sm:$0xff] %vm474, %v4300
        %4333 = vst.msk [vmem:[#allocation2 + $0x40] sm:$0xff] %vm474, %v4301
        %4334 = vst.msk [vmem:[#allocation2 + $0x48] sm:$0xff] %vm474, %v4302
        %4335 = vst.msk [vmem:[#allocation2 + $0x50] sm:$0xff] %vm474, %v4303
        %4336 = vst.msk [vmem:[#allocation2 + $0x58] sm:$0xff] %vm474, %v4304
        %4337 = vst.msk [vmem:[#allocation2 + $0x60] sm:$0xff] %vm474, %v4305
        %4338 = vst.msk [vmem:[#allocation2 + $0x68] sm:$0xff] %vm474, %v4306
        %4339 = vst.msk [vmem:[#allocation2 + $0x70] sm:$0xff] %vm474, %v4307
        %4340 = vst.msk [vmem:[#allocation2 + $0x78] sm:$0xff] %vm474, %v4308
        %4341 = vst.msk [vmem:[#allocation2 + $0x80] sm:$0xff] %vm474, %v4309
        %4342 = vst.msk [vmem:[#allocation2 + $0x88] sm:$0xff] %vm474, %v4310
        %4343 = vst.msk [vmem:[#allocation2 + $0x90] sm:$0xff] %vm474, %v4311
        %4344 = vst.msk [vmem:[#allocation2 + $0x98] sm:$0xff] %vm474, %v4312
        %4345 = vst.msk [vmem:[#allocation2 + $0xa0] sm:$0xff] %vm474, %v4313
        %4346 = vst.msk [vmem:[#allocation2 + $0xa8] sm:$0xff] %vm474, %v4314
        %4347 = vst.msk [vmem:[#allocation2 + $0xb0] sm:$0xff] %vm474, %v4315
        %4348 = vst.msk [vmem:[#allocation2 + $0xb8] sm:$0xff] %vm474, %v4316
        %4349 = vst.msk [vmem:[#allocation2 + $0xc0] sm:$0xff] %vm474, %v4317
        %4350 = vst.msk [vmem:[#allocation2 + $0xc8] sm:$0xff] %vm474, %v4318
        %4351 = vst.msk [vmem:[#allocation2 + $0xd0] sm:$0xff] %vm474, %v4319
        %4352 = vst.msk [vmem:[#allocation2 + $0xd8] sm:$0xff] %vm474, %v4320
        %4353 = vst.msk [vmem:[#allocation2 + $0xe0] sm:$0xff] %vm474, %v4321
        %4354 = vst.msk [vmem:[#allocation2 + $0xe8] sm:$0xff] %vm474, %v4322
        %4355 = vst.msk [vmem:[#allocation2 + $0xf0] sm:$0xff] %vm474, %v4323
        %4356 = vst.msk [vmem:[#allocation2 + $0xf8] sm:$0xff] %vm474, %v4324
        %v4357 = vld [vmem:[%s3288] sm:$0xe]
        %v4358 = vld [vmem:[%s3288 + $0x4] sm:$0xf]
        %v4359 = vld [vmem:[%s3288 + $0x8] sm:$0x1]
        %v4360 = vld [vmem:[%s3288 + $0xc] sm:$0xe]
        %v4361 = vld [vmem:[%s3288 + $0x10] sm:$0xf]
        %v4362 = vld [vmem:[%s3288 + $0x14] sm:$0x1]
        %v4363 = vld [vmem:[%s3288 + $0x18] sm:$0xe]
        %v4364 = vld [vmem:[%s3288 + $0x1c] sm:$0xf]
        %v4365 = vld [vmem:[%s3288 + $0x20] sm:$0x1]
        %v4366 = vld [vmem:[%s3288 + $0x24] sm:$0xe]
        %v4367 = vld [vmem:[%s3288 + $0x28] sm:$0xf]
        %v4368 = vld [vmem:[%s3288 + $0x2c] sm:$0x1]
        %v4369 = vld [vmem:[%s3288 + $0x30] sm:$0xe]
        %v4370 = vld [vmem:[%s3288 + $0x34] sm:$0xf]
        %v4371 = vld [vmem:[%s3288 + $0x38] sm:$0x1]
        %v4372 = vld [vmem:[%s3288 + $0x3c] sm:$0xe]
        %v4373 = vld [vmem:[%s3288 + $0x40] sm:$0xf]
        %v4374 = vld [vmem:[%s3288 + $0x44] sm:$0x1]
        %v4375 = vld [vmem:[%s3288 + $0x48] sm:$0xe]
        %v4376 = vld [vmem:[%s3288 + $0x4c] sm:$0xf]
        %v4377 = vld [vmem:[%s3288 + $0x50] sm:$0x1]
        %v4378 = vld [vmem:[%s3288 + $0x54] sm:$0xe]
        %v4379 = vld [vmem:[%s3288 + $0x58] sm:$0xf]
        %v4380 = vld [vmem:[%s3288 + $0x5c] sm:$0x1]
        %v4381 = vld [vmem:[%s3288 + $0x60] sm:$0xe]
        %v4382 = vld [vmem:[%s3288 + $0x64] sm:$0xf]
        %v4383 = vld [vmem:[%s3288 + $0x68] sm:$0x1]
        %v4384 = vld [vmem:[%s3288 + $0x6c] sm:$0xe]
        %v4385 = vld [vmem:[%s3288 + $0x70] sm:$0xf]
        %v4386 = vld [vmem:[%s3288 + $0x74] sm:$0x1]
        %v4387 = vld [vmem:[%s3288 + $0x78] sm:$0xe]
        %v4388 = vld [vmem:[%s3288 + $0x7c] sm:$0xf]
        %v4389 = vld [vmem:[%s3288 + $0x80] sm:$0x1]
        %v4390 = vld [vmem:[%s3288 + $0x84] sm:$0xe]
        %v4391 = vld [vmem:[%s3288 + $0x88] sm:$0xf]
        %v4392 = vld [vmem:[%s3288 + $0x8c] sm:$0x1]
        %v4393 = vld [vmem:[%s3288 + $0x90] sm:$0xe]
        %v4394 = vld [vmem:[%s3288 + $0x94] sm:$0xf]
        %v4395 = vld [vmem:[%s3288 + $0x98] sm:$0x1]
        %v4396 = vld [vmem:[%s3288 + $0x9c] sm:$0xe]
        %v4397 = vld [vmem:[%s3288 + $0xa0] sm:$0xf]
        %v4398 = vld [vmem:[%s3288 + $0xa4] sm:$0x1]
        %v4399 = vld [vmem:[%s3288 + $0xa8] sm:$0xe]
        %v4400 = vld [vmem:[%s3288 + $0xac] sm:$0xf]
        %v4401 = vld [vmem:[%s3288 + $0xb0] sm:$0x1]
        %v4402 = vld [vmem:[%s3288 + $0xb4] sm:$0xe]
        %v4403 = vld [vmem:[%s3288 + $0xb8] sm:$0xf]
        %v4404 = vld [vmem:[%s3288 + $0xbc] sm:$0x1]
        %v4453 = vrot.slane %v4357, 5
        %v4454 = vrot.slane %v4453, 4
        %v4455 = vrot.slane %v4358, 5
        %v4456 = vsel %vm1326, %v4454, %v4455
        %v4457 = vrot.slane %v4455, 4
        %v4458 = vrot.slane %v4359, 5
        %v4459 = vsel %vm1326, %v4457, %v4458
        %v4460 = vrot.slane %v4360, 5
        %v4461 = vrot.slane %v4460, 4
        %v4462 = vrot.slane %v4361, 5
        %v4463 = vsel %vm1326, %v4461, %v4462
        %v4464 = vrot.slane %v4462, 4
        %v4465 = vrot.slane %v4362, 5
        %v4466 = vsel %vm1326, %v4464, %v4465
        %v4467 = vrot.slane %v4363, 5
        %v4468 = vrot.slane %v4467, 4
        %v4469 = vrot.slane %v4364, 5
        %v4470 = vsel %vm1326, %v4468, %v4469
        %v4471 = vrot.slane %v4469, 4
        %v4472 = vrot.slane %v4365, 5
        %v4473 = vsel %vm1326, %v4471, %v4472
        %v4474 = vrot.slane %v4366, 5
        %v4475 = vrot.slane %v4474, 4
        %v4476 = vrot.slane %v4367, 5
        %v4477 = vsel %vm1326, %v4475, %v4476
        %v4478 = vrot.slane %v4476, 4
        %v4479 = vrot.slane %v4368, 5
        %v4480 = vsel %vm1326, %v4478, %v4479
        %v4481 = vrot.slane %v4369, 5
        %v4482 = vrot.slane %v4481, 4
        %v4483 = vrot.slane %v4370, 5
        %v4484 = vsel %vm1326, %v4482, %v4483
        %v4485 = vrot.slane %v4483, 4
        %v4486 = vrot.slane %v4371, 5
        %v4487 = vsel %vm1326, %v4485, %v4486
        %v4488 = vrot.slane %v4372, 5
        %v4489 = vrot.slane %v4488, 4
        %v4490 = vrot.slane %v4373, 5
        %v4491 = vsel %vm1326, %v4489, %v4490
        %v4492 = vrot.slane %v4490, 4
        %v4493 = vrot.slane %v4374, 5
        %v4494 = vsel %vm1326, %v4492, %v4493
        %v4495 = vrot.slane %v4375, 5
        %v4496 = vrot.slane %v4495, 4
        %v4497 = vrot.slane %v4376, 5
        %v4498 = vsel %vm1326, %v4496, %v4497
        %v4499 = vrot.slane %v4497, 4
        %v4500 = vrot.slane %v4377, 5
        %v4501 = vsel %vm1326, %v4499, %v4500
        %v4502 = vrot.slane %v4378, 5
        %v4503 = vrot.slane %v4502, 4
        %v4504 = vrot.slane %v4379, 5
        %v4505 = vsel %vm1326, %v4503, %v4504
        %v4506 = vrot.slane %v4504, 4
        %v4507 = vrot.slane %v4380, 5
        %v4508 = vsel %vm1326, %v4506, %v4507
        %v4509 = vrot.slane %v4381, 5
        %v4510 = vrot.slane %v4509, 4
        %v4511 = vrot.slane %v4382, 5
        %v4512 = vsel %vm1326, %v4510, %v4511
        %v4513 = vrot.slane %v4511, 4
        %v4514 = vrot.slane %v4383, 5
        %v4515 = vsel %vm1326, %v4513, %v4514
        %v4516 = vrot.slane %v4384, 5
        %v4517 = vrot.slane %v4516, 4
        %v4518 = vrot.slane %v4385, 5
        %v4519 = vsel %vm1326, %v4517, %v4518
        %v4520 = vrot.slane %v4518, 4
        %v4521 = vrot.slane %v4386, 5
        %v4522 = vsel %vm1326, %v4520, %v4521
        %v4523 = vrot.slane %v4387, 5
        %v4524 = vrot.slane %v4523, 4
        %v4525 = vrot.slane %v4388, 5
        %v4526 = vsel %vm1326, %v4524, %v4525
        %v4527 = vrot.slane %v4525, 4
        %v4528 = vrot.slane %v4389, 5
        %v4529 = vsel %vm1326, %v4527, %v4528
        %v4530 = vrot.slane %v4390, 5
        %v4531 = vrot.slane %v4530, 4
        %v4532 = vrot.slane %v4391, 5
        %v4533 = vsel %vm1326, %v4531, %v4532
        %v4534 = vrot.slane %v4532, 4
        %v4535 = vrot.slane %v4392, 5
        %v4536 = vsel %vm1326, %v4534, %v4535
        %v4537 = vrot.slane %v4393, 5
        %v4538 = vrot.slane %v4537, 4
        %v4539 = vrot.slane %v4394, 5
        %v4540 = vsel %vm1326, %v4538, %v4539
        %v4541 = vrot.slane %v4539, 4
        %v4542 = vrot.slane %v4395, 5
        %v4543 = vsel %vm1326, %v4541, %v4542
        %v4544 = vrot.slane %v4396, 5
        %v4545 = vrot.slane %v4544, 4
        %v4546 = vrot.slane %v4397, 5
        %v4547 = vsel %vm1326, %v4545, %v4546
        %v4548 = vrot.slane %v4546, 4
        %v4549 = vrot.slane %v4398, 5
        %v4550 = vsel %vm1326, %v4548, %v4549
        %v4551 = vrot.slane %v4399, 5
        %v4552 = vrot.slane %v4551, 4
        %v4553 = vrot.slane %v4400, 5
        %v4554 = vsel %vm1326, %v4552, %v4553
        %v4555 = vrot.slane %v4553, 4
        %v4556 = vrot.slane %v4401, 5
        %v4557 = vsel %vm1326, %v4555, %v4556
        %v4558 = vrot.slane %v4402, 5
        %v4559 = vrot.slane %v4558, 4
        %v4560 = vrot.slane %v4403, 5
        %v4561 = vsel %vm1326, %v4559, %v4560
        %v4562 = vrot.slane %v4560, 4
        %v4563 = vrot.slane %v4404, 5
        %v4564 = vsel %vm1326, %v4562, %v4563
        %s4565 = scalar_lea.vmem %s1, 16
        %v4566 = vld [vmem:[%s4565] sm:$0x3]
        %v4567 = vunpack.c.l.b16 %v4456
        %v4568 = vunpack.c.l.b16 %v4459
        %v4569 = vunpack.c.l.b16 %v4463
        %v4570 = vunpack.c.l.b16 %v4466
        %v4571 = vunpack.c.l.b16 %v4470
        %v4572 = vunpack.c.l.b16 %v4473
        %v4573 = vunpack.c.l.b16 %v4477
        %v4574 = vunpack.c.l.b16 %v4480
        %v4575 = vunpack.c.l.b16 %v4484
        %v4576 = vunpack.c.l.b16 %v4487
        %v4577 = vunpack.c.l.b16 %v4491
        %v4578 = vunpack.c.l.b16 %v4494
        %v4579 = vunpack.c.l.b16 %v4498
        %v4580 = vunpack.c.l.b16 %v4501
        %v4581 = vunpack.c.l.b16 %v4505
        %v4582 = vunpack.c.l.b16 %v4508
        %v4583 = vunpack.c.l.b16 %v4512
        %v4584 = vunpack.c.l.b16 %v4515
        %v4585 = vunpack.c.l.b16 %v4519
        %v4586 = vunpack.c.l.b16 %v4522
        %v4587 = vunpack.c.l.b16 %v4526
        %v4588 = vunpack.c.l.b16 %v4529
        %v4589 = vunpack.c.l.b16 %v4533
        %v4590 = vunpack.c.l.b16 %v4536
        %v4591 = vunpack.c.l.b16 %v4540
        %v4592 = vunpack.c.l.b16 %v4543
        %v4593 = vunpack.c.l.b16 %v4547
        %v4594 = vunpack.c.l.b16 %v4550
        %v4595 = vunpack.c.l.b16 %v4554
        %v4596 = vunpack.c.l.b16 %v4557
        %v4597 = vunpack.c.l.b16 %v4561
        %v4598 = vunpack.c.l.b16 %v4564
        %v4599 = vpack.c.b16 %v4568, %v4567
        %v4600 = vpack.c.b16 %v4570, %v4569
        %v4601 = vpack.c.b16 %v4572, %v4571
        %v4602 = vpack.c.b16 %v4574, %v4573
        %v4603 = vpack.c.b16 %v4576, %v4575
        %v4604 = vpack.c.b16 %v4578, %v4577
        %v4605 = vpack.c.b16 %v4580, %v4579
        %v4606 = vpack.c.b16 %v4582, %v4581
        %v4607 = vpack.c.b16 %v4584, %v4583
        %v4608 = vpack.c.b16 %v4586, %v4585
        %v4609 = vpack.c.b16 %v4588, %v4587
        %v4610 = vpack.c.b16 %v4590, %v4589
        %v4611 = vpack.c.b16 %v4592, %v4591
        %v4612 = vpack.c.b16 %v4594, %v4593
        %v4613 = vpack.c.b16 %v4596, %v4595
        %v4614 = vpack.c.b16 %v4598, %v4597
        %v4616 = vsel %vm332, %v4599, 0
        %v4619 = vsel %vm332, %v4600, 0
        %v4622 = vsel %vm332, %v4601, 0
        %v4625 = vsel %vm332, %v4602, 0
        %v4628 = vsel %vm332, %v4603, 0
        %v4631 = vsel %vm332, %v4604, 0
        %v4634 = vsel %vm332, %v4605, 0
        %v4637 = vsel %vm332, %v4606, 0
        %v4640 = vsel %vm332, %v4607, 0
        %v4643 = vsel %vm332, %v4608, 0
        %v4646 = vsel %vm332, %v4609, 0
        %v4649 = vsel %vm332, %v4610, 0
        %v4652 = vsel %vm332, %v4611, 0
        %v4655 = vsel %vm332, %v4612, 0
        %v4658 = vsel %vm332, %v4613, 0
        %v4661 = vsel %vm332, %v4614, 0
        %v4664 = vsel %vm381, %v4566, 0
        %4666 = vmatpush.bf16.msra.mxu0 0
        %4667 = vmatpush.bf16.msra.mxu0 0
        %4668 = vmatpush.bf16.msra.mxu0 0
        %4669 = vmatpush.bf16.msra.mxu0 0
        %4670 = vmatpush.bf16.msra.mxu0 0
        %4671 = vmatpush.bf16.msra.mxu0 0
        %4672 = vmatpush.bf16.msra.mxu0 0
        %4673 = vmatpush.bf16.msra.mxu0 %v4664
        %4674 = vmatmul.bf16.gmra.mxu0 %v4616
        %v4675 = vpop.f32.mrf.mxu0
        %v4676 = vadd.f32 0.0, %v4675
        %v4677 = vpop.f32.mrf.mxu0
        %v4678 = vadd.f32 0.0, %v4677
        %4679 = vmatmul.bf16.gmra.mxu0 %v4619
        %v4680 = vpop.f32.mrf.mxu0
        %v4681 = vadd.f32 0.0, %v4680
        %v4682 = vpop.f32.mrf.mxu0
        %v4683 = vadd.f32 0.0, %v4682
        %4684 = vmatmul.bf16.gmra.mxu0 %v4622
        %v4685 = vpop.f32.mrf.mxu0
        %v4686 = vadd.f32 0.0, %v4685
        %v4687 = vpop.f32.mrf.mxu0
        %v4688 = vadd.f32 0.0, %v4687
        %4689 = vmatmul.bf16.gmra.mxu0 %v4625
        %v4690 = vpop.f32.mrf.mxu0
        %v4691 = vadd.f32 0.0, %v4690
        %v4692 = vpop.f32.mrf.mxu0
        %v4693 = vadd.f32 0.0, %v4692
        %4694 = vmatmul.bf16.gmra.mxu0 %v4628
        %v4695 = vpop.f32.mrf.mxu0
        %v4696 = vadd.f32 0.0, %v4695
        %v4697 = vpop.f32.mrf.mxu0
        %v4698 = vadd.f32 0.0, %v4697
        %4699 = vmatmul.bf16.gmra.mxu0 %v4631
        %v4700 = vpop.f32.mrf.mxu0
        %v4701 = vadd.f32 0.0, %v4700
        %v4702 = vpop.f32.mrf.mxu0
        %v4703 = vadd.f32 0.0, %v4702
        %4704 = vmatmul.bf16.gmra.mxu0 %v4634
        %v4705 = vpop.f32.mrf.mxu0
        %v4706 = vadd.f32 0.0, %v4705
        %v4707 = vpop.f32.mrf.mxu0
        %v4708 = vadd.f32 0.0, %v4707
        %4709 = vmatmul.bf16.gmra.mxu0 %v4637
        %v4710 = vpop.f32.mrf.mxu0
        %v4711 = vadd.f32 0.0, %v4710
        %v4712 = vpop.f32.mrf.mxu0
        %v4713 = vadd.f32 0.0, %v4712
        %4714 = vmatmul.bf16.gmra.mxu0 %v4640
        %v4715 = vpop.f32.mrf.mxu0
        %v4716 = vadd.f32 0.0, %v4715
        %v4717 = vpop.f32.mrf.mxu0
        %v4718 = vadd.f32 0.0, %v4717
        %4719 = vmatmul.bf16.gmra.mxu0 %v4643
        %v4720 = vpop.f32.mrf.mxu0
        %v4721 = vadd.f32 0.0, %v4720
        %v4722 = vpop.f32.mrf.mxu0
        %v4723 = vadd.f32 0.0, %v4722
        %4724 = vmatmul.bf16.gmra.mxu0 %v4646
        %v4725 = vpop.f32.mrf.mxu0
        %v4726 = vadd.f32 0.0, %v4725
        %v4727 = vpop.f32.mrf.mxu0
        %v4728 = vadd.f32 0.0, %v4727
        %4729 = vmatmul.bf16.gmra.mxu0 %v4649
        %v4730 = vpop.f32.mrf.mxu0
        %v4731 = vadd.f32 0.0, %v4730
        %v4732 = vpop.f32.mrf.mxu0
        %v4733 = vadd.f32 0.0, %v4732
        %4734 = vmatmul.bf16.gmra.mxu0 %v4652
        %v4735 = vpop.f32.mrf.mxu0
        %v4736 = vadd.f32 0.0, %v4735
        %v4737 = vpop.f32.mrf.mxu0
        %v4738 = vadd.f32 0.0, %v4737
        %4739 = vmatmul.bf16.gmra.mxu0 %v4655
        %v4740 = vpop.f32.mrf.mxu0
        %v4741 = vadd.f32 0.0, %v4740
        %v4742 = vpop.f32.mrf.mxu0
        %v4743 = vadd.f32 0.0, %v4742
        %4744 = vmatmul.bf16.gmra.mxu0 %v4658
        %v4745 = vpop.f32.mrf.mxu0
        %v4746 = vadd.f32 0.0, %v4745
        %v4747 = vpop.f32.mrf.mxu0
        %v4748 = vadd.f32 0.0, %v4747
        %4749 = vmatmul.bf16.gmra.mxu0 %v4661
        %v4750 = vpop.f32.mrf.mxu0
        %v4751 = vadd.f32 0.0, %v4750
        %v4752 = vpop.f32.mrf.mxu0
        %v4753 = vadd.f32 0.0, %v4752
        %4754 = vdwg.mxu0
        %v4755 = vld [vmem:[#allocation2] sm:$0xff]
        %v4756 = vld [vmem:[#allocation2 + $0x8] sm:$0xff]
        %v4757 = vld [vmem:[#allocation2 + $0x10] sm:$0xff]
        %v4758 = vld [vmem:[#allocation2 + $0x18] sm:$0xff]
        %v4759 = vld [vmem:[#allocation2 + $0x20] sm:$0xff]
        %v4760 = vld [vmem:[#allocation2 + $0x28] sm:$0xff]
        %v4761 = vld [vmem:[#allocation2 + $0x30] sm:$0xff]
        %v4762 = vld [vmem:[#allocation2 + $0x38] sm:$0xff]
        %v4763 = vld [vmem:[#allocation2 + $0x40] sm:$0xff]
        %v4764 = vld [vmem:[#allocation2 + $0x48] sm:$0xff]
        %v4765 = vld [vmem:[#allocation2 + $0x50] sm:$0xff]
        %v4766 = vld [vmem:[#allocation2 + $0x58] sm:$0xff]
        %v4767 = vld [vmem:[#allocation2 + $0x60] sm:$0xff]
        %v4768 = vld [vmem:[#allocation2 + $0x68] sm:$0xff]
        %v4769 = vld [vmem:[#allocation2 + $0x70] sm:$0xff]
        %v4770 = vld [vmem:[#allocation2 + $0x78] sm:$0xff]
        %v4771 = vld [vmem:[#allocation2 + $0x80] sm:$0xff]
        %v4772 = vld [vmem:[#allocation2 + $0x88] sm:$0xff]
        %v4773 = vld [vmem:[#allocation2 + $0x90] sm:$0xff]
        %v4774 = vld [vmem:[#allocation2 + $0x98] sm:$0xff]
        %v4775 = vld [vmem:[#allocation2 + $0xa0] sm:$0xff]
        %v4776 = vld [vmem:[#allocation2 + $0xa8] sm:$0xff]
        %v4777 = vld [vmem:[#allocation2 + $0xb0] sm:$0xff]
        %v4778 = vld [vmem:[#allocation2 + $0xb8] sm:$0xff]
        %v4779 = vld [vmem:[#allocation2 + $0xc0] sm:$0xff]
        %v4780 = vld [vmem:[#allocation2 + $0xc8] sm:$0xff]
        %v4781 = vld [vmem:[#allocation2 + $0xd0] sm:$0xff]
        %v4782 = vld [vmem:[#allocation2 + $0xd8] sm:$0xff]
        %v4783 = vld [vmem:[#allocation2 + $0xe0] sm:$0xff]
        %v4784 = vld [vmem:[#allocation2 + $0xe8] sm:$0xff]
        %v4785 = vld [vmem:[#allocation2 + $0xf0] sm:$0xff]
        %v4786 = vld [vmem:[#allocation2 + $0xf8] sm:$0xff]
        %v4787 = vadd.f32 %v4755, %v4676
        %v4788 = vadd.f32 %v4756, %v4678
        %v4789 = vadd.f32 %v4757, %v4681
        %v4790 = vadd.f32 %v4758, %v4683
        %v4791 = vadd.f32 %v4759, %v4686
        %v4792 = vadd.f32 %v4760, %v4688
        %v4793 = vadd.f32 %v4761, %v4691
        %v4794 = vadd.f32 %v4762, %v4693
        %v4795 = vadd.f32 %v4763, %v4696
        %v4796 = vadd.f32 %v4764, %v4698
        %v4797 = vadd.f32 %v4765, %v4701
        %v4798 = vadd.f32 %v4766, %v4703
        %v4799 = vadd.f32 %v4767, %v4706
        %v4800 = vadd.f32 %v4768, %v4708
        %v4801 = vadd.f32 %v4769, %v4711
        %v4802 = vadd.f32 %v4770, %v4713
        %v4803 = vadd.f32 %v4771, %v4716
        %v4804 = vadd.f32 %v4772, %v4718
        %v4805 = vadd.f32 %v4773, %v4721
        %v4806 = vadd.f32 %v4774, %v4723
        %v4807 = vadd.f32 %v4775, %v4726
        %v4808 = vadd.f32 %v4776, %v4728
        %v4809 = vadd.f32 %v4777, %v4731
        %v4810 = vadd.f32 %v4778, %v4733
        %v4811 = vadd.f32 %v4779, %v4736
        %v4812 = vadd.f32 %v4780, %v4738
        %v4813 = vadd.f32 %v4781, %v4741
        %v4814 = vadd.f32 %v4782, %v4743
        %v4815 = vadd.f32 %v4783, %v4746
        %v4816 = vadd.f32 %v4784, %v4748
        %v4817 = vadd.f32 %v4785, %v4751
        %v4818 = vadd.f32 %v4786, %v4753
        %4819 = vst.msk [vmem:[#allocation2] sm:$0xff] %vm474, %v4787
        %4820 = vst.msk [vmem:[#allocation2 + $0x8] sm:$0xff] %vm474, %v4788
        %4821 = vst.msk [vmem:[#allocation2 + $0x10] sm:$0xff] %vm474, %v4789
        %4822 = vst.msk [vmem:[#allocation2 + $0x18] sm:$0xff] %vm474, %v4790
        %4823 = vst.msk [vmem:[#allocation2 + $0x20] sm:$0xff] %vm474, %v4791
        %4824 = vst.msk [vmem:[#allocation2 + $0x28] sm:$0xff] %vm474, %v4792
        %4825 = vst.msk [vmem:[#allocation2 + $0x30] sm:$0xff] %vm474, %v4793
        %4826 = vst.msk [vmem:[#allocation2 + $0x38] sm:$0xff] %vm474, %v4794
        %4827 = vst.msk [vmem:[#allocation2 + $0x40] sm:$0xff] %vm474, %v4795
        %4828 = vst.msk [vmem:[#allocation2 + $0x48] sm:$0xff] %vm474, %v4796
        %4829 = vst.msk [vmem:[#allocation2 + $0x50] sm:$0xff] %vm474, %v4797
        %4830 = vst.msk [vmem:[#allocation2 + $0x58] sm:$0xff] %vm474, %v4798
        %4831 = vst.msk [vmem:[#allocation2 + $0x60] sm:$0xff] %vm474, %v4799
        %4832 = vst.msk [vmem:[#allocation2 + $0x68] sm:$0xff] %vm474, %v4800
        %4833 = vst.msk [vmem:[#allocation2 + $0x70] sm:$0xff] %vm474, %v4801
        %4834 = vst.msk [vmem:[#allocation2 + $0x78] sm:$0xff] %vm474, %v4802
        %4835 = vst.msk [vmem:[#allocation2 + $0x80] sm:$0xff] %vm474, %v4803
        %4836 = vst.msk [vmem:[#allocation2 + $0x88] sm:$0xff] %vm474, %v4804
        %4837 = vst.msk [vmem:[#allocation2 + $0x90] sm:$0xff] %vm474, %v4805
        %4838 = vst.msk [vmem:[#allocation2 + $0x98] sm:$0xff] %vm474, %v4806
        %4839 = vst.msk [vmem:[#allocation2 + $0xa0] sm:$0xff] %vm474, %v4807
        %4840 = vst.msk [vmem:[#allocation2 + $0xa8] sm:$0xff] %vm474, %v4808
        %4841 = vst.msk [vmem:[#allocation2 + $0xb0] sm:$0xff] %vm474, %v4809
        %4842 = vst.msk [vmem:[#allocation2 + $0xb8] sm:$0xff] %vm474, %v4810
        %4843 = vst.msk [vmem:[#allocation2 + $0xc0] sm:$0xff] %vm474, %v4811
        %4844 = vst.msk [vmem:[#allocation2 + $0xc8] sm:$0xff] %vm474, %v4812
        %4845 = vst.msk [vmem:[#allocation2 + $0xd0] sm:$0xff] %vm474, %v4813
        %4846 = vst.msk [vmem:[#allocation2 + $0xd8] sm:$0xff] %vm474, %v4814
        %4847 = vst.msk [vmem:[#allocation2 + $0xe0] sm:$0xff] %vm474, %v4815
        %4848 = vst.msk [vmem:[#allocation2 + $0xe8] sm:$0xff] %vm474, %v4816
        %4849 = vst.msk [vmem:[#allocation2 + $0xf0] sm:$0xff] %vm474, %v4817
        %4850 = vst.msk [vmem:[#allocation2 + $0xf8] sm:$0xff] %vm474, %v4818
        %v4851 = vld [vmem:[#allocation2] sm:$0xff]
        %v4852 = vld [vmem:[#allocation2 + $0x8] sm:$0xff]
        %v4853 = vld [vmem:[#allocation2 + $0x10] sm:$0xff]
        %v4854 = vld [vmem:[#allocation2 + $0x18] sm:$0xff]
        %v4855 = vld [vmem:[#allocation2 + $0x20] sm:$0xff]
        %v4856 = vld [vmem:[#allocation2 + $0x28] sm:$0xff]
        %v4857 = vld [vmem:[#allocation2 + $0x30] sm:$0xff]
        %v4858 = vld [vmem:[#allocation2 + $0x38] sm:$0xff]
        %v4859 = vld [vmem:[#allocation2 + $0x40] sm:$0xff]
        %v4860 = vld [vmem:[#allocation2 + $0x48] sm:$0xff]
        %v4861 = vld [vmem:[#allocation2 + $0x50] sm:$0xff]
        %v4862 = vld [vmem:[#allocation2 + $0x58] sm:$0xff]
        %v4863 = vld [vmem:[#allocation2 + $0x60] sm:$0xff]
        %v4864 = vld [vmem:[#allocation2 + $0x68] sm:$0xff]
        %v4865 = vld [vmem:[#allocation2 + $0x70] sm:$0xff]
        %v4866 = vld [vmem:[#allocation2 + $0x78] sm:$0xff]
        %v4867 = vld [vmem:[#allocation2 + $0x80] sm:$0xff]
        %v4868 = vld [vmem:[#allocation2 + $0x88] sm:$0xff]
        %v4869 = vld [vmem:[#allocation2 + $0x90] sm:$0xff]
        %v4870 = vld [vmem:[#allocation2 + $0x98] sm:$0xff]
        %v4871 = vld [vmem:[#allocation2 + $0xa0] sm:$0xff]
        %v4872 = vld [vmem:[#allocation2 + $0xa8] sm:$0xff]
        %v4873 = vld [vmem:[#allocation2 + $0xb0] sm:$0xff]
        %v4874 = vld [vmem:[#allocation2 + $0xb8] sm:$0xff]
        %v4875 = vld [vmem:[#allocation2 + $0xc0] sm:$0xff]
        %v4876 = vld [vmem:[#allocation2 + $0xc8] sm:$0xff]
        %v4877 = vld [vmem:[#allocation2 + $0xd0] sm:$0xff]
        %v4878 = vld [vmem:[#allocation2 + $0xd8] sm:$0xff]
        %v4879 = vld [vmem:[#allocation2 + $0xe0] sm:$0xff]
        %v4880 = vld [vmem:[#allocation2 + $0xe8] sm:$0xff]
        %v4881 = vld [vmem:[#allocation2 + $0xf0] sm:$0xff]
        %v4882 = vld [vmem:[#allocation2 + $0xf8] sm:$0xff]
        %v4883 = vsel %vm474, %v4851, 0.0
        %v4884 = vsel %vm474, %v4852, 0.0
        %v4885 = vadd.f32 %v4883, %v4884
        %v4886 = vsel %vm474, %v4853, 0.0
        %v4887 = vadd.f32 %v4885, %v4886
        %v4888 = vsel %vm474, %v4854, 0.0
        %v4889 = vadd.f32 %v4887, %v4888
        %v4890 = vsel %vm474, %v4855, 0.0
        %v4891 = vadd.f32 %v4889, %v4890
        %v4892 = vsel %vm474, %v4856, 0.0
        %v4893 = vadd.f32 %v4891, %v4892
        %v4894 = vsel %vm474, %v4857, 0.0
        %v4895 = vadd.f32 %v4893, %v4894
        %v4896 = vsel %vm474, %v4858, 0.0
        %v4897 = vadd.f32 %v4895, %v4896
        %v4898 = vsel %vm474, %v4859, 0.0
        %v4899 = vadd.f32 %v4897, %v4898
        %v4900 = vsel %vm474, %v4860, 0.0
        %v4901 = vadd.f32 %v4899, %v4900
        %v4902 = vsel %vm474, %v4861, 0.0
        %v4903 = vadd.f32 %v4901, %v4902
        %v4904 = vsel %vm474, %v4862, 0.0
        %v4905 = vadd.f32 %v4903, %v4904
        %v4906 = vsel %vm474, %v4863, 0.0
        %v4907 = vadd.f32 %v4905, %v4906
        %v4908 = vsel %vm474, %v4864, 0.0
        %v4909 = vadd.f32 %v4907, %v4908
        %v4910 = vsel %vm474, %v4865, 0.0
        %v4911 = vadd.f32 %v4909, %v4910
        %v4912 = vsel %vm474, %v4866, 0.0
        %v4913 = vadd.f32 %v4911, %v4912
        %v4914 = vsel %vm474, %v4867, 0.0
        %v4915 = vadd.f32 %v4913, %v4914
        %v4916 = vsel %vm474, %v4868, 0.0
        %v4917 = vadd.f32 %v4915, %v4916
        %v4918 = vsel %vm474, %v4869, 0.0
        %v4919 = vadd.f32 %v4917, %v4918
        %v4920 = vsel %vm474, %v4870, 0.0
        %v4921 = vadd.f32 %v4919, %v4920
        %v4922 = vsel %vm474, %v4871, 0.0
        %v4923 = vadd.f32 %v4921, %v4922
        %v4924 = vsel %vm474, %v4872, 0.0
        %v4925 = vadd.f32 %v4923, %v4924
        %v4926 = vsel %vm474, %v4873, 0.0
        %v4927 = vadd.f32 %v4925, %v4926
        %v4928 = vsel %vm474, %v4874, 0.0
        %v4929 = vadd.f32 %v4927, %v4928
        %v4930 = vsel %vm474, %v4875, 0.0
        %v4931 = vadd.f32 %v4929, %v4930
        %v4932 = vsel %vm474, %v4876, 0.0
        %v4933 = vadd.f32 %v4931, %v4932
        %v4934 = vsel %vm474, %v4877, 0.0
        %v4935 = vadd.f32 %v4933, %v4934
        %v4936 = vsel %vm474, %v4878, 0.0
        %v4937 = vadd.f32 %v4935, %v4936
        %v4938 = vsel %vm474, %v4879, 0.0
        %v4939 = vadd.f32 %v4937, %v4938
        %v4940 = vsel %vm474, %v4880, 0.0
        %v4941 = vadd.f32 %v4939, %v4940
        %v4942 = vsel %vm474, %v4881, 0.0
        %v4943 = vadd.f32 %v4941, %v4942
        %v4944 = vsel %vm474, %v4882, 0.0
        %v4945 = vadd.f32 %v4943, %v4944
        %v4946 = vrot.slane %v4945, 4
        %v4947 = vadd.f32 %v4945, %v4946
        %v4948 = vrot.slane %v4947, 2
        %v4949 = vadd.f32 %v4947, %v4948
        %v4950 = vrot.slane %v4949, 1
        %v4951 = vadd.f32 %v4949, %v4950
        %vm4952 = vcmask 57344
        %4953 = vst.msk [vmem:[%s200] sm:$0x1] %vm4952, %v4951
        %v4954 = vmul.f32 %v4851, %v4851
        %v4955 = vmul.f32 %v4852, %v4852
        %v4956 = vmul.f32 %v4853, %v4853
        %v4957 = vmul.f32 %v4854, %v4854
        %v4958 = vmul.f32 %v4855, %v4855
        %v4959 = vmul.f32 %v4856, %v4856
        %v4960 = vmul.f32 %v4857, %v4857
        %v4961 = vmul.f32 %v4858, %v4858
        %v4962 = vmul.f32 %v4859, %v4859
        %v4963 = vmul.f32 %v4860, %v4860
        %v4964 = vmul.f32 %v4861, %v4861
        %v4965 = vmul.f32 %v4862, %v4862
        %v4966 = vmul.f32 %v4863, %v4863
        %v4967 = vmul.f32 %v4864, %v4864
        %v4968 = vmul.f32 %v4865, %v4865
        %v4969 = vmul.f32 %v4866, %v4866
        %v4970 = vmul.f32 %v4867, %v4867
        %v4971 = vmul.f32 %v4868, %v4868
        %v4972 = vmul.f32 %v4869, %v4869
        %v4973 = vmul.f32 %v4870, %v4870
        %v4974 = vmul.f32 %v4871, %v4871
        %v4975 = vmul.f32 %v4872, %v4872
        %v4976 = vmul.f32 %v4873, %v4873
        %v4977 = vmul.f32 %v4874, %v4874
        %v4978 = vmul.f32 %v4875, %v4875
        %v4979 = vmul.f32 %v4876, %v4876
        %v4980 = vmul.f32 %v4877, %v4877
        %v4981 = vmul.f32 %v4878, %v4878
        %v4982 = vmul.f32 %v4879, %v4879
        %v4983 = vmul.f32 %v4880, %v4880
        %v4984 = vmul.f32 %v4881, %v4881
        %v4985 = vmul.f32 %v4882, %v4882
        %v4986 = vsel %vm474, %v4954, 0.0
        %v4987 = vsel %vm474, %v4955, 0.0
        %v4988 = vadd.f32 %v4986, %v4987
        %v4989 = vsel %vm474, %v4956, 0.0
        %v4990 = vadd.f32 %v4988, %v4989
        %v4991 = vsel %vm474, %v4957, 0.0
        %v4992 = vadd.f32 %v4990, %v4991
        %v4993 = vsel %vm474, %v4958, 0.0
        %v4994 = vadd.f32 %v4992, %v4993
        %v4995 = vsel %vm474, %v4959, 0.0
        %v4996 = vadd.f32 %v4994, %v4995
        %v4997 = vsel %vm474, %v4960, 0.0
        %v4998 = vadd.f32 %v4996, %v4997
        %v4999 = vsel %vm474, %v4961, 0.0
        %v5000 = vadd.f32 %v4998, %v4999
        %v5001 = vsel %vm474, %v4962, 0.0
        %v5002 = vadd.f32 %v5000, %v5001
        %v5003 = vsel %vm474, %v4963, 0.0
        %v5004 = vadd.f32 %v5002, %v5003
        %v5005 = vsel %vm474, %v4964, 0.0
        %v5006 = vadd.f32 %v5004, %v5005
        %v5007 = vsel %vm474, %v4965, 0.0
        %v5008 = vadd.f32 %v5006, %v5007
        %v5009 = vsel %vm474, %v4966, 0.0
        %v5010 = vadd.f32 %v5008, %v5009
        %v5011 = vsel %vm474, %v4967, 0.0
        %v5012 = vadd.f32 %v5010, %v5011
        %v5013 = vsel %vm474, %v4968, 0.0
        %v5014 = vadd.f32 %v5012, %v5013
        %v5015 = vsel %vm474, %v4969, 0.0
        %v5016 = vadd.f32 %v5014, %v5015
        %v5017 = vsel %vm474, %v4970, 0.0
        %v5018 = vadd.f32 %v5016, %v5017
        %v5019 = vsel %vm474, %v4971, 0.0
        %v5020 = vadd.f32 %v5018, %v5019
        %v5021 = vsel %vm474, %v4972, 0.0
        %v5022 = vadd.f32 %v5020, %v5021
        %v5023 = vsel %vm474, %v4973, 0.0
        %v5024 = vadd.f32 %v5022, %v5023
        %v5025 = vsel %vm474, %v4974, 0.0
        %v5026 = vadd.f32 %v5024, %v5025
        %v5027 = vsel %vm474, %v4975, 0.0
        %v5028 = vadd.f32 %v5026, %v5027
        %v5029 = vsel %vm474, %v4976, 0.0
        %v5030 = vadd.f32 %v5028, %v5029
        %v5031 = vsel %vm474, %v4977, 0.0
        %v5032 = vadd.f32 %v5030, %v5031
        %v5033 = vsel %vm474, %v4978, 0.0
        %v5034 = vadd.f32 %v5032, %v5033
        %v5035 = vsel %vm474, %v4979, 0.0
        %v5036 = vadd.f32 %v5034, %v5035
        %v5037 = vsel %vm474, %v4980, 0.0
        %v5038 = vadd.f32 %v5036, %v5037
        %v5039 = vsel %vm474, %v4981, 0.0
        %v5040 = vadd.f32 %v5038, %v5039
        %v5041 = vsel %vm474, %v4982, 0.0
        %v5042 = vadd.f32 %v5040, %v5041
        %v5043 = vsel %vm474, %v4983, 0.0
        %v5044 = vadd.f32 %v5042, %v5043
        %v5045 = vsel %vm474, %v4984, 0.0
        %v5046 = vadd.f32 %v5044, %v5045
        %v5047 = vsel %vm474, %v4985, 0.0
        %v5048 = vadd.f32 %v5046, %v5047
        %v5049 = vrot.slane %v5048, 4
        %v5050 = vadd.f32 %v5048, %v5049
        %v5051 = vrot.slane %v5050, 2
        %v5052 = vadd.f32 %v5050, %v5051
        %v5053 = vrot.slane %v5052, 1
        %v5054 = vadd.f32 %v5052, %v5053
        %5055 = vst.msk [vmem:[%s206] sm:$0x1] %vm4952, %v5054
        %v5056 = vpack.c.bf16 %v4851, %v4851
        %v5057 = vpack.c.bf16 %v4852, %v4852
        %v5058 = vpack.c.bf16 %v4853, %v4853
        %v5059 = vpack.c.bf16 %v4854, %v4854
        %v5060 = vpack.c.bf16 %v4855, %v4855
        %v5061 = vpack.c.bf16 %v4856, %v4856
        %v5062 = vpack.c.bf16 %v4857, %v4857
        %v5063 = vpack.c.bf16 %v4858, %v4858
        %v5064 = vpack.c.bf16 %v4859, %v4859
        %v5065 = vpack.c.bf16 %v4860, %v4860
        %v5066 = vpack.c.bf16 %v4861, %v4861
        %v5067 = vpack.c.bf16 %v4862, %v4862
        %v5068 = vpack.c.bf16 %v4863, %v4863
        %v5069 = vpack.c.bf16 %v4864, %v4864
        %v5070 = vpack.c.bf16 %v4865, %v4865
        %v5071 = vpack.c.bf16 %v4866, %v4866
        %v5072 = vpack.c.bf16 %v4867, %v4867
        %v5073 = vpack.c.bf16 %v4868, %v4868
        %v5074 = vpack.c.bf16 %v4869, %v4869
        %v5075 = vpack.c.bf16 %v4870, %v4870
        %v5076 = vpack.c.bf16 %v4871, %v4871
        %v5077 = vpack.c.bf16 %v4872, %v4872
        %v5078 = vpack.c.bf16 %v4873, %v4873
        %v5079 = vpack.c.bf16 %v4874, %v4874
        %v5080 = vpack.c.bf16 %v4875, %v4875
        %v5081 = vpack.c.bf16 %v4876, %v4876
        %v5082 = vpack.c.bf16 %v4877, %v4877
        %v5083 = vpack.c.bf16 %v4878, %v4878
        %v5084 = vpack.c.bf16 %v4879, %v4879
        %v5085 = vpack.c.bf16 %v4880, %v4880
        %v5086 = vpack.c.bf16 %v4881, %v4881
        %v5087 = vpack.c.bf16 %v4882, %v4882
        %vm5088 = vcmask 60416
        %5089 = vst.msk [vmem:[%s216] sm:$0xf] %vm5088, %v5056
        %5090 = vst.msk [vmem:[%s216 + $0x4] sm:$0xf] %vm5088, %v5057
        %5091 = vst.msk [vmem:[%s216 + $0x8] sm:$0xf] %vm5088, %v5058
        %5092 = vst.msk [vmem:[%s216 + $0xc] sm:$0xf] %vm5088, %v5059
        %5093 = vst.msk [vmem:[%s216 + $0x10] sm:$0xf] %vm5088, %v5060
        %5094 = vst.msk [vmem:[%s216 + $0x14] sm:$0xf] %vm5088, %v5061
        %5095 = vst.msk [vmem:[%s216 + $0x18] sm:$0xf] %vm5088, %v5062
        %5096 = vst.msk [vmem:[%s216 + $0x1c] sm:$0xf] %vm5088, %v5063
        %5097 = vst.msk [vmem:[%s216 + $0x20] sm:$0xf] %vm5088, %v5064
        %5098 = vst.msk [vmem:[%s216 + $0x24] sm:$0xf] %vm5088, %v5065
        %5099 = vst.msk [vmem:[%s216 + $0x28] sm:$0xf] %vm5088, %v5066
        %5100 = vst.msk [vmem:[%s216 + $0x2c] sm:$0xf] %vm5088, %v5067
        %5101 = vst.msk [vmem:[%s216 + $0x30] sm:$0xf] %vm5088, %v5068
        %5102 = vst.msk [vmem:[%s216 + $0x34] sm:$0xf] %vm5088, %v5069
        %5103 = vst.msk [vmem:[%s216 + $0x38] sm:$0xf] %vm5088, %v5070
        %5104 = vst.msk [vmem:[%s216 + $0x3c] sm:$0xf] %vm5088, %v5071
        %5105 = vst.msk [vmem:[%s216 + $0x40] sm:$0xf] %vm5088, %v5072
        %5106 = vst.msk [vmem:[%s216 + $0x44] sm:$0xf] %vm5088, %v5073
        %5107 = vst.msk [vmem:[%s216 + $0x48] sm:$0xf] %vm5088, %v5074
        %5108 = vst.msk [vmem:[%s216 + $0x4c] sm:$0xf] %vm5088, %v5075
        %5109 = vst.msk [vmem:[%s216 + $0x50] sm:$0xf] %vm5088, %v5076
        %5110 = vst.msk [vmem:[%s216 + $0x54] sm:$0xf] %vm5088, %v5077
        %5111 = vst.msk [vmem:[%s216 + $0x58] sm:$0xf] %vm5088, %v5078
        %5112 = vst.msk [vmem:[%s216 + $0x5c] sm:$0xf] %vm5088, %v5079
        %5113 = vst.msk [vmem:[%s216 + $0x60] sm:$0xf] %vm5088, %v5080
        %5114 = vst.msk [vmem:[%s216 + $0x64] sm:$0xf] %vm5088, %v5081
        %5115 = vst.msk [vmem:[%s216 + $0x68] sm:$0xf] %vm5088, %v5082
        %5116 = vst.msk [vmem:[%s216 + $0x6c] sm:$0xf] %vm5088, %v5083
        %5117 = vst.msk [vmem:[%s216 + $0x70] sm:$0xf] %vm5088, %v5084
        %5118 = vst.msk [vmem:[%s216 + $0x74] sm:$0xf] %vm5088, %v5085
        %5119 = vst.msk [vmem:[%s216 + $0x78] sm:$0xf] %vm5088, %v5086
        %5120 = vst.msk [vmem:[%s216 + $0x7c] sm:$0xf] %vm5088, %v5087
        %s5121 = smul.u32 32, %s22
        %p5122 = scmp.lt.s32.totalorder %s5121, 63
        %s5123 = scalar_select %p5122, %s5121, 63
        %s5124 = smul.addr %s5123, 4
        %s5125 = scalar_lea.vmem %s2, %s5124
        %s5126 = sand.u32 %s103, 1
        %s5127 = scalar_lea.sflag [#allocation4], %s5126
        %s5128 = sand.u32 %s103, 1
        %s5129 = scalar_lea.vmem [#allocation3], %s5128
        %s5130 = sand.u32 %s129, 1
        %s5131 = scalar_lea.sflag [#allocation6], %s5130
        %s5132 = sand.u32 %s129, 1
        %s5133 = scalar_lea.vmem [#allocation5], %s5132
        // Predicated region
        $region29: #{tpu_custom_call.1} parent=27 // pred_check
          %p5134 = pneg %p87
        $region30: #{tpu_custom_call.1} parent=27 // pred_check_branch
          %5136 = sbr.rel (%p5134) target = $region32
        $region31: #{tpu_custom_call.1} parent=27 // pred_region
          %s5137 = smul.u32 32, %s22
        $region32: #{tpu_custom_call.1} parent=27 // pred_fallthru
          _
        // Predicated region
        $region33: #{tpu_custom_call.1} parent=27 // pred_check
          %p5138 = pneg %p113
        $region34: #{tpu_custom_call.1} parent=27 // pred_check_branch
          %5140 = sbr.rel (%p5138) target = $region36
        $region35: #{tpu_custom_call.1} parent=27 // pred_region
          %5142 = vsyncadd %s5127, 0
          %s5143 = scalar_lea.hbm %s3, %s22
          %s5145 = sshll.u32 %s5129, 4
          %s5146 = int_to_ptr.vmem [resolvable:$true] %s5145
          %s5147 = sshll.u32 %s5143, 4
          %s5148 = int_to_ptr.hbm [resolvable:$true] %s5147
          %5150 = dma.vmem_to_hbm [thread:$0]  %s5146, 16, %s5148, %s5127
        $region36: #{tpu_custom_call.1} parent=27 // pred_fallthru
          _
        // Predicated region
        $region37: #{tpu_custom_call.1} parent=27 // pred_check
          %p5151 = pneg %p139
        $region38: #{tpu_custom_call.1} parent=27 // pred_check_branch
          %5153 = sbr.rel (%p5151) target = $region40
        $region39: #{tpu_custom_call.1} parent=27 // pred_region
          %5155 = vsyncadd %s5131, 0
          %s5156 = scalar_lea.hbm %s4, %s22
          %s5158 = sshll.u32 %s5133, 4
          %s5159 = int_to_ptr.vmem [resolvable:$true] %s5158
          %s5160 = sshll.u32 %s5156, 4
          %s5161 = int_to_ptr.hbm [resolvable:$true] %s5160
          %5163 = dma.vmem_to_hbm [thread:$0]  %s5159, 16, %s5161, %s5131
        $region40: #{tpu_custom_call.1} parent=27 // pred_fallthru
          _
      $region28: #{tpu_custom_call.1} parent=5 // pred_fallthru
        _
      %p5164 = scmp.le.s32.totalorder 2, %s17
      // Predicated region
      $region41: #{tpu_custom_call.1} parent=5 // pred_check
        %p5165 = pneg %p5164
      $region42: #{tpu_custom_call.1} parent=5 // pred_check_branch
        %5167 = sbr.rel (%p5165) target = $region44
      $region43: #{tpu_custom_call.1} parent=5 // pred_region
        %s5168 = ssub.s32 %s17, 2
        // Predicated region
        $region45: #{tpu_custom_call.1} parent=43 // pred_check
          %p5169 = pneg %p93
        $region46: #{tpu_custom_call.1} parent=43 // pred_check_branch
          %5171 = sbr.rel (%p5169) target = $region48
        $region47: #{tpu_custom_call.1} parent=43 // pred_region
          %s5172 = smul.u32 32, %s23
          %p5173 = scmp.lt.s32.totalorder %s5172, 63
          %s5174 = scalar_select %p5173, %s5172, 63
          %s5175 = smul.addr %s5174, 4
          %s5176 = scalar_lea.vmem %s2, %s5175
        $region48: #{tpu_custom_call.1} parent=43 // pred_fallthru
          _
        // Predicated region
        $region49: #{tpu_custom_call.1} parent=43 // pred_check
          %p5177 = pneg %p119
        $region50: #{tpu_custom_call.1} parent=43 // pred_check_branch
          %5179 = sbr.rel (%p5177) target = $region52
        $region51: #{tpu_custom_call.1} parent=43 // pred_region
          %s5180 = sand.u32 %s104, 1
          %s5181 = scalar_lea.sflag [#allocation4], %s5180
          %s5182 = sand.u32 %s104, 1
          %s5183 = scalar_lea.vmem [#allocation3], %s5182
          %5185 = dma.done %s5181, 16
        $region52: #{tpu_custom_call.1} parent=43 // pred_fallthru
          _
        // Predicated region
        $region53: #{tpu_custom_call.1} parent=43 // pred_check
          %p5186 = pneg %p145
        $region54: #{tpu_custom_call.1} parent=43 // pred_check_branch
          %5188 = sbr.rel (%p5186) target = $region56
        $region55: #{tpu_custom_call.1} parent=43 // pred_region
          %s5189 = sand.u32 %s130, 1
          %s5190 = scalar_lea.sflag [#allocation6], %s5189
          %s5191 = sand.u32 %s130, 1
          %s5192 = scalar_lea.vmem [#allocation5], %s5191
          %5194 = dma.done %s5190, 16
        $region56: #{tpu_custom_call.1} parent=43 // pred_fallthru
          _
      $region44: #{tpu_custom_call.1} parent=5 // pred_fallthru
        _
    $region6: #{tpu_custom_call.1} parent=1 // loop_footer
      %s21 = sadd.s32 1, %s17
    $region7: #{tpu_custom_call.1} parent=1 // loop_footer_branch
      %16 = sbr.rel target = $region3
    $region8: #{tpu_custom_call.1} parent=1 // loop_exit
      _
    %5195 = vsyncpa [#allocation4], 1
    %s5196 = scalar_lea.sflag [#allocation4], 1
    %5197 = vsyncpa %s5196, 1
    %5198 = vsyncpa [#allocation6], 1
    %s5199 = scalar_lea.sflag [#allocation6], 1
    %5200 = vsyncpa %s5199, 1

</llo_original>
